<compile_context>
chip_gen: v5e
topology: v5e:2x2
jax: 0.10.0
libtpu: 0.0.40
codegen_flags: <defaults>
</compile_context>

<pallas_src>
import functools

import jax
import jax.numpy as jnp
from jax.experimental import pallas as pl
from jax.experimental.pallas import tpu as pltpu


def _conv3x3_from_padded(pad_ref, w_ref, H, W):
    """3x3 stride-1 'same' conv read from a zero-padded VMEM activation tile.

    Every tap's LHS is a shifted (H, W, Cin) slice of the padded scratch
    (misaligned sublane *loads*; 3 vld slots available) and the 9 tap
    contributions `slice @ W_tap` (f32 accumulation on the MXU) are summed in a
    register-resident f32 value — no VMEM read-modify-write scatter passes, no
    zero-fill of an accumulator, no interior readback.
    """
    acc = None
    for t in range(9):                                       # static 9-tap unroll
        kh, kw = divmod(t, 3)
        p = jax.lax.dot_general(
            pad_ref[kh:kh + H, kw:kw + W, :], w_ref[t],
            dimension_numbers=(((2,), (0,)), ((), ())),
            preferred_element_type=jnp.float32)              # (H, W, Cout) f32
        acc = p if acc is None else acc + p
    return acc                                               # (H, W, Cout) f32


def _basic_block_kernel(x_ref, w1_ref, b1_ref, w2_ref, b2_ref, out_ref, pad_ref,
                        *, compute_dtype):
    """Fused BasicBlock: conv1+bn1+relu -> conv2+bn2 -> +residual -> relu.

    Processes `batch_block` images per grid step.  The intermediate activation
    only touches the single padded VMEM tile between the two convs and the
    residual reuses the already-resident input block (no HBM round-trips).
    """
    nb, H, W, _ = x_ref.shape

    # Zero the padded scratch once per grid step.  Only the 1-element border
    # actually needs to be zero (the interior is overwritten before each conv
    # reads it), and doing it unconditionally keeps the kernel correct when the
    # "parallel" batch axis is split across v7x's two TensorCores.
    pad_ref[...] = jnp.zeros_like(pad_ref)

    # Hoist bias loads out of the per-image loop.  The broadcast to (H, W, C)
    # happens inside the traced loop body (traced once), not once per unrolled
    # image as with a static Python batch loop.
    b1 = b1_ref[0]                                           # (Cout,) f32
    b2 = b2_ref[0]                                           # (Cout,) f32

    def one_image(i, carry):
        # conv1 + bn1 (scale folded into w1, shift added here) + relu
        pad_ref[1:H + 1, 1:W + 1, :] = x_ref[i].astype(compute_dtype)
        y = _conv3x3_from_padded(pad_ref, w1_ref, H, W) + b1
        y = jnp.maximum(y, 0.0)

        # conv2 + bn2 + identity residual + relu.  Epilogue math stays in f32
        # (v5e has no bf16 VPU); only the MXU inputs are compute_dtype.
        pad_ref[1:H + 1, 1:W + 1, :] = y.astype(compute_dtype)
        z = _conv3x3_from_padded(pad_ref, w2_ref, H, W) + b2
        # Re-read the residual here instead of holding the input tile live
        # across both convs (bounds the vreg live range).
        z = z + x_ref[i].astype(jnp.float32)
        out_ref[i] = jnp.maximum(z, 0.0).astype(out_ref.dtype)
        return carry

    if nb == 1:
        one_image(0, 0)
    else:
        # fori_loop (not a static Python unroll) bounds vreg live ranges when
        # several images are packed into one grid step; fully unroll only tiny
        # trip counts for LLO scheduling visibility.
        jax.lax.fori_loop(0, nb, one_image, 0, unroll=nb <= 4)


def fold_bn(gamma, beta, running_mean, running_var, eps=1e-5):
    """Eval-mode BatchNorm folded to a per-channel scale/shift."""
    scale = gamma / jnp.sqrt(running_var + eps)
    shift = beta - running_mean * scale
    return scale, shift


def basic_block_forward_nhwc(x_nhwc, params, *, batch_block=1,
                             compute_dtype=jnp.float32,
                             vmem_limit_bytes=None):
    """ResNet BasicBlock (stride=1, downsample=None); NHWC in / NHWC out.

    batch_block guidance:
      * v5e / v6e (single TensorCore): the grid is a serial loop, so for small
        batches use batch_block=N (one grid step) to avoid ~0.35us/step
        pipeline overhead.
      * v7x (two TensorCores): keep the grid length >= 2 (batch_block <= N//2)
        so dimension_semantics=("parallel",) can shard across both cores, and
        budget 2x-buffered blocks + the padded scratch against 64 MiB VMEM
        (pass vmem_limit_bytes explicitly for production shapes).
    """
    N, H, W, Cin = x_nhwc.shape
    w1 = params["w1_taps"]                                   # (9, Cin, Cout)
    w2 = params["w2_taps"]                                   # (9, Cout, Cout)
    Cout = w1.shape[-1]
    if Cin != Cout:
        raise ValueError("identity residual requires inplanes == planes")
    if N % batch_block != 0:
        raise ValueError("batch must be divisible by batch_block")

    s1, b1 = fold_bn(params["bn1_gamma"], params["bn1_beta"],
                     params["bn1_mean"], params["bn1_var"])
    s2, b2 = fold_bn(params["bn2_gamma"], params["bn2_beta"],
                     params["bn2_mean"], params["bn2_var"])
    # Fold the BN scale into the conv weights; cast weights once here (bf16 on
    # v6e/v7x halves weight bytes; the dot still accumulates in f32).
    w1f = (w1 * s1[None, None, :]).astype(compute_dtype)
    w2f = (w2 * s2[None, None, :]).astype(compute_dtype)
    b1 = b1[None, :].astype(jnp.float32)                     # (1, Cout)
    b2 = b2[None, :].astype(jnp.float32)                     # (1, Cout)

    grid = (N // batch_block,)
    kernel = functools.partial(_basic_block_kernel, compute_dtype=compute_dtype)

    return pl.pallas_call(
        kernel,
        out_shape=jax.ShapeDtypeStruct((N, H, W, Cout), x_nhwc.dtype),
        grid=grid,
        in_specs=[
            pl.BlockSpec((batch_block, H, W, Cin), lambda n: (n, 0, 0, 0)),
            pl.BlockSpec((9, Cin, Cout), lambda n: (0, 0, 0)),
            pl.BlockSpec((1, Cout), lambda n: (0, 0)),
            pl.BlockSpec((9, Cout, Cout), lambda n: (0, 0, 0)),
            pl.BlockSpec((1, Cout), lambda n: (0, 0)),
        ],
        out_specs=pl.BlockSpec((batch_block, H, W, Cout),
                               lambda n: (n, 0, 0, 0)),
        # Single scratch: the zero-padded activation tile shared by both convs
        # (Cin == Cout).  No accumulator scratch — taps accumulate in vregs.
        scratch_shapes=[pltpu.VMEM((H + 2, W + 2, Cin), compute_dtype)],
        # Each grid step writes its own output block and the scratch carries no
        # state across steps -> truly parallel; lets v7x's two TensorCores
        # split the grid (neutral on single-TC v5e/v6e).
        compiler_params=pltpu.CompilerParams(
            dimension_semantics=("parallel",),
            vmem_limit_bytes=vmem_limit_bytes),
    )(x_nhwc, w1f, b1, w2f, b2)


def basic_block_forward(x_nchw, params, **kwargs):
    """PyTorch-parity NCHW adapter.  In an NHWC-native model call
    basic_block_forward_nhwc directly and skip these two transposes (each is a
    full extra HBM pass over the activations)."""
    x = jnp.transpose(x_nchw, (0, 2, 3, 1))                  # NCHW -> NHWC
    out = basic_block_forward_nhwc(x, params, **kwargs)
    return jnp.transpose(out, (0, 3, 1, 2))                  # NHWC -> NCHW


def torch_weight_to_taps(w_oihw):
    """(Cout, Cin, 3, 3) PyTorch layout -> (9, Cin, Cout) tap-major."""
    return jnp.transpose(w_oihw, (2, 3, 1, 0)).reshape(9, w_oihw.shape[1],
                                                       w_oihw.shape[0])


def reference_forward(x_nchw, params):
    """Pure-JAX reference (lax conv, NCHW) for a silent correctness check."""
    def conv(x, w):
        return jax.lax.conv_general_dilated(
            x, w, window_strides=(1, 1), padding=((1, 1), (1, 1)),
            dimension_numbers=("NCHW", "OIHW", "NCHW"))

    def bn(x, g, b, m, v, eps=1e-5):
        g, b, m, v = (a[None, :, None, None] for a in (g, b, m, v))
        return (x - m) / jnp.sqrt(v + eps) * g + b

    out = conv(x_nchw, params["w1_oihw"])
    out = bn(out, params["bn1_gamma"], params["bn1_beta"],
             params["bn1_mean"], params["bn1_var"])
    out = jnp.maximum(out, 0.0)
    out = conv(out, params["w2_oihw"])
    out = bn(out, params["bn2_gamma"], params["bn2_beta"],
             params["bn2_mean"], params["bn2_var"])
    out = out + x_nchw
    return jnp.maximum(out, 0.0)


if __name__ == "__main__":
    N, C, H, W = 2, 4, 16, 16          # inplanes = planes = 4, stride = 1
    inplanes = planes = C

    key = jax.random.PRNGKey(0)
    keys = jax.random.split(key, 8)

    x = jax.random.normal(keys[0], (N, C, H, W), jnp.float32)

    w1_oihw = jax.random.normal(keys[1], (planes, inplanes, 3, 3), jnp.float32) * 0.1
    w2_oihw = jax.random.normal(keys[2], (planes, planes, 3, 3), jnp.float32) * 0.1

    params = {
        "w1_oihw": w1_oihw,
        "w2_oihw": w2_oihw,
        "w1_taps": torch_weight_to_taps(w1_oihw),
        "w2_taps": torch_weight_to_taps(w2_oihw),
        "bn1_gamma": 1.0 + 0.1 * jax.random.normal(keys[3], (planes,), jnp.float32),
        "bn1_beta": 0.1 * jax.random.normal(keys[4], (planes,), jnp.float32),
        "bn1_mean": 0.05 * jax.random.normal(keys[5], (planes,), jnp.float32),
        "bn1_var": jnp.abs(1.0 + 0.1 * jax.random.normal(keys[6], (planes,), jnp.float32)),
        "bn2_gamma": 1.0 + 0.1 * jax.random.normal(keys[7], (planes,), jnp.float32),
        "bn2_beta": jnp.linspace(-0.1, 0.1, planes, dtype=jnp.float32),
        "bn2_mean": jnp.linspace(-0.05, 0.05, planes, dtype=jnp.float32),
        "bn2_var": jnp.linspace(0.9, 1.1, planes, dtype=jnp.float32),
    }

    # f32 compute here for a tight check; pass compute_dtype=jnp.bfloat16 on
    # v6e/v7x for production (loosen the tolerance accordingly).
    out = basic_block_forward(x, params, batch_block=1,
                              compute_dtype=jnp.float32)
    out = jax.block_until_ready(out)

    ref = jax.block_until_ready(reference_forward(x, params))
    if not bool(jnp.allclose(out, ref, atol=1e-4, rtol=1e-4)):
        raise AssertionError("Pallas BasicBlock output mismatch vs reference")

    print("KERNEL_OK")
</pallas_src>

<mosaic_0001>
module attributes {stable_mosaic.version = 11 : i64} {
  func.func @_basic_block_kernel(%arg0: i32, %arg1: memref<1x16x16x4xf32, #tpu.memory_space<vmem>>, %arg2: memref<9x4x4xf32, #tpu.memory_space<vmem>>, %arg3: memref<1x4xf32, #tpu.memory_space<vmem>>, %arg4: memref<9x4x4xf32, #tpu.memory_space<vmem>>, %arg5: memref<1x4xf32, #tpu.memory_space<vmem>>, %arg6: memref<1x16x16x4xf32, #tpu.memory_space<vmem>>, %arg7: memref<18x18x4xf32, #tpu.memory_space<vmem>>) attributes {dimension_semantics = [#tpu.dimension_semantics<parallel>], iteration_bounds = array<i64: 2>, scalar_prefetch = 0 : i64, scratch_operands = 1 : i64, tpu.core_type = #tpu.core_type<tc>, window_params = [{transform_indices = @transform_0, window_bounds = array<i64: 1, 16, 16, 4>}, {pipeline_mode = #tpu.pipeline_mode<synchronous>, transform_indices = @transform_1, window_bounds = array<i64: 9, 4, 4>}, {pipeline_mode = #tpu.pipeline_mode<synchronous>, transform_indices = @transform_2, window_bounds = array<i64: 1, 4>}, {pipeline_mode = #tpu.pipeline_mode<synchronous>, transform_indices = @transform_3, window_bounds = array<i64: 9, 4, 4>}, {pipeline_mode = #tpu.pipeline_mode<synchronous>, transform_indices = @transform_4, window_bounds = array<i64: 1, 4>}, {transform_indices = @transform_5, window_bounds = array<i64: 1, 16, 16, 4>}]} {
    %cst = arith.constant 0.000000e+00 : f32
    %0 = vector.broadcast %cst : f32 to vector<18x18x4xf32>
    %c0 = arith.constant 0 : index
    %c0_0 = arith.constant 0 : index
    %c0_1 = arith.constant 0 : index
    %1 = vector.load %arg7[%c0, %c0_0, %c0_1] : memref<18x18x4xf32, #tpu.memory_space<vmem>>, vector<18x18x4xf32>
    tpu.vector_store %arg7[%c0, %c0_0, %c0_1], %0 {strides = array<i32>} : memref<18x18x4xf32, #tpu.memory_space<vmem>>, vector<18x18x4xf32>,
    %c0_2 = arith.constant 0 : index
    %c0_3 = arith.constant 0 : index
    %2 = vector.load %arg3[%c0_2, %c0_3] : memref<1x4xf32, #tpu.memory_space<vmem>>, vector<1x4xf32>
    %3 = vector.shape_cast %2 : vector<1x4xf32> to vector<4xf32>
    %c0_4 = arith.constant 0 : index
    %c0_5 = arith.constant 0 : index
    %4 = vector.load %arg5[%c0_4, %c0_5] : memref<1x4xf32, #tpu.memory_space<vmem>>, vector<1x4xf32>
    %5 = vector.shape_cast %4 : vector<1x4xf32> to vector<4xf32>
    %c0_6 = arith.constant 0 : index
    %c0_7 = arith.constant 0 : index
    %c0_8 = arith.constant 0 : index
    %c0_9 = arith.constant 0 : index
    %6 = vector.load %arg1[%c0_6, %c0_7, %c0_8, %c0_9] : memref<1x16x16x4xf32, #tpu.memory_space<vmem>>, vector<1x16x16x4xf32>
    %7 = vector.shape_cast %6 : vector<1x16x16x4xf32> to vector<16x16x4xf32>
    %c1 = arith.constant 1 : index
    %c1_10 = arith.constant 1 : index
    %c0_11 = arith.constant 0 : index
    %8 = vector.load %arg7[%c1, %c1_10, %c0_11] : memref<18x18x4xf32, #tpu.memory_space<vmem>>, vector<16x16x4xf32>
    tpu.vector_store %arg7[%c1, %c1_10, %c0_11], %7 {strides = array<i32>} : memref<18x18x4xf32, #tpu.memory_space<vmem>>, vector<16x16x4xf32>,
    %c0_12 = arith.constant 0 : index
    %c0_13 = arith.constant 0 : index
    %c0_14 = arith.constant 0 : index
    %9 = vector.load %arg7[%c0_12, %c0_13, %c0_14] : memref<18x18x4xf32, #tpu.memory_space<vmem>>, vector<16x16x4xf32>
    %c0_15 = arith.constant 0 : index
    %c0_16 = arith.constant 0 : index
    %c0_17 = arith.constant 0 : index
    %10 = vector.load %arg2[%c0_15, %c0_16, %c0_17] : memref<9x4x4xf32, #tpu.memory_space<vmem>>, vector<1x4x4xf32>
    %11 = vector.shape_cast %10 : vector<1x4x4xf32> to vector<4x4xf32>
    %cst_18 = arith.constant dense<0.000000e+00> : vector<16x16x4xf32>
    %12 = tpu.matmul %9, %11, %cst_18 {dimension_numbers = #tpu.dot_dimension_numbers<[2], [0], [0, 1], [1], [0, 0, 0, 1, 1, 1], [], []>} : vector<16x16x4xf32>, vector<4x4xf32>, vector<16x16x4xf32> -> vector<16x16x4xf32>
    %c0_19 = arith.constant 0 : index
    %c1_20 = arith.constant 1 : index
    %c0_21 = arith.constant 0 : index
    %13 = vector.load %arg7[%c0_19, %c1_20, %c0_21] : memref<18x18x4xf32, #tpu.memory_space<vmem>>, vector<16x16x4xf32>
    %c1_22 = arith.constant 1 : index
    %c0_23 = arith.constant 0 : index
    %c0_24 = arith.constant 0 : index
    %14 = vector.load %arg2[%c1_22, %c0_23, %c0_24] : memref<9x4x4xf32, #tpu.memory_space<vmem>>, vector<1x4x4xf32>
    %15 = vector.shape_cast %14 : vector<1x4x4xf32> to vector<4x4xf32>
    %cst_25 = arith.constant dense<0.000000e+00> : vector<16x16x4xf32>
    %16 = tpu.matmul %13, %15, %cst_25 {dimension_numbers = #tpu.dot_dimension_numbers<[2], [0], [0, 1], [1], [0, 0, 0, 1, 1, 1], [], []>} : vector<16x16x4xf32>, vector<4x4xf32>, vector<16x16x4xf32> -> vector<16x16x4xf32>
    %17 = arith.addf %12, %16 : vector<16x16x4xf32>
    %c0_26 = arith.constant 0 : index
    %c2 = arith.constant 2 : index
    %c0_27 = arith.constant 0 : index
    %18 = vector.load %arg7[%c0_26, %c2, %c0_27] : memref<18x18x4xf32, #tpu.memory_space<vmem>>, vector<16x16x4xf32>
    %c2_28 = arith.constant 2 : index
    %c0_29 = arith.constant 0 : index
    %c0_30 = arith.constant 0 : index
    %19 = vector.load %arg2[%c2_28, %c0_29, %c0_30] : memref<9x4x4xf32, #tpu.memory_space<vmem>>, vector<1x4x4xf32>
    %20 = vector.shape_cast %19 : vector<1x4x4xf32> to vector<4x4xf32>
    %cst_31 = arith.constant dense<0.000000e+00> : vector<16x16x4xf32>
    %21 = tpu.matmul %18, %20, %cst_31 {dimension_numbers = #tpu.dot_dimension_numbers<[2], [0], [0, 1], [1], [0, 0, 0, 1, 1, 1], [], []>} : vector<16x16x4xf32>, vector<4x4xf32>, vector<16x16x4xf32> -> vector<16x16x4xf32>
    %22 = arith.addf %17, %21 : vector<16x16x4xf32>
    %c1_32 = arith.constant 1 : index
    %c0_33 = arith.constant 0 : index
    %c0_34 = arith.constant 0 : index
    %23 = vector.load %arg7[%c1_32, %c0_33, %c0_34] : memref<18x18x4xf32, #tpu.memory_space<vmem>>, vector<16x16x4xf32>
    %c3 = arith.constant 3 : index
    %c0_35 = arith.constant 0 : index
    %c0_36 = arith.constant 0 : index
    %24 = vector.load %arg2[%c3, %c0_35, %c0_36] : memref<9x4x4xf32, #tpu.memory_space<vmem>>, vector<1x4x4xf32>
    %25 = vector.shape_cast %24 : vector<1x4x4xf32> to vector<4x4xf32>
    %cst_37 = arith.constant dense<0.000000e+00> : vector<16x16x4xf32>
    %26 = tpu.matmul %23, %25, %cst_37 {dimension_numbers = #tpu.dot_dimension_numbers<[2], [0], [0, 1], [1], [0, 0, 0, 1, 1, 1], [], []>} : vector<16x16x4xf32>, vector<4x4xf32>, vector<16x16x4xf32> -> vector<16x16x4xf32>
    %27 = arith.addf %22, %26 : vector<16x16x4xf32>
    %c1_38 = arith.constant 1 : index
    %c1_39 = arith.constant 1 : index
    %c0_40 = arith.constant 0 : index
    %28 = vector.load %arg7[%c1_38, %c1_39, %c0_40] : memref<18x18x4xf32, #tpu.memory_space<vmem>>, vector<16x16x4xf32>
    %c4 = arith.constant 4 : index
    %c0_41 = arith.constant 0 : index
    %c0_42 = arith.constant 0 : index
    %29 = vector.load %arg2[%c4, %c0_41, %c0_42] : memref<9x4x4xf32, #tpu.memory_space<vmem>>, vector<1x4x4xf32>
    %30 = vector.shape_cast %29 : vector<1x4x4xf32> to vector<4x4xf32>
    %cst_43 = arith.constant dense<0.000000e+00> : vector<16x16x4xf32>
    %31 = tpu.matmul %28, %30, %cst_43 {dimension_numbers = #tpu.dot_dimension_numbers<[2], [0], [0, 1], [1], [0, 0, 0, 1, 1, 1], [], []>} : vector<16x16x4xf32>, vector<4x4xf32>, vector<16x16x4xf32> -> vector<16x16x4xf32>
    %32 = arith.addf %27, %31 : vector<16x16x4xf32>
    %c1_44 = arith.constant 1 : index
    %c2_45 = arith.constant 2 : index
    %c0_46 = arith.constant 0 : index
    %33 = vector.load %arg7[%c1_44, %c2_45, %c0_46] : memref<18x18x4xf32, #tpu.memory_space<vmem>>, vector<16x16x4xf32>
    %c5 = arith.constant 5 : index
    %c0_47 = arith.constant 0 : index
    %c0_48 = arith.constant 0 : index
    %34 = vector.load %arg2[%c5, %c0_47, %c0_48] : memref<9x4x4xf32, #tpu.memory_space<vmem>>, vector<1x4x4xf32>
    %35 = vector.shape_cast %34 : vector<1x4x4xf32> to vector<4x4xf32>
    %cst_49 = arith.constant dense<0.000000e+00> : vector<16x16x4xf32>
    %36 = tpu.matmul %33, %35, %cst_49 {dimension_numbers = #tpu.dot_dimension_numbers<[2], [0], [0, 1], [1], [0, 0, 0, 1, 1, 1], [], []>} : vector<16x16x4xf32>, vector<4x4xf32>, vector<16x16x4xf32> -> vector<16x16x4xf32>
    %37 = arith.addf %32, %36 : vector<16x16x4xf32>
    %c2_50 = arith.constant 2 : index
    %c0_51 = arith.constant 0 : index
    %c0_52 = arith.constant 0 : index
    %38 = vector.load %arg7[%c2_50, %c0_51, %c0_52] : memref<18x18x4xf32, #tpu.memory_space<vmem>>, vector<16x16x4xf32>
    %c6 = arith.constant 6 : index
    %c0_53 = arith.constant 0 : index
    %c0_54 = arith.constant 0 : index
    %39 = vector.load %arg2[%c6, %c0_53, %c0_54] : memref<9x4x4xf32, #tpu.memory_space<vmem>>, vector<1x4x4xf32>
    %40 = vector.shape_cast %39 : vector<1x4x4xf32> to vector<4x4xf32>
    %cst_55 = arith.constant dense<0.000000e+00> : vector<16x16x4xf32>
    %41 = tpu.matmul %38, %40, %cst_55 {dimension_numbers = #tpu.dot_dimension_numbers<[2], [0], [0, 1], [1], [0, 0, 0, 1, 1, 1], [], []>} : vector<16x16x4xf32>, vector<4x4xf32>, vector<16x16x4xf32> -> vector<16x16x4xf32>
    %42 = arith.addf %37, %41 : vector<16x16x4xf32>
    %c2_56 = arith.constant 2 : index
    %c1_57 = arith.constant 1 : index
    %c0_58 = arith.constant 0 : index
    %43 = vector.load %arg7[%c2_56, %c1_57, %c0_58] : memref<18x18x4xf32, #tpu.memory_space<vmem>>, vector<16x16x4xf32>
    %c7 = arith.constant 7 : index
    %c0_59 = arith.constant 0 : index
    %c0_60 = arith.constant 0 : index
    %44 = vector.load %arg2[%c7, %c0_59, %c0_60] : memref<9x4x4xf32, #tpu.memory_space<vmem>>, vector<1x4x4xf32>
    %45 = vector.shape_cast %44 : vector<1x4x4xf32> to vector<4x4xf32>
    %cst_61 = arith.constant dense<0.000000e+00> : vector<16x16x4xf32>
    %46 = tpu.matmul %43, %45, %cst_61 {dimension_numbers = #tpu.dot_dimension_numbers<[2], [0], [0, 1], [1], [0, 0, 0, 1, 1, 1], [], []>} : vector<16x16x4xf32>, vector<4x4xf32>, vector<16x16x4xf32> -> vector<16x16x4xf32>
    %47 = arith.addf %42, %46 : vector<16x16x4xf32>
    %c2_62 = arith.constant 2 : index
    %c2_63 = arith.constant 2 : index
    %c0_64 = arith.constant 0 : index
    %48 = vector.load %arg7[%c2_62, %c2_63, %c0_64] : memref<18x18x4xf32, #tpu.memory_space<vmem>>, vector<16x16x4xf32>
    %c8 = arith.constant 8 : index
    %c0_65 = arith.constant 0 : index
    %c0_66 = arith.constant 0 : index
    %49 = vector.load %arg2[%c8, %c0_65, %c0_66] : memref<9x4x4xf32, #tpu.memory_space<vmem>>, vector<1x4x4xf32>
    %50 = vector.shape_cast %49 : vector<1x4x4xf32> to vector<4x4xf32>
    %cst_67 = arith.constant dense<0.000000e+00> : vector<16x16x4xf32>
    %51 = tpu.matmul %48, %50, %cst_67 {dimension_numbers = #tpu.dot_dimension_numbers<[2], [0], [0, 1], [1], [0, 0, 0, 1, 1, 1], [], []>} : vector<16x16x4xf32>, vector<4x4xf32>, vector<16x16x4xf32> -> vector<16x16x4xf32>
    %52 = arith.addf %47, %51 : vector<16x16x4xf32>
    %53 = vector.shape_cast %3 : vector<4xf32> to vector<1x1x4xf32>
    %54 = vector.broadcast %53 : vector<1x1x4xf32> to vector<16x16x4xf32>
    %55 = arith.addf %52, %54 : vector<16x16x4xf32>
    %cst_68 = arith.constant 0.000000e+00 : f32
    %56 = vector.broadcast %cst_68 : f32 to vector<16x16x4xf32>
    %57 = arith.maximumf %55, %56 : vector<16x16x4xf32>
    %c1_69 = arith.constant 1 : index
    %c1_70 = arith.constant 1 : index
    %c0_71 = arith.constant 0 : index
    %58 = vector.load %arg7[%c1_69, %c1_70, %c0_71] : memref<18x18x4xf32, #tpu.memory_space<vmem>>, vector<16x16x4xf32>
    tpu.vector_store %arg7[%c1_69, %c1_70, %c0_71], %57 {strides = array<i32>} : memref<18x18x4xf32, #tpu.memory_space<vmem>>, vector<16x16x4xf32>,
    %c0_72 = arith.constant 0 : index
    %c0_73 = arith.constant 0 : index
    %c0_74 = arith.constant 0 : index
    %59 = vector.load %arg7[%c0_72, %c0_73, %c0_74] : memref<18x18x4xf32, #tpu.memory_space<vmem>>, vector<16x16x4xf32>
    %c0_75 = arith.constant 0 : index
    %c0_76 = arith.constant 0 : index
    %c0_77 = arith.constant 0 : index
    %60 = vector.load %arg4[%c0_75, %c0_76, %c0_77] : memref<9x4x4xf32, #tpu.memory_space<vmem>>, vector<1x4x4xf32>
    %61 = vector.shape_cast %60 : vector<1x4x4xf32> to vector<4x4xf32>
    %cst_78 = arith.constant dense<0.000000e+00> : vector<16x16x4xf32>
    %62 = tpu.matmul %59, %61, %cst_78 {dimension_numbers = #tpu.dot_dimension_numbers<[2], [0], [0, 1], [1], [0, 0, 0, 1, 1, 1], [], []>} : vector<16x16x4xf32>, vector<4x4xf32>, vector<16x16x4xf32> -> vector<16x16x4xf32>
    %c0_79 = arith.constant 0 : index
    %c1_80 = arith.constant 1 : index
    %c0_81 = arith.constant 0 : index
    %63 = vector.load %arg7[%c0_79, %c1_80, %c0_81] : memref<18x18x4xf32, #tpu.memory_space<vmem>>, vector<16x16x4xf32>
    %c1_82 = arith.constant 1 : index
    %c0_83 = arith.constant 0 : index
    %c0_84 = arith.constant 0 : index
    %64 = vector.load %arg4[%c1_82, %c0_83, %c0_84] : memref<9x4x4xf32, #tpu.memory_space<vmem>>, vector<1x4x4xf32>
    %65 = vector.shape_cast %64 : vector<1x4x4xf32> to vector<4x4xf32>
    %cst_85 = arith.constant dense<0.000000e+00> : vector<16x16x4xf32>
    %66 = tpu.matmul %63, %65, %cst_85 {dimension_numbers = #tpu.dot_dimension_numbers<[2], [0], [0, 1], [1], [0, 0, 0, 1, 1, 1], [], []>} : vector<16x16x4xf32>, vector<4x4xf32>, vector<16x16x4xf32> -> vector<16x16x4xf32>
    %67 = arith.addf %62, %66 : vector<16x16x4xf32>
    %c0_86 = arith.constant 0 : index
    %c2_87 = arith.constant 2 : index
    %c0_88 = arith.constant 0 : index
    %68 = vector.load %arg7[%c0_86, %c2_87, %c0_88] : memref<18x18x4xf32, #tpu.memory_space<vmem>>, vector<16x16x4xf32>
    %c2_89 = arith.constant 2 : index
    %c0_90 = arith.constant 0 : index
    %c0_91 = arith.constant 0 : index
    %69 = vector.load %arg4[%c2_89, %c0_90, %c0_91] : memref<9x4x4xf32, #tpu.memory_space<vmem>>, vector<1x4x4xf32>
    %70 = vector.shape_cast %69 : vector<1x4x4xf32> to vector<4x4xf32>
    %cst_92 = arith.constant dense<0.000000e+00> : vector<16x16x4xf32>
    %71 = tpu.matmul %68, %70, %cst_92 {dimension_numbers = #tpu.dot_dimension_numbers<[2], [0], [0, 1], [1], [0, 0, 0, 1, 1, 1], [], []>} : vector<16x16x4xf32>, vector<4x4xf32>, vector<16x16x4xf32> -> vector<16x16x4xf32>
    %72 = arith.addf %67, %71 : vector<16x16x4xf32>
    %c1_93 = arith.constant 1 : index
    %c0_94 = arith.constant 0 : index
    %c0_95 = arith.constant 0 : index
    %73 = vector.load %arg7[%c1_93, %c0_94, %c0_95] : memref<18x18x4xf32, #tpu.memory_space<vmem>>, vector<16x16x4xf32>
    %c3_96 = arith.constant 3 : index
    %c0_97 = arith.constant 0 : index
    %c0_98 = arith.constant 0 : index
    %74 = vector.load %arg4[%c3_96, %c0_97, %c0_98] : memref<9x4x4xf32, #tpu.memory_space<vmem>>, vector<1x4x4xf32>
    %75 = vector.shape_cast %74 : vector<1x4x4xf32> to vector<4x4xf32>
    %cst_99 = arith.constant dense<0.000000e+00> : vector<16x16x4xf32>
    %76 = tpu.matmul %73, %75, %cst_99 {dimension_numbers = #tpu.dot_dimension_numbers<[2], [0], [0, 1], [1], [0, 0, 0, 1, 1, 1], [], []>} : vector<16x16x4xf32>, vector<4x4xf32>, vector<16x16x4xf32> -> vector<16x16x4xf32>
    %77 = arith.addf %72, %76 : vector<16x16x4xf32>
    %c1_100 = arith.constant 1 : index
    %c1_101 = arith.constant 1 : index
    %c0_102 = arith.constant 0 : index
    %78 = vector.load %arg7[%c1_100, %c1_101, %c0_102] : memref<18x18x4xf32, #tpu.memory_space<vmem>>, vector<16x16x4xf32>
    %c4_103 = arith.constant 4 : index
    %c0_104 = arith.constant 0 : index
    %c0_105 = arith.constant 0 : index
    %79 = vector.load %arg4[%c4_103, %c0_104, %c0_105] : memref<9x4x4xf32, #tpu.memory_space<vmem>>, vector<1x4x4xf32>
    %80 = vector.shape_cast %79 : vector<1x4x4xf32> to vector<4x4xf32>
    %cst_106 = arith.constant dense<0.000000e+00> : vector<16x16x4xf32>
    %81 = tpu.matmul %78, %80, %cst_106 {dimension_numbers = #tpu.dot_dimension_numbers<[2], [0], [0, 1], [1], [0, 0, 0, 1, 1, 1], [], []>} : vector<16x16x4xf32>, vector<4x4xf32>, vector<16x16x4xf32> -> vector<16x16x4xf32>
    %82 = arith.addf %77, %81 : vector<16x16x4xf32>
    %c1_107 = arith.constant 1 : index
    %c2_108 = arith.constant 2 : index
    %c0_109 = arith.constant 0 : index
    %83 = vector.load %arg7[%c1_107, %c2_108, %c0_109] : memref<18x18x4xf32, #tpu.memory_space<vmem>>, vector<16x16x4xf32>
    %c5_110 = arith.constant 5 : index
    %c0_111 = arith.constant 0 : index
    %c0_112 = arith.constant 0 : index
    %84 = vector.load %arg4[%c5_110, %c0_111, %c0_112] : memref<9x4x4xf32, #tpu.memory_space<vmem>>, vector<1x4x4xf32>
    %85 = vector.shape_cast %84 : vector<1x4x4xf32> to vector<4x4xf32>
    %cst_113 = arith.constant dense<0.000000e+00> : vector<16x16x4xf32>
    %86 = tpu.matmul %83, %85, %cst_113 {dimension_numbers = #tpu.dot_dimension_numbers<[2], [0], [0, 1], [1], [0, 0, 0, 1, 1, 1], [], []>} : vector<16x16x4xf32>, vector<4x4xf32>, vector<16x16x4xf32> -> vector<16x16x4xf32>
    %87 = arith.addf %82, %86 : vector<16x16x4xf32>
    %c2_114 = arith.constant 2 : index
    %c0_115 = arith.constant 0 : index
    %c0_116 = arith.constant 0 : index
    %88 = vector.load %arg7[%c2_114, %c0_115, %c0_116] : memref<18x18x4xf32, #tpu.memory_space<vmem>>, vector<16x16x4xf32>
    %c6_117 = arith.constant 6 : index
    %c0_118 = arith.constant 0 : index
    %c0_119 = arith.constant 0 : index
    %89 = vector.load %arg4[%c6_117, %c0_118, %c0_119] : memref<9x4x4xf32, #tpu.memory_space<vmem>>, vector<1x4x4xf32>
    %90 = vector.shape_cast %89 : vector<1x4x4xf32> to vector<4x4xf32>
    %cst_120 = arith.constant dense<0.000000e+00> : vector<16x16x4xf32>
    %91 = tpu.matmul %88, %90, %cst_120 {dimension_numbers = #tpu.dot_dimension_numbers<[2], [0], [0, 1], [1], [0, 0, 0, 1, 1, 1], [], []>} : vector<16x16x4xf32>, vector<4x4xf32>, vector<16x16x4xf32> -> vector<16x16x4xf32>
    %92 = arith.addf %87, %91 : vector<16x16x4xf32>
    %c2_121 = arith.constant 2 : index
    %c1_122 = arith.constant 1 : index
    %c0_123 = arith.constant 0 : index
    %93 = vector.load %arg7[%c2_121, %c1_122, %c0_123] : memref<18x18x4xf32, #tpu.memory_space<vmem>>, vector<16x16x4xf32>
    %c7_124 = arith.constant 7 : index
    %c0_125 = arith.constant 0 : index
    %c0_126 = arith.constant 0 : index
    %94 = vector.load %arg4[%c7_124, %c0_125, %c0_126] : memref<9x4x4xf32, #tpu.memory_space<vmem>>, vector<1x4x4xf32>
    %95 = vector.shape_cast %94 : vector<1x4x4xf32> to vector<4x4xf32>
    %cst_127 = arith.constant dense<0.000000e+00> : vector<16x16x4xf32>
    %96 = tpu.matmul %93, %95, %cst_127 {dimension_numbers = #tpu.dot_dimension_numbers<[2], [0], [0, 1], [1], [0, 0, 0, 1, 1, 1], [], []>} : vector<16x16x4xf32>, vector<4x4xf32>, vector<16x16x4xf32> -> vector<16x16x4xf32>
    %97 = arith.addf %92, %96 : vector<16x16x4xf32>
    %c2_128 = arith.constant 2 : index
    %c2_129 = arith.constant 2 : index
    %c0_130 = arith.constant 0 : index
    %98 = vector.load %arg7[%c2_128, %c2_129, %c0_130] : memref<18x18x4xf32, #tpu.memory_space<vmem>>, vector<16x16x4xf32>
    %c8_131 = arith.constant 8 : index
    %c0_132 = arith.constant 0 : index
    %c0_133 = arith.constant 0 : index
    %99 = vector.load %arg4[%c8_131, %c0_132, %c0_133] : memref<9x4x4xf32, #tpu.memory_space<vmem>>, vector<1x4x4xf32>
    %100 = vector.shape_cast %99 : vector<1x4x4xf32> to vector<4x4xf32>
    %cst_134 = arith.constant dense<0.000000e+00> : vector<16x16x4xf32>
    %101 = tpu.matmul %98, %100, %cst_134 {dimension_numbers = #tpu.dot_dimension_numbers<[2], [0], [0, 1], [1], [0, 0, 0, 1, 1, 1], [], []>} : vector<16x16x4xf32>, vector<4x4xf32>, vector<16x16x4xf32> -> vector<16x16x4xf32>
    %102 = arith.addf %97, %101 : vector<16x16x4xf32>
    %103 = vector.shape_cast %5 : vector<4xf32> to vector<1x1x4xf32>
    %104 = vector.broadcast %103 : vector<1x1x4xf32> to vector<16x16x4xf32>
    %105 = arith.addf %102, %104 : vector<16x16x4xf32>
    %c0_135 = arith.constant 0 : index
    %c0_136 = arith.constant 0 : index
    %c0_137 = arith.constant 0 : index
    %c0_138 = arith.constant 0 : index
    %106 = vector.load %arg1[%c0_135, %c0_136, %c0_137, %c0_138] : memref<1x16x16x4xf32, #tpu.memory_space<vmem>>, vector<1x16x16x4xf32>
    %107 = vector.shape_cast %106 : vector<1x16x16x4xf32> to vector<16x16x4xf32>
    %108 = arith.addf %105, %107 : vector<16x16x4xf32>
    %cst_139 = arith.constant 0.000000e+00 : f32
    %109 = vector.broadcast %cst_139 : f32 to vector<16x16x4xf32>
    %110 = arith.maximumf %108, %109 : vector<16x16x4xf32>
    %c0_140 = arith.constant 0 : index
    %c0_141 = arith.constant 0 : index
    %c0_142 = arith.constant 0 : index
    %c0_143 = arith.constant 0 : index
    %111 = vector.load %arg6[%c0_140, %c0_141, %c0_142, %c0_143] : memref<1x16x16x4xf32, #tpu.memory_space<vmem>>, vector<1x16x16x4xf32>
    %112 = vector.shape_cast %111 : vector<1x16x16x4xf32> to vector<16x16x4xf32>
    %113 = vector.shape_cast %110 : vector<16x16x4xf32> to vector<1x16x16x4xf32>
    tpu.vector_store %arg6[%c0_140, %c0_141, %c0_142, %c0_143], %113 {strides = array<i32>} : memref<1x16x16x4xf32, #tpu.memory_space<vmem>>, vector<1x16x16x4xf32>,
    return
  }
  func.func @transform_0(%arg0: i32) -> (i32, i32, i32, i32) {
    %c0_i32 = arith.constant 0 : i32
    %c0_i32_0 = arith.constant 0 : i32
    %c0_i32_1 = arith.constant 0 : i32
    %c0_i32_2 = arith.constant 0 : i32
    return %arg0, %c0_i32, %c0_i32_0, %c0_i32_1 : i32, i32, i32, i32
  }
  func.func @transform_1(%arg0: i32) -> (i32, i32, i32) {
    %c0_i32 = arith.constant 0 : i32
    %c0_i32_0 = arith.constant 0 : i32
    %c0_i32_1 = arith.constant 0 : i32
    %c0_i32_2 = arith.constant 0 : i32
    return %c0_i32, %c0_i32_0, %c0_i32_1 : i32, i32, i32
  }
  func.func @transform_2(%arg0: i32) -> (i32, i32) {
    %c0_i32 = arith.constant 0 : i32
    %c0_i32_0 = arith.constant 0 : i32
    %c0_i32_1 = arith.constant 0 : i32
    return %c0_i32, %c0_i32_0 : i32, i32
  }
  func.func @transform_3(%arg0: i32) -> (i32, i32, i32) {
    %c0_i32 = arith.constant 0 : i32
    %c0_i32_0 = arith.constant 0 : i32
    %c0_i32_1 = arith.constant 0 : i32
    %c0_i32_2 = arith.constant 0 : i32
    return %c0_i32, %c0_i32_0, %c0_i32_1 : i32, i32, i32
  }
  func.func @transform_4(%arg0: i32) -> (i32, i32) {
    %c0_i32 = arith.constant 0 : i32
    %c0_i32_0 = arith.constant 0 : i32
    %c0_i32_1 = arith.constant 0 : i32
    return %c0_i32, %c0_i32_0 : i32, i32
  }
  func.func @transform_5(%arg0: i32) -> (i32, i32, i32, i32) {
    %c0_i32 = arith.constant 0 : i32
    %c0_i32_0 = arith.constant 0 : i32
    %c0_i32_1 = arith.constant 0 : i32
    %c0_i32_2 = arith.constant 0 : i32
    return %arg0, %c0_i32, %c0_i32_0, %c0_i32_1 : i32, i32, i32, i32
  }
}

</mosaic_0001>

<llo_original>
// kernel: tpu_custom_call.1
$region0: #{tpu_custom_call.1}
  #allocation0 [shape = 'u32[]', space=smem, size = 0x4, offset = 0x4, fixed_abs, tag = 'smem constant byte address 0x4 - core index']
  #allocation1 [shape = 'u32[72,128]{1,0:T(1,128)}', space=vmem, size = 0x9000, scoped, tag = 'internal scratch']
  #allocation2 [shape = 'f32[18,18,4]{2,1,0:T(8,128)}', space=vmem, size = 0x36000, scoped, tag = 'scratch operand']
  %s0 = inlined_call_operand.vmem [shape: f32[2,16,16,4], index: 0, kind: input, shape index: {}]
  %s1 = inlined_call_operand.vmem [shape: f32[9,4,4], index: 1, kind: input, shape index: {}]
  %s2 = inlined_call_operand.vmem [shape: f32[1,4], index: 2, kind: input, shape index: {}]
  %s3 = inlined_call_operand.vmem [shape: f32[9,4,4], index: 3, kind: input, shape index: {}]
  %s4 = inlined_call_operand.vmem [shape: f32[1,4], index: 4, kind: input, shape index: {}]
  %s5 = inlined_call_operand.vmem [shape: f32[2,16,16,4], index: 5, kind: output, shape index: {}]
  %s6 = sld [smem:[#allocation0]]
  $region53: #{tpu_custom_call.1} parent=0
    _
  %s8 = ssub.s32 1, %s6
  %s9 = scalar_select 0, %s8, %s6
  loop: start=0, step=1, limit=4
  $region2: #{tpu_custom_call.1} parent=0 // loop_pre_header
    _
  $region3: #{tpu_custom_call.1} parent=0 // loop_header
    %s11 = sphi 0, %s15
    %p12 = scmp.ge.s32.totalorder %s11, 4
    %s21 = sphi 0, %s23
    %s24 = sphi 0, %s21
    %s25 = sphi 0, %s24
    %s41 = sphi 0, %s25
    %s45 = sphi 0, %s45
    %s47 = sphi 0, %s45
    %s48 = sphi 0, %s47
    %s62 = sphi 0, %s48
    %s66 = sphi 0, %s66
    %s68 = sphi 0, %s66
    %s69 = sphi 0, %s68
    %s83 = sphi 0, %s69
    %s87 = sphi 0, %s87
    %s89 = sphi 0, %s87
    %s90 = sphi 0, %s89
    %s104 = sphi 0, %s90
    %s108 = sphi 0, %s108
    %s110 = sphi 0, %s108
    %s111 = sphi 0, %s110
    %s125 = sphi 0, %s111
    %s131 = sphi 0, %s133
    %s134 = sphi 0, %s131
    %s135 = sphi 0, %s134
    %s151 = sphi 0, %s135
  $region4: #{tpu_custom_call.1} parent=0 // loop_header_branch
    %14 = sbr.rel (%p12) target = $region8
  $region5: #{tpu_custom_call.1} parent=0 // loop_body
    %s16 = ssub.s32 %s11, 1
    %s17 = ssub.s32 %s11, 2
    %s18 = sadd.s32 %s11, 1
    %s19 = ssub.s32 %s11, %s18
    %p20 = scmp.eq.s32.totalorder %s19, 0
    %s22 = sadd.s32 %s21, 1
    %s23 = scalar_select %p20, %s21, %s22
    %p26 = pneg %p20
    %p27 = scmp.eq.s32.totalorder %s11, 1
    %p28 = por %p26, %p27
    %p29 = scmp.ne.s32.totalorder %s21, %s24
    %p30 = scmp.eq.s32.totalorder %s11, 0
    %p31 = por %p29, %p30
    %p32 = scmp.ne.s32.totalorder %s21, %s24
    %p33 = scmp.eq.s32.totalorder %s16, 1
    %p34 = por %p32, %p33
    %p35 = scmp.ne.s32.totalorder %s24, %s25
    %p36 = scmp.eq.s32.totalorder %s16, 0
    %p37 = por %p35, %p36
    %p38 = scmp.ne.s32.totalorder %s24, %s25
    %p39 = scmp.eq.s32.totalorder %s17, 1
    %p40 = por %p38, %p39
    %p42 = scmp.ne.s32.totalorder %s25, %s41
    %p43 = scmp.eq.s32.totalorder %s17, 0
    %p44 = por %p42, %p43
    %s46 = sadd.s32 %s45, 1
    %p49 = scmp.eq.s32.totalorder %s11, 1
    %p50 = scmp.ne.s32.totalorder %s45, %s47
    %p51 = scmp.eq.s32.totalorder %s11, 0
    %p52 = por %p50, %p51
    %p53 = scmp.ne.s32.totalorder %s45, %s47
    %p54 = scmp.eq.s32.totalorder %s16, 1
    %p55 = por %p53, %p54
    %p56 = scmp.ne.s32.totalorder %s47, %s48
    %p57 = scmp.eq.s32.totalorder %s16, 0
    %p58 = por %p56, %p57
    %p59 = scmp.ne.s32.totalorder %s47, %s48
    %p60 = scmp.eq.s32.totalorder %s17, 1
    %p61 = por %p59, %p60
    %p63 = scmp.ne.s32.totalorder %s48, %s62
    %p64 = scmp.eq.s32.totalorder %s17, 0
    %p65 = por %p63, %p64
    %s67 = sadd.s32 %s66, 1
    %p70 = scmp.eq.s32.totalorder %s11, 1
    %p71 = scmp.ne.s32.totalorder %s66, %s68
    %p72 = scmp.eq.s32.totalorder %s11, 0
    %p73 = por %p71, %p72
    %p74 = scmp.ne.s32.totalorder %s66, %s68
    %p75 = scmp.eq.s32.totalorder %s16, 1
    %p76 = por %p74, %p75
    %p77 = scmp.ne.s32.totalorder %s68, %s69
    %p78 = scmp.eq.s32.totalorder %s16, 0
    %p79 = por %p77, %p78
    %p80 = scmp.ne.s32.totalorder %s68, %s69
    %p81 = scmp.eq.s32.totalorder %s17, 1
    %p82 = por %p80, %p81
    %p84 = scmp.ne.s32.totalorder %s69, %s83
    %p85 = scmp.eq.s32.totalorder %s17, 0
    %p86 = por %p84, %p85
    %s88 = sadd.s32 %s87, 1
    %p91 = scmp.eq.s32.totalorder %s11, 1
    %p92 = scmp.ne.s32.totalorder %s87, %s89
    %p93 = scmp.eq.s32.totalorder %s11, 0
    %p94 = por %p92, %p93
    %p95 = scmp.ne.s32.totalorder %s87, %s89
    %p96 = scmp.eq.s32.totalorder %s16, 1
    %p97 = por %p95, %p96
    %p98 = scmp.ne.s32.totalorder %s89, %s90
    %p99 = scmp.eq.s32.totalorder %s16, 0
    %p100 = por %p98, %p99
    %p101 = scmp.ne.s32.totalorder %s89, %s90
    %p102 = scmp.eq.s32.totalorder %s17, 1
    %p103 = por %p101, %p102
    %p105 = scmp.ne.s32.totalorder %s90, %s104
    %p106 = scmp.eq.s32.totalorder %s17, 0
    %p107 = por %p105, %p106
    %s109 = sadd.s32 %s108, 1
    %p112 = scmp.eq.s32.totalorder %s11, 1
    %p113 = scmp.ne.s32.totalorder %s108, %s110
    %p114 = scmp.eq.s32.totalorder %s11, 0
    %p115 = por %p113, %p114
    %p116 = scmp.ne.s32.totalorder %s108, %s110
    %p117 = scmp.eq.s32.totalorder %s16, 1
    %p118 = por %p116, %p117
    %p119 = scmp.ne.s32.totalorder %s110, %s111
    %p120 = scmp.eq.s32.totalorder %s16, 0
    %p121 = por %p119, %p120
    %p122 = scmp.ne.s32.totalorder %s110, %s111
    %p123 = scmp.eq.s32.totalorder %s17, 1
    %p124 = por %p122, %p123
    %p126 = scmp.ne.s32.totalorder %s111, %s125
    %p127 = scmp.eq.s32.totalorder %s17, 0
    %p128 = por %p126, %p127
    %s129 = ssub.s32 %s11, %s18
    %p130 = scmp.eq.s32.totalorder %s129, 0
    %s132 = sadd.s32 %s131, 1
    %s133 = scalar_select %p130, %s131, %s132
    %p136 = pneg %p130
    %p137 = scmp.eq.s32.totalorder %s11, 1
    %p138 = por %p136, %p137
    %p139 = scmp.ne.s32.totalorder %s131, %s134
    %p140 = scmp.eq.s32.totalorder %s11, 0
    %p141 = por %p139, %p140
    %p142 = scmp.ne.s32.totalorder %s131, %s134
    %p143 = scmp.eq.s32.totalorder %s16, 1
    %p144 = por %p142, %p143
    %p145 = scmp.ne.s32.totalorder %s134, %s135
    %p146 = scmp.eq.s32.totalorder %s16, 0
    %p147 = por %p145, %p146
    %p148 = scmp.ne.s32.totalorder %s134, %s135
    %p149 = scmp.eq.s32.totalorder %s17, 1
    %p150 = por %p148, %p149
    %p152 = scmp.ne.s32.totalorder %s135, %s151
    %p153 = scmp.eq.s32.totalorder %s17, 0
    %p154 = por %p152, %p153
    %p155 = scmp.le.s32.totalorder 1, %s11
    %p156 = scmp.lt.s32.totalorder %s11, 3
    %p157 = pnand %p155, %p156
    %p158 = pneg %p157
    // Predicated region
    $region9: #{tpu_custom_call.1} parent=5 // pred_check
      _
    $region10: #{tpu_custom_call.1} parent=5 // pred_check_branch
      %160 = sbr.rel (%p157) target = $region12
    $region11: #{tpu_custom_call.1} parent=5 // pred_region
      %s161 = ssub.s32 %s11, 1
      // Predicated region
      $region13: #{tpu_custom_call.1} parent=11 // pred_check
        %p162 = pneg %p58
      $region14: #{tpu_custom_call.1} parent=11 // pred_check_branch
        %164 = sbr.rel (%p162) target = $region16
      $region15: #{tpu_custom_call.1} parent=11 // pred_region
        _
      $region16: #{tpu_custom_call.1} parent=11 // pred_fallthru
        _
      // Predicated region
      $region17: #{tpu_custom_call.1} parent=11 // pred_check
        %p165 = pneg %p79
      $region18: #{tpu_custom_call.1} parent=11 // pred_check_branch
        %167 = sbr.rel (%p165) target = $region20
      $region19: #{tpu_custom_call.1} parent=11 // pred_region
        _
      $region20: #{tpu_custom_call.1} parent=11 // pred_fallthru
        _
      // Predicated region
      $region21: #{tpu_custom_call.1} parent=11 // pred_check
        %p168 = pneg %p100
      $region22: #{tpu_custom_call.1} parent=11 // pred_check_branch
        %170 = sbr.rel (%p168) target = $region24
      $region23: #{tpu_custom_call.1} parent=11 // pred_region
        _
      $region24: #{tpu_custom_call.1} parent=11 // pred_fallthru
        _
      // Predicated region
      $region25: #{tpu_custom_call.1} parent=11 // pred_check
        %p171 = pneg %p121
      $region26: #{tpu_custom_call.1} parent=11 // pred_check_branch
        %173 = sbr.rel (%p171) target = $region28
      $region27: #{tpu_custom_call.1} parent=11 // pred_region
        _
      $region28: #{tpu_custom_call.1} parent=11 // pred_fallthru
        _
    $region12: #{tpu_custom_call.1} parent=5 // pred_fallthru
      _
    %p174 = scmp.lt.s32.totalorder %s11, 2
    // Predicated region
    $region29: #{tpu_custom_call.1} parent=5 // pred_check
      %p175 = pneg %p174
    $region30: #{tpu_custom_call.1} parent=5 // pred_check_branch
      %177 = sbr.rel (%p175) target = $region32
    $region31: #{tpu_custom_call.1} parent=5 // pred_region
      // Predicated region
      $region33: #{tpu_custom_call.1} parent=31 // pred_check
        %p178 = pneg %p31
      $region34: #{tpu_custom_call.1} parent=31 // pred_check_branch
        %180 = sbr.rel (%p178) target = $region36
      $region35: #{tpu_custom_call.1} parent=31 // pred_region
        %p181 = scmp.lt.s32.totalorder %s11, 1
        %s182 = scalar_select %p181, %s11, 1
        %s183 = smul.addr %s182, 32
        %s184 = smul.addr %s183, 8
        %s185 = scalar_lea.vmem %s0, %s184
      $region36: #{tpu_custom_call.1} parent=31 // pred_fallthru
        _
    $region32: #{tpu_custom_call.1} parent=5 // pred_fallthru
      _
    %p186 = scmp.le.s32.totalorder 1, %s11
    %p187 = scmp.lt.s32.totalorder %s11, 3
    %p188 = pnand %p186, %p187
    %p189 = pneg %p188
    // Predicated region
    $region37: #{tpu_custom_call.1} parent=5 // pred_check
      _
    $region38: #{tpu_custom_call.1} parent=5 // pred_check_branch
      %191 = sbr.rel (%p188) target = $region40
    $region39: #{tpu_custom_call.1} parent=5 // pred_region
      %s192 = ssub.s32 %s11, 1
      %p193 = scmp.lt.s32.totalorder %s16, 1
      %s194 = scalar_select %p193, %s16, 1
      %s195 = smul.addr %s194, 32
      %s196 = smul.addr %s195, 8
      %s197 = scalar_lea.vmem %s0, %s196
      %p198 = pneg %p37
      %p199 = pneg %p34
      %p200 = pneg %p58
      %p201 = pneg %p55
      %p202 = pneg %p79
      %p203 = pneg %p76
      %p204 = pneg %p100
      %p205 = pneg %p97
      %p206 = pneg %p121
      %p207 = pneg %p118
      %p208 = pneg %p147
      %p209 = pneg %p144
      %p210 = scmp.lt.s32.totalorder %s16, 1
      %s211 = scalar_select %p210, %s16, 1
      %s212 = smul.addr %s211, 32
      %s213 = smul.addr %s212, 8
      %s214 = scalar_lea.vmem %s5, %s213
      %p215 = scmp.lt.s32.totalorder %s16, 1
      %s216 = scalar_select %p215, %s16, 1
      %s217 = smul.addr %s216, 32
      %s218 = smul.addr %s217, 8
      %s219 = scalar_lea.vmem %s0, %s218
      %p220 = scmp.lt.s32.totalorder %s16, 1
      %s221 = scalar_select %p220, %s16, 1
      %s222 = smul.addr %s221, 32
      %s223 = smul.addr %s222, 8
      %s224 = scalar_lea.vmem %s5, %s223
      %vm225 = vcmask 31744
      %226 = vst.msk [vmem:[#allocation2] sm:$0xff] %vm225, 0.0
      %227 = vst.msk [vmem:[#allocation2 + $0x8] sm:$0xff] %vm225, 0.0
      %vm228 = vcmask 25600
      %229 = vst.msk [vmem:[#allocation2 + $0x10] sm:$0x3] %vm228, 0.0
      %230 = vst.msk [vmem:[#allocation2 + $0x18] sm:$0xff] %vm225, 0.0
      %231 = vst.msk [vmem:[#allocation2 + $0x20] sm:$0xff] %vm225, 0.0
      %232 = vst.msk [vmem:[#allocation2 + $0x28] sm:$0x3] %vm228, 0.0
      %233 = vst.msk [vmem:[#allocation2 + $0x30] sm:$0xff] %vm225, 0.0
      %234 = vst.msk [vmem:[#allocation2 + $0x38] sm:$0xff] %vm225, 0.0
      %235 = vst.msk [vmem:[#allocation2 + $0x40] sm:$0x3] %vm228, 0.0
      %236 = vst.msk [vmem:[#allocation2 + $0x48] sm:$0xff] %vm225, 0.0
      %237 = vst.msk [vmem:[#allocation2 + $0x50] sm:$0xff] %vm225, 0.0
      %238 = vst.msk [vmem:[#allocation2 + $0x58] sm:$0x3] %vm228, 0.0
      %239 = vst.msk [vmem:[#allocation2 + $0x60] sm:$0xff] %vm225, 0.0
      %240 = vst.msk [vmem:[#allocation2 + $0x68] sm:$0xff] %vm225, 0.0
      %241 = vst.msk [vmem:[#allocation2 + $0x70] sm:$0x3] %vm228, 0.0
      %242 = vst.msk [vmem:[#allocation2 + $0x78] sm:$0xff] %vm225, 0.0
      %243 = vst.msk [vmem:[#allocation2 + $0x80] sm:$0xff] %vm225, 0.0
      %244 = vst.msk [vmem:[#allocation2 + $0x88] sm:$0x3] %vm228, 0.0
      %245 = vst.msk [vmem:[#allocation2 + $0x90] sm:$0xff] %vm225, 0.0
      %246 = vst.msk [vmem:[#allocation2 + $0x98] sm:$0xff] %vm225, 0.0
      %247 = vst.msk [vmem:[#allocation2 + $0xa0] sm:$0x3] %vm228, 0.0
      %248 = vst.msk [vmem:[#allocation2 + $0xa8] sm:$0xff] %vm225, 0.0
      %249 = vst.msk [vmem:[#allocation2 + $0xb0] sm:$0xff] %vm225, 0.0
      %250 = vst.msk [vmem:[#allocation2 + $0xb8] sm:$0x3] %vm228, 0.0
      %251 = vst.msk [vmem:[#allocation2 + $0xc0] sm:$0xff] %vm225, 0.0
      %252 = vst.msk [vmem:[#allocation2 + $0xc8] sm:$0xff] %vm225, 0.0
      %253 = vst.msk [vmem:[#allocation2 + $0xd0] sm:$0x3] %vm228, 0.0
      %254 = vst.msk [vmem:[#allocation2 + $0xd8] sm:$0xff] %vm225, 0.0
      %255 = vst.msk [vmem:[#allocation2 + $0xe0] sm:$0xff] %vm225, 0.0
      %256 = vst.msk [vmem:[#allocation2 + $0xe8] sm:$0x3] %vm228, 0.0
      %257 = vst.msk [vmem:[#allocation2 + $0xf0] sm:$0xff] %vm225, 0.0
      %258 = vst.msk [vmem:[#allocation2 + $0xf8] sm:$0xff] %vm225, 0.0
      %259 = vst.msk [vmem:[#allocation2 + $0x100] sm:$0x3] %vm228, 0.0
      %260 = vst.msk [vmem:[#allocation2 + $0x108] sm:$0xff] %vm225, 0.0
      %261 = vst.msk [vmem:[#allocation2 + $0x110] sm:$0xff] %vm225, 0.0
      %262 = vst.msk [vmem:[#allocation2 + $0x118] sm:$0x3] %vm228, 0.0
      %263 = vst.msk [vmem:[#allocation2 + $0x120] sm:$0xff] %vm225, 0.0
      %264 = vst.msk [vmem:[#allocation2 + $0x128] sm:$0xff] %vm225, 0.0
      %265 = vst.msk [vmem:[#allocation2 + $0x130] sm:$0x3] %vm228, 0.0
      %266 = vst.msk [vmem:[#allocation2 + $0x138] sm:$0xff] %vm225, 0.0
      %267 = vst.msk [vmem:[#allocation2 + $0x140] sm:$0xff] %vm225, 0.0
      %268 = vst.msk [vmem:[#allocation2 + $0x148] sm:$0x3] %vm228, 0.0
      %269 = vst.msk [vmem:[#allocation2 + $0x150] sm:$0xff] %vm225, 0.0
      %270 = vst.msk [vmem:[#allocation2 + $0x158] sm:$0xff] %vm225, 0.0
      %271 = vst.msk [vmem:[#allocation2 + $0x160] sm:$0x3] %vm228, 0.0
      %272 = vst.msk [vmem:[#allocation2 + $0x168] sm:$0xff] %vm225, 0.0
      %273 = vst.msk [vmem:[#allocation2 + $0x170] sm:$0xff] %vm225, 0.0
      %274 = vst.msk [vmem:[#allocation2 + $0x178] sm:$0x3] %vm228, 0.0
      %275 = vst.msk [vmem:[#allocation2 + $0x180] sm:$0xff] %vm225, 0.0
      %276 = vst.msk [vmem:[#allocation2 + $0x188] sm:$0xff] %vm225, 0.0
      %277 = vst.msk [vmem:[#allocation2 + $0x190] sm:$0x3] %vm228, 0.0
      %278 = vst.msk [vmem:[#allocation2 + $0x198] sm:$0xff] %vm225, 0.0
      %279 = vst.msk [vmem:[#allocation2 + $0x1a0] sm:$0xff] %vm225, 0.0
      %280 = vst.msk [vmem:[#allocation2 + $0x1a8] sm:$0x3] %vm228, 0.0
      %v281 = vld [vmem:[%s2] sm:$0x1]
      %v282 = vld [vmem:[%s4] sm:$0x1]
      %v283 = vld [vmem:[%s219] sm:$0xff]
      %v284 = vld [vmem:[%s219 + $0x8] sm:$0xff]
      %v285 = vld [vmem:[%s219 + $0x10] sm:$0xff]
      %v286 = vld [vmem:[%s219 + $0x18] sm:$0xff]
      %v287 = vld [vmem:[%s219 + $0x20] sm:$0xff]
      %v288 = vld [vmem:[%s219 + $0x28] sm:$0xff]
      %v289 = vld [vmem:[%s219 + $0x30] sm:$0xff]
      %v290 = vld [vmem:[%s219 + $0x38] sm:$0xff]
      %v291 = vld [vmem:[%s219 + $0x40] sm:$0xff]
      %v292 = vld [vmem:[%s219 + $0x48] sm:$0xff]
      %v293 = vld [vmem:[%s219 + $0x50] sm:$0xff]
      %v294 = vld [vmem:[%s219 + $0x58] sm:$0xff]
      %v295 = vld [vmem:[%s219 + $0x60] sm:$0xff]
      %v296 = vld [vmem:[%s219 + $0x68] sm:$0xff]
      %v297 = vld [vmem:[%s219 + $0x70] sm:$0xff]
      %v298 = vld [vmem:[%s219 + $0x78] sm:$0xff]
      %v299 = vld [vmem:[%s219 + $0x80] sm:$0xff]
      %v300 = vld [vmem:[%s219 + $0x88] sm:$0xff]
      %v301 = vld [vmem:[%s219 + $0x90] sm:$0xff]
      %v302 = vld [vmem:[%s219 + $0x98] sm:$0xff]
      %v303 = vld [vmem:[%s219 + $0xa0] sm:$0xff]
      %v304 = vld [vmem:[%s219 + $0xa8] sm:$0xff]
      %v305 = vld [vmem:[%s219 + $0xb0] sm:$0xff]
      %v306 = vld [vmem:[%s219 + $0xb8] sm:$0xff]
      %v307 = vld [vmem:[%s219 + $0xc0] sm:$0xff]
      %v308 = vld [vmem:[%s219 + $0xc8] sm:$0xff]
      %v309 = vld [vmem:[%s219 + $0xd0] sm:$0xff]
      %v310 = vld [vmem:[%s219 + $0xd8] sm:$0xff]
      %v311 = vld [vmem:[%s219 + $0xe0] sm:$0xff]
      %v312 = vld [vmem:[%s219 + $0xe8] sm:$0xff]
      %v313 = vld [vmem:[%s219 + $0xf0] sm:$0xff]
      %v314 = vld [vmem:[%s219 + $0xf8] sm:$0xff]
      %s315 = scalar_lea.vmem [#allocation2], 24
      %316 = vst.msk [vmem:[%s315 + $0x1] sm:$0xff] %vm225, %v283
      %317 = vst.msk [vmem:[%s315 + $0x9] sm:$0xff] %vm225, %v284
      %318 = vst.msk [vmem:[%s315 + $0x19] sm:$0xff] %vm225, %v285
      %319 = vst.msk [vmem:[%s315 + $0x21] sm:$0xff] %vm225, %v286
      %320 = vst.msk [vmem:[%s315 + $0x31] sm:$0xff] %vm225, %v287
      %321 = vst.msk [vmem:[%s315 + $0x39] sm:$0xff] %vm225, %v288
      %322 = vst.msk [vmem:[%s315 + $0x49] sm:$0xff] %vm225, %v289
      %323 = vst.msk [vmem:[%s315 + $0x51] sm:$0xff] %vm225, %v290
      %324 = vst.msk [vmem:[%s315 + $0x61] sm:$0xff] %vm225, %v291
      %325 = vst.msk [vmem:[%s315 + $0x69] sm:$0xff] %vm225, %v292
      %326 = vst.msk [vmem:[%s315 + $0x79] sm:$0xff] %vm225, %v293
      %327 = vst.msk [vmem:[%s315 + $0x81] sm:$0xff] %vm225, %v294
      %328 = vst.msk [vmem:[%s315 + $0x91] sm:$0xff] %vm225, %v295
      %329 = vst.msk [vmem:[%s315 + $0x99] sm:$0xff] %vm225, %v296
      %330 = vst.msk [vmem:[%s315 + $0xa9] sm:$0xff] %vm225, %v297
      %331 = vst.msk [vmem:[%s315 + $0xb1] sm:$0xff] %vm225, %v298
      %332 = vst.msk [vmem:[%s315 + $0xc1] sm:$0xff] %vm225, %v299
      %333 = vst.msk [vmem:[%s315 + $0xc9] sm:$0xff] %vm225, %v300
      %334 = vst.msk [vmem:[%s315 + $0xd9] sm:$0xff] %vm225, %v301
      %335 = vst.msk [vmem:[%s315 + $0xe1] sm:$0xff] %vm225, %v302
      %336 = vst.msk [vmem:[%s315 + $0xf1] sm:$0xff] %vm225, %v303
      %337 = vst.msk [vmem:[%s315 + $0xf9] sm:$0xff] %vm225, %v304
      %338 = vst.msk [vmem:[%s315 + $0x109] sm:$0xff] %vm225, %v305
      %339 = vst.msk [vmem:[%s315 + $0x111] sm:$0xff] %vm225, %v306
      %340 = vst.msk [vmem:[%s315 + $0x121] sm:$0xff] %vm225, %v307
      %341 = vst.msk [vmem:[%s315 + $0x129] sm:$0xff] %vm225, %v308
      %342 = vst.msk [vmem:[%s315 + $0x139] sm:$0xff] %vm225, %v309
      %343 = vst.msk [vmem:[%s315 + $0x141] sm:$0xff] %vm225, %v310
      %344 = vst.msk [vmem:[%s315 + $0x151] sm:$0xff] %vm225, %v311
      %345 = vst.msk [vmem:[%s315 + $0x159] sm:$0xff] %vm225, %v312
      %346 = vst.msk [vmem:[%s315 + $0x169] sm:$0xff] %vm225, %v313
      %347 = vst.msk [vmem:[%s315 + $0x171] sm:$0xff] %vm225, %v314
      %v348 = vld [vmem:[#allocation2] sm:$0xff]
      %v349 = vld [vmem:[#allocation2 + $0x8] sm:$0xff]
      %v350 = vld [vmem:[#allocation2 + $0x18] sm:$0xff]
      %v351 = vld [vmem:[#allocation2 + $0x20] sm:$0xff]
      %v352 = vld [vmem:[#allocation2 + $0x30] sm:$0xff]
      %v353 = vld [vmem:[#allocation2 + $0x38] sm:$0xff]
      %v354 = vld [vmem:[#allocation2 + $0x48] sm:$0xff]
      %v355 = vld [vmem:[#allocation2 + $0x50] sm:$0xff]
      %v356 = vld [vmem:[#allocation2 + $0x60] sm:$0xff]
      %v357 = vld [vmem:[#allocation2 + $0x68] sm:$0xff]
      %v358 = vld [vmem:[#allocation2 + $0x78] sm:$0xff]
      %v359 = vld [vmem:[#allocation2 + $0x80] sm:$0xff]
      %v360 = vld [vmem:[#allocation2 + $0x90] sm:$0xff]
      %v361 = vld [vmem:[#allocation2 + $0x98] sm:$0xff]
      %v362 = vld [vmem:[#allocation2 + $0xa8] sm:$0xff]
      %v363 = vld [vmem:[#allocation2 + $0xb0] sm:$0xff]
      %v364 = vld [vmem:[#allocation2 + $0xc0] sm:$0xff]
      %v365 = vld [vmem:[#allocation2 + $0xc8] sm:$0xff]
      %v366 = vld [vmem:[#allocation2 + $0xd8] sm:$0xff]
      %v367 = vld [vmem:[#allocation2 + $0xe0] sm:$0xff]
      %v368 = vld [vmem:[#allocation2 + $0xf0] sm:$0xff]
      %v369 = vld [vmem:[#allocation2 + $0xf8] sm:$0xff]
      %v370 = vld [vmem:[#allocation2 + $0x108] sm:$0xff]
      %v371 = vld [vmem:[#allocation2 + $0x110] sm:$0xff]
      %v372 = vld [vmem:[#allocation2 + $0x120] sm:$0xff]
      %v373 = vld [vmem:[#allocation2 + $0x128] sm:$0xff]
      %v374 = vld [vmem:[#allocation2 + $0x138] sm:$0xff]
      %v375 = vld [vmem:[#allocation2 + $0x140] sm:$0xff]
      %v376 = vld [vmem:[#allocation2 + $0x150] sm:$0xff]
      %v377 = vld [vmem:[#allocation2 + $0x158] sm:$0xff]
      %v378 = vld [vmem:[#allocation2 + $0x168] sm:$0xff]
      %v379 = vld [vmem:[#allocation2 + $0x170] sm:$0xff]
      %v380 = vld [vmem:[%s1] sm:$0xf]
      %v381 = vld [vmem:[#allocation2 + $0x1] sm:$0xff]
      %v382 = vld [vmem:[#allocation2 + $0x9] sm:$0xff]
      %v383 = vld [vmem:[#allocation2 + $0x19] sm:$0xff]
      %v384 = vld [vmem:[#allocation2 + $0x21] sm:$0xff]
      %v385 = vld [vmem:[#allocation2 + $0x31] sm:$0xff]
      %v386 = vld [vmem:[#allocation2 + $0x39] sm:$0xff]
      %v387 = vld [vmem:[#allocation2 + $0x49] sm:$0xff]
      %v388 = vld [vmem:[#allocation2 + $0x51] sm:$0xff]
      %v389 = vld [vmem:[#allocation2 + $0x61] sm:$0xff]
      %v390 = vld [vmem:[#allocation2 + $0x69] sm:$0xff]
      %v391 = vld [vmem:[#allocation2 + $0x79] sm:$0xff]
      %v392 = vld [vmem:[#allocation2 + $0x81] sm:$0xff]
      %v393 = vld [vmem:[#allocation2 + $0x91] sm:$0xff]
      %v394 = vld [vmem:[#allocation2 + $0x99] sm:$0xff]
      %v395 = vld [vmem:[#allocation2 + $0xa9] sm:$0xff]
      %v396 = vld [vmem:[#allocation2 + $0xb1] sm:$0xff]
      %v397 = vld [vmem:[#allocation2 + $0xc1] sm:$0xff]
      %v398 = vld [vmem:[#allocation2 + $0xc9] sm:$0xff]
      %v399 = vld [vmem:[#allocation2 + $0xd9] sm:$0xff]
      %v400 = vld [vmem:[#allocation2 + $0xe1] sm:$0xff]
      %v401 = vld [vmem:[#allocation2 + $0xf1] sm:$0xff]
      %v402 = vld [vmem:[#allocation2 + $0xf9] sm:$0xff]
      %v403 = vld [vmem:[#allocation2 + $0x109] sm:$0xff]
      %v404 = vld [vmem:[#allocation2 + $0x111] sm:$0xff]
      %v405 = vld [vmem:[#allocation2 + $0x121] sm:$0xff]
      %v406 = vld [vmem:[#allocation2 + $0x129] sm:$0xff]
      %v407 = vld [vmem:[#allocation2 + $0x139] sm:$0xff]
      %v408 = vld [vmem:[#allocation2 + $0x141] sm:$0xff]
      %v409 = vld [vmem:[#allocation2 + $0x151] sm:$0xff]
      %v410 = vld [vmem:[#allocation2 + $0x159] sm:$0xff]
      %v411 = vld [vmem:[#allocation2 + $0x169] sm:$0xff]
      %v412 = vld [vmem:[#allocation2 + $0x171] sm:$0xff]
      %s413 = scalar_lea.vmem %s1, 4
      %v414 = vld [vmem:[%s413] sm:$0xf]
      %v416 = vsel %vm225, %v381, 0
      %v419 = vsel %vm225, %v382, 0
      %v422 = vsel %vm225, %v383, 0
      %v425 = vsel %vm225, %v384, 0
      %v428 = vsel %vm225, %v385, 0
      %v431 = vsel %vm225, %v386, 0
      %v434 = vsel %vm225, %v387, 0
      %v437 = vsel %vm225, %v388, 0
      %v440 = vsel %vm225, %v389, 0
      %v443 = vsel %vm225, %v390, 0
      %v446 = vsel %vm225, %v391, 0
      %v449 = vsel %vm225, %v392, 0
      %v452 = vsel %vm225, %v393, 0
      %v455 = vsel %vm225, %v394, 0
      %v458 = vsel %vm225, %v395, 0
      %v461 = vsel %vm225, %v396, 0
      %v464 = vsel %vm225, %v397, 0
      %v467 = vsel %vm225, %v398, 0
      %v470 = vsel %vm225, %v399, 0
      %v473 = vsel %vm225, %v400, 0
      %v476 = vsel %vm225, %v401, 0
      %v479 = vsel %vm225, %v402, 0
      %v482 = vsel %vm225, %v403, 0
      %v485 = vsel %vm225, %v404, 0
      %v488 = vsel %vm225, %v405, 0
      %v491 = vsel %vm225, %v406, 0
      %v494 = vsel %vm225, %v407, 0
      %v497 = vsel %vm225, %v408, 0
      %v500 = vsel %vm225, %v409, 0
      %v503 = vsel %vm225, %v410, 0
      %v506 = vsel %vm225, %v411, 0
      %v509 = vsel %vm225, %v412, 0
      %vm511 = vcmask 1043456
      %v513 = vsel %vm511, %v414, 0
      %515 = vmatpush.msra.mxu0 0.0
      %516 = vmatpush.msra.mxu0 0.0
      %517 = vmatpush.msra.mxu0 0.0
      %518 = vmatpush.msra.mxu0 0.0
      %519 = vmatpush.msra.mxu0 0.0
      %520 = vmatpush.msra.mxu0 0.0
      %521 = vmatpush.msra.mxu0 0.0
      %522 = vmatpush.msra.mxu0 0.0
      %523 = vmatpush.msra.mxu0 0.0
      %524 = vmatpush.msra.mxu0 0.0
      %525 = vmatpush.msra.mxu0 0.0
      %526 = vmatpush.msra.mxu0 0.0
      %527 = vmatpush.msra.mxu0 0.0
      %528 = vmatpush.msra.mxu0 0.0
      %529 = vmatpush.msra.mxu0 0.0
      %530 = vmatpush.msra.mxu0 %v513
      %531 = vmatmul.f32.gmra.mxu0 %v416
      %v532 = vpop.f32.mrf.mxu0
      %v533 = vadd.f32 0.0, %v532
      %534 = vmatmul.f32.gmra.mxu0 %v419
      %v535 = vpop.f32.mrf.mxu0
      %v536 = vadd.f32 0.0, %v535
      %537 = vmatmul.f32.gmra.mxu0 %v422
      %v538 = vpop.f32.mrf.mxu0
      %v539 = vadd.f32 0.0, %v538
      %540 = vmatmul.f32.gmra.mxu0 %v425
      %v541 = vpop.f32.mrf.mxu0
      %v542 = vadd.f32 0.0, %v541
      %543 = vmatmul.f32.gmra.mxu0 %v428
      %v544 = vpop.f32.mrf.mxu0
      %v545 = vadd.f32 0.0, %v544
      %546 = vmatmul.f32.gmra.mxu0 %v431
      %v547 = vpop.f32.mrf.mxu0
      %v548 = vadd.f32 0.0, %v547
      %549 = vmatmul.f32.gmra.mxu0 %v434
      %v550 = vpop.f32.mrf.mxu0
      %v551 = vadd.f32 0.0, %v550
      %552 = vmatmul.f32.gmra.mxu0 %v437
      %v553 = vpop.f32.mrf.mxu0
      %v554 = vadd.f32 0.0, %v553
      %555 = vmatmul.f32.gmra.mxu0 %v440
      %v556 = vpop.f32.mrf.mxu0
      %v557 = vadd.f32 0.0, %v556
      %558 = vmatmul.f32.gmra.mxu0 %v443
      %v559 = vpop.f32.mrf.mxu0
      %v560 = vadd.f32 0.0, %v559
      %561 = vmatmul.f32.gmra.mxu0 %v446
      %v562 = vpop.f32.mrf.mxu0
      %v563 = vadd.f32 0.0, %v562
      %564 = vmatmul.f32.gmra.mxu0 %v449
      %v565 = vpop.f32.mrf.mxu0
      %v566 = vadd.f32 0.0, %v565
      %567 = vmatmul.f32.gmra.mxu0 %v452
      %v568 = vpop.f32.mrf.mxu0
      %v569 = vadd.f32 0.0, %v568
      %570 = vmatmul.f32.gmra.mxu0 %v455
      %v571 = vpop.f32.mrf.mxu0
      %v572 = vadd.f32 0.0, %v571
      %573 = vmatmul.f32.gmra.mxu0 %v458
      %v574 = vpop.f32.mrf.mxu0
      %v575 = vadd.f32 0.0, %v574
      %576 = vmatmul.f32.gmra.mxu0 %v461
      %v577 = vpop.f32.mrf.mxu0
      %v578 = vadd.f32 0.0, %v577
      %579 = vmatmul.f32.gmra.mxu0 %v464
      %v580 = vpop.f32.mrf.mxu0
      %v581 = vadd.f32 0.0, %v580
      %582 = vmatmul.f32.gmra.mxu0 %v467
      %v583 = vpop.f32.mrf.mxu0
      %v584 = vadd.f32 0.0, %v583
      %585 = vmatmul.f32.gmra.mxu0 %v470
      %v586 = vpop.f32.mrf.mxu0
      %v587 = vadd.f32 0.0, %v586
      %588 = vmatmul.f32.gmra.mxu0 %v473
      %v589 = vpop.f32.mrf.mxu0
      %v590 = vadd.f32 0.0, %v589
      %591 = vmatmul.f32.gmra.mxu0 %v476
      %v592 = vpop.f32.mrf.mxu0
      %v593 = vadd.f32 0.0, %v592
      %594 = vmatmul.f32.gmra.mxu0 %v479
      %v595 = vpop.f32.mrf.mxu0
      %v596 = vadd.f32 0.0, %v595
      %597 = vmatmul.f32.gmra.mxu0 %v482
      %v598 = vpop.f32.mrf.mxu0
      %v599 = vadd.f32 0.0, %v598
      %600 = vmatmul.f32.gmra.mxu0 %v485
      %v601 = vpop.f32.mrf.mxu0
      %v602 = vadd.f32 0.0, %v601
      %603 = vmatmul.f32.gmra.mxu0 %v488
      %v604 = vpop.f32.mrf.mxu0
      %v605 = vadd.f32 0.0, %v604
      %606 = vmatmul.f32.gmra.mxu0 %v491
      %v607 = vpop.f32.mrf.mxu0
      %v608 = vadd.f32 0.0, %v607
      %609 = vmatmul.f32.gmra.mxu0 %v494
      %v610 = vpop.f32.mrf.mxu0
      %v611 = vadd.f32 0.0, %v610
      %612 = vmatmul.f32.gmra.mxu0 %v497
      %v613 = vpop.f32.mrf.mxu0
      %v614 = vadd.f32 0.0, %v613
      %615 = vmatmul.f32.gmra.mxu0 %v500
      %v616 = vpop.f32.mrf.mxu0
      %v617 = vadd.f32 0.0, %v616
      %618 = vmatmul.f32.gmra.mxu0 %v503
      %v619 = vpop.f32.mrf.mxu0
      %v620 = vadd.f32 0.0, %v619
      %621 = vmatmul.f32.gmra.mxu0 %v506
      %v622 = vpop.f32.mrf.mxu0
      %v623 = vadd.f32 0.0, %v622
      %624 = vmatmul.f32.gmra.mxu0 %v509
      %v625 = vpop.f32.mrf.mxu0
      %v626 = vadd.f32 0.0, %v625
      %627 = vdwg.mxu0
      %v629 = vsel %vm225, %v348, 0
      %v632 = vsel %vm225, %v349, 0
      %v635 = vsel %vm225, %v350, 0
      %v638 = vsel %vm225, %v351, 0
      %v641 = vsel %vm225, %v352, 0
      %v644 = vsel %vm225, %v353, 0
      %v647 = vsel %vm225, %v354, 0
      %v650 = vsel %vm225, %v355, 0
      %v653 = vsel %vm225, %v356, 0
      %v656 = vsel %vm225, %v357, 0
      %v659 = vsel %vm225, %v358, 0
      %v662 = vsel %vm225, %v359, 0
      %v665 = vsel %vm225, %v360, 0
      %v668 = vsel %vm225, %v361, 0
      %v671 = vsel %vm225, %v362, 0
      %v674 = vsel %vm225, %v363, 0
      %v677 = vsel %vm225, %v364, 0
      %v680 = vsel %vm225, %v365, 0
      %v683 = vsel %vm225, %v366, 0
      %v686 = vsel %vm225, %v367, 0
      %v689 = vsel %vm225, %v368, 0
      %v692 = vsel %vm225, %v369, 0
      %v695 = vsel %vm225, %v370, 0
      %v698 = vsel %vm225, %v371, 0
      %v701 = vsel %vm225, %v372, 0
      %v704 = vsel %vm225, %v373, 0
      %v707 = vsel %vm225, %v374, 0
      %v710 = vsel %vm225, %v375, 0
      %v713 = vsel %vm225, %v376, 0
      %v716 = vsel %vm225, %v377, 0
      %v719 = vsel %vm225, %v378, 0
      %v722 = vsel %vm225, %v379, 0
      %v725 = vsel %vm511, %v380, 0
      %727 = vmatpush.msra.mxu0 0.0
      %728 = vmatpush.msra.mxu0 0.0
      %729 = vmatpush.msra.mxu0 0.0
      %730 = vmatpush.msra.mxu0 0.0
      %731 = vmatpush.msra.mxu0 0.0
      %732 = vmatpush.msra.mxu0 0.0
      %733 = vmatpush.msra.mxu0 0.0
      %734 = vmatpush.msra.mxu0 0.0
      %735 = vmatpush.msra.mxu0 0.0
      %736 = vmatpush.msra.mxu0 0.0
      %737 = vmatpush.msra.mxu0 0.0
      %738 = vmatpush.msra.mxu0 0.0
      %739 = vmatpush.msra.mxu0 0.0
      %740 = vmatpush.msra.mxu0 0.0
      %741 = vmatpush.msra.mxu0 0.0
      %742 = vmatpush.msra.mxu0 %v725
      %743 = vmatmul.f32.gmra.mxu0 %v629
      %v744 = vpop.f32.mrf.mxu0
      %v745 = vadd.f32 %v533, %v744
      %746 = vmatmul.f32.gmra.mxu0 %v632
      %v747 = vpop.f32.mrf.mxu0
      %v748 = vadd.f32 %v536, %v747
      %749 = vmatmul.f32.gmra.mxu0 %v635
      %v750 = vpop.f32.mrf.mxu0
      %v751 = vadd.f32 %v539, %v750
      %752 = vmatmul.f32.gmra.mxu0 %v638
      %v753 = vpop.f32.mrf.mxu0
      %v754 = vadd.f32 %v542, %v753
      %755 = vmatmul.f32.gmra.mxu0 %v641
      %v756 = vpop.f32.mrf.mxu0
      %v757 = vadd.f32 %v545, %v756
      %758 = vmatmul.f32.gmra.mxu0 %v644
      %v759 = vpop.f32.mrf.mxu0
      %v760 = vadd.f32 %v548, %v759
      %761 = vmatmul.f32.gmra.mxu0 %v647
      %v762 = vpop.f32.mrf.mxu0
      %v763 = vadd.f32 %v551, %v762
      %764 = vmatmul.f32.gmra.mxu0 %v650
      %v765 = vpop.f32.mrf.mxu0
      %v766 = vadd.f32 %v554, %v765
      %767 = vmatmul.f32.gmra.mxu0 %v653
      %v768 = vpop.f32.mrf.mxu0
      %v769 = vadd.f32 %v557, %v768
      %770 = vmatmul.f32.gmra.mxu0 %v656
      %v771 = vpop.f32.mrf.mxu0
      %v772 = vadd.f32 %v560, %v771
      %773 = vmatmul.f32.gmra.mxu0 %v659
      %v774 = vpop.f32.mrf.mxu0
      %v775 = vadd.f32 %v563, %v774
      %776 = vmatmul.f32.gmra.mxu0 %v662
      %v777 = vpop.f32.mrf.mxu0
      %v778 = vadd.f32 %v566, %v777
      %779 = vmatmul.f32.gmra.mxu0 %v665
      %v780 = vpop.f32.mrf.mxu0
      %v781 = vadd.f32 %v569, %v780
      %782 = vmatmul.f32.gmra.mxu0 %v668
      %v783 = vpop.f32.mrf.mxu0
      %v784 = vadd.f32 %v572, %v783
      %785 = vmatmul.f32.gmra.mxu0 %v671
      %v786 = vpop.f32.mrf.mxu0
      %v787 = vadd.f32 %v575, %v786
      %788 = vmatmul.f32.gmra.mxu0 %v674
      %v789 = vpop.f32.mrf.mxu0
      %v790 = vadd.f32 %v578, %v789
      %791 = vmatmul.f32.gmra.mxu0 %v677
      %v792 = vpop.f32.mrf.mxu0
      %v793 = vadd.f32 %v581, %v792
      %794 = vmatmul.f32.gmra.mxu0 %v680
      %v795 = vpop.f32.mrf.mxu0
      %v796 = vadd.f32 %v584, %v795
      %797 = vmatmul.f32.gmra.mxu0 %v683
      %v798 = vpop.f32.mrf.mxu0
      %v799 = vadd.f32 %v587, %v798
      %800 = vmatmul.f32.gmra.mxu0 %v686
      %v801 = vpop.f32.mrf.mxu0
      %v802 = vadd.f32 %v590, %v801
      %803 = vmatmul.f32.gmra.mxu0 %v689
      %v804 = vpop.f32.mrf.mxu0
      %v805 = vadd.f32 %v593, %v804
      %806 = vmatmul.f32.gmra.mxu0 %v692
      %v807 = vpop.f32.mrf.mxu0
      %v808 = vadd.f32 %v596, %v807
      %809 = vmatmul.f32.gmra.mxu0 %v695
      %v810 = vpop.f32.mrf.mxu0
      %v811 = vadd.f32 %v599, %v810
      %812 = vmatmul.f32.gmra.mxu0 %v698
      %v813 = vpop.f32.mrf.mxu0
      %v814 = vadd.f32 %v602, %v813
      %815 = vmatmul.f32.gmra.mxu0 %v701
      %v816 = vpop.f32.mrf.mxu0
      %v817 = vadd.f32 %v605, %v816
      %818 = vmatmul.f32.gmra.mxu0 %v704
      %v819 = vpop.f32.mrf.mxu0
      %v820 = vadd.f32 %v608, %v819
      %821 = vmatmul.f32.gmra.mxu0 %v707
      %v822 = vpop.f32.mrf.mxu0
      %v823 = vadd.f32 %v611, %v822
      %824 = vmatmul.f32.gmra.mxu0 %v710
      %v825 = vpop.f32.mrf.mxu0
      %v826 = vadd.f32 %v614, %v825
      %827 = vmatmul.f32.gmra.mxu0 %v713
      %v828 = vpop.f32.mrf.mxu0
      %v829 = vadd.f32 %v617, %v828
      %830 = vmatmul.f32.gmra.mxu0 %v716
      %v831 = vpop.f32.mrf.mxu0
      %v832 = vadd.f32 %v620, %v831
      %833 = vmatmul.f32.gmra.mxu0 %v719
      %v834 = vpop.f32.mrf.mxu0
      %v835 = vadd.f32 %v623, %v834
      %836 = vmatmul.f32.gmra.mxu0 %v722
      %v837 = vpop.f32.mrf.mxu0
      %v838 = vadd.f32 %v626, %v837
      %839 = vdwg.mxu0
      %v840 = vld [vmem:[#allocation2 + $0x2] sm:$0xff]
      %v841 = vld [vmem:[#allocation2 + $0xa] sm:$0xff]
      %v842 = vld [vmem:[#allocation2 + $0x1a] sm:$0xff]
      %v843 = vld [vmem:[#allocation2 + $0x22] sm:$0xff]
      %v844 = vld [vmem:[#allocation2 + $0x32] sm:$0xff]
      %v845 = vld [vmem:[#allocation2 + $0x3a] sm:$0xff]
      %v846 = vld [vmem:[#allocation2 + $0x4a] sm:$0xff]
      %v847 = vld [vmem:[#allocation2 + $0x52] sm:$0xff]
      %v848 = vld [vmem:[#allocation2 + $0x62] sm:$0xff]
      %v849 = vld [vmem:[#allocation2 + $0x6a] sm:$0xff]
      %v850 = vld [vmem:[#allocation2 + $0x7a] sm:$0xff]
      %v851 = vld [vmem:[#allocation2 + $0x82] sm:$0xff]
      %v852 = vld [vmem:[#allocation2 + $0x92] sm:$0xff]
      %v853 = vld [vmem:[#allocation2 + $0x9a] sm:$0xff]
      %v854 = vld [vmem:[#allocation2 + $0xaa] sm:$0xff]
      %v855 = vld [vmem:[#allocation2 + $0xb2] sm:$0xff]
      %v856 = vld [vmem:[#allocation2 + $0xc2] sm:$0xff]
      %v857 = vld [vmem:[#allocation2 + $0xca] sm:$0xff]
      %v858 = vld [vmem:[#allocation2 + $0xda] sm:$0xff]
      %v859 = vld [vmem:[#allocation2 + $0xe2] sm:$0xff]
      %v860 = vld [vmem:[#allocation2 + $0xf2] sm:$0xff]
      %v861 = vld [vmem:[#allocation2 + $0xfa] sm:$0xff]
      %v862 = vld [vmem:[#allocation2 + $0x10a] sm:$0xff]
      %v863 = vld [vmem:[#allocation2 + $0x112] sm:$0xff]
      %v864 = vld [vmem:[#allocation2 + $0x122] sm:$0xff]
      %v865 = vld [vmem:[#allocation2 + $0x12a] sm:$0xff]
      %v866 = vld [vmem:[#allocation2 + $0x13a] sm:$0xff]
      %v867 = vld [vmem:[#allocation2 + $0x142] sm:$0xff]
      %v868 = vld [vmem:[#allocation2 + $0x152] sm:$0xff]
      %v869 = vld [vmem:[#allocation2 + $0x15a] sm:$0xff]
      %v870 = vld [vmem:[#allocation2 + $0x16a] sm:$0xff]
      %v871 = vld [vmem:[#allocation2 + $0x172] sm:$0xff]
      %s872 = scalar_lea.vmem %s1, 8
      %v873 = vld [vmem:[%s872] sm:$0xf]
      %v875 = vsel %vm225, %v840, 0
      %v878 = vsel %vm225, %v841, 0
      %v881 = vsel %vm225, %v842, 0
      %v884 = vsel %vm225, %v843, 0
      %v887 = vsel %vm225, %v844, 0
      %v890 = vsel %vm225, %v845, 0
      %v893 = vsel %vm225, %v846, 0
      %v896 = vsel %vm225, %v847, 0
      %v899 = vsel %vm225, %v848, 0
      %v902 = vsel %vm225, %v849, 0
      %v905 = vsel %vm225, %v850, 0
      %v908 = vsel %vm225, %v851, 0
      %v911 = vsel %vm225, %v852, 0
      %v914 = vsel %vm225, %v853, 0
      %v917 = vsel %vm225, %v854, 0
      %v920 = vsel %vm225, %v855, 0
      %v923 = vsel %vm225, %v856, 0
      %v926 = vsel %vm225, %v857, 0
      %v929 = vsel %vm225, %v858, 0
      %v932 = vsel %vm225, %v859, 0
      %v935 = vsel %vm225, %v860, 0
      %v938 = vsel %vm225, %v861, 0
      %v941 = vsel %vm225, %v862, 0
      %v944 = vsel %vm225, %v863, 0
      %v947 = vsel %vm225, %v864, 0
      %v950 = vsel %vm225, %v865, 0
      %v953 = vsel %vm225, %v866, 0
      %v956 = vsel %vm225, %v867, 0
      %v959 = vsel %vm225, %v868, 0
      %v962 = vsel %vm225, %v869, 0
      %v965 = vsel %vm225, %v870, 0
      %v968 = vsel %vm225, %v871, 0
      %v971 = vsel %vm511, %v873, 0
      %973 = vmatpush.msra.mxu0 0.0
      %974 = vmatpush.msra.mxu0 0.0
      %975 = vmatpush.msra.mxu0 0.0
      %976 = vmatpush.msra.mxu0 0.0
      %977 = vmatpush.msra.mxu0 0.0
      %978 = vmatpush.msra.mxu0 0.0
      %979 = vmatpush.msra.mxu0 0.0
      %980 = vmatpush.msra.mxu0 0.0
      %981 = vmatpush.msra.mxu0 0.0
      %982 = vmatpush.msra.mxu0 0.0
      %983 = vmatpush.msra.mxu0 0.0
      %984 = vmatpush.msra.mxu0 0.0
      %985 = vmatpush.msra.mxu0 0.0
      %986 = vmatpush.msra.mxu0 0.0
      %987 = vmatpush.msra.mxu0 0.0
      %988 = vmatpush.msra.mxu0 %v971
      %989 = vmatmul.f32.gmra.mxu0 %v875
      %v990 = vpop.f32.mrf.mxu0
      %v991 = vadd.f32 0.0, %v990
      %992 = vmatmul.f32.gmra.mxu0 %v878
      %v993 = vpop.f32.mrf.mxu0
      %v994 = vadd.f32 0.0, %v993
      %995 = vmatmul.f32.gmra.mxu0 %v881
      %v996 = vpop.f32.mrf.mxu0
      %v997 = vadd.f32 0.0, %v996
      %998 = vmatmul.f32.gmra.mxu0 %v884
      %v999 = vpop.f32.mrf.mxu0
      %v1000 = vadd.f32 0.0, %v999
      %1001 = vmatmul.f32.gmra.mxu0 %v887
      %v1002 = vpop.f32.mrf.mxu0
      %v1003 = vadd.f32 0.0, %v1002
      %1004 = vmatmul.f32.gmra.mxu0 %v890
      %v1005 = vpop.f32.mrf.mxu0
      %v1006 = vadd.f32 0.0, %v1005
      %1007 = vmatmul.f32.gmra.mxu0 %v893
      %v1008 = vpop.f32.mrf.mxu0
      %v1009 = vadd.f32 0.0, %v1008
      %1010 = vmatmul.f32.gmra.mxu0 %v896
      %v1011 = vpop.f32.mrf.mxu0
      %v1012 = vadd.f32 0.0, %v1011
      %1013 = vmatmul.f32.gmra.mxu0 %v899
      %v1014 = vpop.f32.mrf.mxu0
      %v1015 = vadd.f32 0.0, %v1014
      %1016 = vmatmul.f32.gmra.mxu0 %v902
      %v1017 = vpop.f32.mrf.mxu0
      %v1018 = vadd.f32 0.0, %v1017
      %1019 = vmatmul.f32.gmra.mxu0 %v905
      %v1020 = vpop.f32.mrf.mxu0
      %v1021 = vadd.f32 0.0, %v1020
      %1022 = vmatmul.f32.gmra.mxu0 %v908
      %v1023 = vpop.f32.mrf.mxu0
      %v1024 = vadd.f32 0.0, %v1023
      %1025 = vmatmul.f32.gmra.mxu0 %v911
      %v1026 = vpop.f32.mrf.mxu0
      %v1027 = vadd.f32 0.0, %v1026
      %1028 = vmatmul.f32.gmra.mxu0 %v914
      %v1029 = vpop.f32.mrf.mxu0
      %v1030 = vadd.f32 0.0, %v1029
      %1031 = vmatmul.f32.gmra.mxu0 %v917
      %v1032 = vpop.f32.mrf.mxu0
      %v1033 = vadd.f32 0.0, %v1032
      %1034 = vmatmul.f32.gmra.mxu0 %v920
      %v1035 = vpop.f32.mrf.mxu0
      %v1036 = vadd.f32 0.0, %v1035
      %1037 = vmatmul.f32.gmra.mxu0 %v923
      %v1038 = vpop.f32.mrf.mxu0
      %v1039 = vadd.f32 0.0, %v1038
      %1040 = vmatmul.f32.gmra.mxu0 %v926
      %v1041 = vpop.f32.mrf.mxu0
      %v1042 = vadd.f32 0.0, %v1041
      %1043 = vmatmul.f32.gmra.mxu0 %v929
      %v1044 = vpop.f32.mrf.mxu0
      %v1045 = vadd.f32 0.0, %v1044
      %1046 = vmatmul.f32.gmra.mxu0 %v932
      %v1047 = vpop.f32.mrf.mxu0
      %v1048 = vadd.f32 0.0, %v1047
      %1049 = vmatmul.f32.gmra.mxu0 %v935
      %v1050 = vpop.f32.mrf.mxu0
      %v1051 = vadd.f32 0.0, %v1050
      %1052 = vmatmul.f32.gmra.mxu0 %v938
      %v1053 = vpop.f32.mrf.mxu0
      %v1054 = vadd.f32 0.0, %v1053
      %1055 = vmatmul.f32.gmra.mxu0 %v941
      %v1056 = vpop.f32.mrf.mxu0
      %v1057 = vadd.f32 0.0, %v1056
      %1058 = vmatmul.f32.gmra.mxu0 %v944
      %v1059 = vpop.f32.mrf.mxu0
      %v1060 = vadd.f32 0.0, %v1059
      %1061 = vmatmul.f32.gmra.mxu0 %v947
      %v1062 = vpop.f32.mrf.mxu0
      %v1063 = vadd.f32 0.0, %v1062
      %1064 = vmatmul.f32.gmra.mxu0 %v950
      %v1065 = vpop.f32.mrf.mxu0
      %v1066 = vadd.f32 0.0, %v1065
      %1067 = vmatmul.f32.gmra.mxu0 %v953
      %v1068 = vpop.f32.mrf.mxu0
      %v1069 = vadd.f32 0.0, %v1068
      %1070 = vmatmul.f32.gmra.mxu0 %v956
      %v1071 = vpop.f32.mrf.mxu0
      %v1072 = vadd.f32 0.0, %v1071
      %1073 = vmatmul.f32.gmra.mxu0 %v959
      %v1074 = vpop.f32.mrf.mxu0
      %v1075 = vadd.f32 0.0, %v1074
      %1076 = vmatmul.f32.gmra.mxu0 %v962
      %v1077 = vpop.f32.mrf.mxu0
      %v1078 = vadd.f32 0.0, %v1077
      %1079 = vmatmul.f32.gmra.mxu0 %v965
      %v1080 = vpop.f32.mrf.mxu0
      %v1081 = vadd.f32 0.0, %v1080
      %1082 = vmatmul.f32.gmra.mxu0 %v968
      %v1083 = vpop.f32.mrf.mxu0
      %v1084 = vadd.f32 0.0, %v1083
      %1085 = vdwg.mxu0
      %v1086 = vadd.f32 %v745, %v991
      %v1087 = vadd.f32 %v748, %v994
      %v1088 = vadd.f32 %v751, %v997
      %v1089 = vadd.f32 %v754, %v1000
      %v1090 = vadd.f32 %v757, %v1003
      %v1091 = vadd.f32 %v760, %v1006
      %v1092 = vadd.f32 %v763, %v1009
      %v1093 = vadd.f32 %v766, %v1012
      %v1094 = vadd.f32 %v769, %v1015
      %v1095 = vadd.f32 %v772, %v1018
      %v1096 = vadd.f32 %v775, %v1021
      %v1097 = vadd.f32 %v778, %v1024
      %v1098 = vadd.f32 %v781, %v1027
      %v1099 = vadd.f32 %v784, %v1030
      %v1100 = vadd.f32 %v787, %v1033
      %v1101 = vadd.f32 %v790, %v1036
      %v1102 = vadd.f32 %v793, %v1039
      %v1103 = vadd.f32 %v796, %v1042
      %v1104 = vadd.f32 %v799, %v1045
      %v1105 = vadd.f32 %v802, %v1048
      %v1106 = vadd.f32 %v805, %v1051
      %v1107 = vadd.f32 %v808, %v1054
      %v1108 = vadd.f32 %v811, %v1057
      %v1109 = vadd.f32 %v814, %v1060
      %v1110 = vadd.f32 %v817, %v1063
      %v1111 = vadd.f32 %v820, %v1066
      %v1112 = vadd.f32 %v823, %v1069
      %v1113 = vadd.f32 %v826, %v1072
      %v1114 = vadd.f32 %v829, %v1075
      %v1115 = vadd.f32 %v832, %v1078
      %v1116 = vadd.f32 %v835, %v1081
      %v1117 = vadd.f32 %v838, %v1084
      %v1118 = vld [vmem:[%s315] sm:$0xff]
      %v1119 = vld [vmem:[%s315 + $0x8] sm:$0xff]
      %v1120 = vld [vmem:[%s315 + $0x18] sm:$0xff]
      %v1121 = vld [vmem:[%s315 + $0x20] sm:$0xff]
      %v1122 = vld [vmem:[%s315 + $0x30] sm:$0xff]
      %v1123 = vld [vmem:[%s315 + $0x38] sm:$0xff]
      %v1124 = vld [vmem:[%s315 + $0x48] sm:$0xff]
      %v1125 = vld [vmem:[%s315 + $0x50] sm:$0xff]
      %v1126 = vld [vmem:[%s315 + $0x60] sm:$0xff]
      %v1127 = vld [vmem:[%s315 + $0x68] sm:$0xff]
      %v1128 = vld [vmem:[%s315 + $0x78] sm:$0xff]
      %v1129 = vld [vmem:[%s315 + $0x80] sm:$0xff]
      %v1130 = vld [vmem:[%s315 + $0x90] sm:$0xff]
      %v1131 = vld [vmem:[%s315 + $0x98] sm:$0xff]
      %v1132 = vld [vmem:[%s315 + $0xa8] sm:$0xff]
      %v1133 = vld [vmem:[%s315 + $0xb0] sm:$0xff]
      %v1134 = vld [vmem:[%s315 + $0xc0] sm:$0xff]
      %v1135 = vld [vmem:[%s315 + $0xc8] sm:$0xff]
      %v1136 = vld [vmem:[%s315 + $0xd8] sm:$0xff]
      %v1137 = vld [vmem:[%s315 + $0xe0] sm:$0xff]
      %v1138 = vld [vmem:[%s315 + $0xf0] sm:$0xff]
      %v1139 = vld [vmem:[%s315 + $0xf8] sm:$0xff]
      %v1140 = vld [vmem:[%s315 + $0x108] sm:$0xff]
      %v1141 = vld [vmem:[%s315 + $0x110] sm:$0xff]
      %v1142 = vld [vmem:[%s315 + $0x120] sm:$0xff]
      %v1143 = vld [vmem:[%s315 + $0x128] sm:$0xff]
      %v1144 = vld [vmem:[%s315 + $0x138] sm:$0xff]
      %v1145 = vld [vmem:[%s315 + $0x140] sm:$0xff]
      %v1146 = vld [vmem:[%s315 + $0x150] sm:$0xff]
      %v1147 = vld [vmem:[%s315 + $0x158] sm:$0xff]
      %v1148 = vld [vmem:[%s315 + $0x168] sm:$0xff]
      %v1149 = vld [vmem:[%s315 + $0x170] sm:$0xff]
      %s1150 = scalar_lea.vmem %s1, 12
      %v1151 = vld [vmem:[%s1150] sm:$0xf]
      %v1153 = vsel %vm225, %v1118, 0
      %v1156 = vsel %vm225, %v1119, 0
      %v1159 = vsel %vm225, %v1120, 0
      %v1162 = vsel %vm225, %v1121, 0
      %v1165 = vsel %vm225, %v1122, 0
      %v1168 = vsel %vm225, %v1123, 0
      %v1171 = vsel %vm225, %v1124, 0
      %v1174 = vsel %vm225, %v1125, 0
      %v1177 = vsel %vm225, %v1126, 0
      %v1180 = vsel %vm225, %v1127, 0
      %v1183 = vsel %vm225, %v1128, 0
      %v1186 = vsel %vm225, %v1129, 0
      %v1189 = vsel %vm225, %v1130, 0
      %v1192 = vsel %vm225, %v1131, 0
      %v1195 = vsel %vm225, %v1132, 0
      %v1198 = vsel %vm225, %v1133, 0
      %v1201 = vsel %vm225, %v1134, 0
      %v1204 = vsel %vm225, %v1135, 0
      %v1207 = vsel %vm225, %v1136, 0
      %v1210 = vsel %vm225, %v1137, 0
      %v1213 = vsel %vm225, %v1138, 0
      %v1216 = vsel %vm225, %v1139, 0
      %v1219 = vsel %vm225, %v1140, 0
      %v1222 = vsel %vm225, %v1141, 0
      %v1225 = vsel %vm225, %v1142, 0
      %v1228 = vsel %vm225, %v1143, 0
      %v1231 = vsel %vm225, %v1144, 0
      %v1234 = vsel %vm225, %v1145, 0
      %v1237 = vsel %vm225, %v1146, 0
      %v1240 = vsel %vm225, %v1147, 0
      %v1243 = vsel %vm225, %v1148, 0
      %v1246 = vsel %vm225, %v1149, 0
      %v1249 = vsel %vm511, %v1151, 0
      %1251 = vmatpush.msra.mxu0 0.0
      %1252 = vmatpush.msra.mxu0 0.0
      %1253 = vmatpush.msra.mxu0 0.0
      %1254 = vmatpush.msra.mxu0 0.0
      %1255 = vmatpush.msra.mxu0 0.0
      %1256 = vmatpush.msra.mxu0 0.0
      %1257 = vmatpush.msra.mxu0 0.0
      %1258 = vmatpush.msra.mxu0 0.0
      %1259 = vmatpush.msra.mxu0 0.0
      %1260 = vmatpush.msra.mxu0 0.0
      %1261 = vmatpush.msra.mxu0 0.0
      %1262 = vmatpush.msra.mxu0 0.0
      %1263 = vmatpush.msra.mxu0 0.0
      %1264 = vmatpush.msra.mxu0 0.0
      %1265 = vmatpush.msra.mxu0 0.0
      %1266 = vmatpush.msra.mxu0 %v1249
      %1267 = vmatmul.f32.gmra.mxu0 %v1153
      %v1268 = vpop.f32.mrf.mxu0
      %v1269 = vadd.f32 0.0, %v1268
      %1270 = vmatmul.f32.gmra.mxu0 %v1156
      %v1271 = vpop.f32.mrf.mxu0
      %v1272 = vadd.f32 0.0, %v1271
      %1273 = vmatmul.f32.gmra.mxu0 %v1159
      %v1274 = vpop.f32.mrf.mxu0
      %v1275 = vadd.f32 0.0, %v1274
      %1276 = vmatmul.f32.gmra.mxu0 %v1162
      %v1277 = vpop.f32.mrf.mxu0
      %v1278 = vadd.f32 0.0, %v1277
      %1279 = vmatmul.f32.gmra.mxu0 %v1165
      %v1280 = vpop.f32.mrf.mxu0
      %v1281 = vadd.f32 0.0, %v1280
      %1282 = vmatmul.f32.gmra.mxu0 %v1168
      %v1283 = vpop.f32.mrf.mxu0
      %v1284 = vadd.f32 0.0, %v1283
      %1285 = vmatmul.f32.gmra.mxu0 %v1171
      %v1286 = vpop.f32.mrf.mxu0
      %v1287 = vadd.f32 0.0, %v1286
      %1288 = vmatmul.f32.gmra.mxu0 %v1174
      %v1289 = vpop.f32.mrf.mxu0
      %v1290 = vadd.f32 0.0, %v1289
      %1291 = vmatmul.f32.gmra.mxu0 %v1177
      %v1292 = vpop.f32.mrf.mxu0
      %v1293 = vadd.f32 0.0, %v1292
      %1294 = vmatmul.f32.gmra.mxu0 %v1180
      %v1295 = vpop.f32.mrf.mxu0
      %v1296 = vadd.f32 0.0, %v1295
      %1297 = vmatmul.f32.gmra.mxu0 %v1183
      %v1298 = vpop.f32.mrf.mxu0
      %v1299 = vadd.f32 0.0, %v1298
      %1300 = vmatmul.f32.gmra.mxu0 %v1186
      %v1301 = vpop.f32.mrf.mxu0
      %v1302 = vadd.f32 0.0, %v1301
      %1303 = vmatmul.f32.gmra.mxu0 %v1189
      %v1304 = vpop.f32.mrf.mxu0
      %v1305 = vadd.f32 0.0, %v1304
      %1306 = vmatmul.f32.gmra.mxu0 %v1192
      %v1307 = vpop.f32.mrf.mxu0
      %v1308 = vadd.f32 0.0, %v1307
      %1309 = vmatmul.f32.gmra.mxu0 %v1195
      %v1310 = vpop.f32.mrf.mxu0
      %v1311 = vadd.f32 0.0, %v1310
      %1312 = vmatmul.f32.gmra.mxu0 %v1198
      %v1313 = vpop.f32.mrf.mxu0
      %v1314 = vadd.f32 0.0, %v1313
      %1315 = vmatmul.f32.gmra.mxu0 %v1201
      %v1316 = vpop.f32.mrf.mxu0
      %v1317 = vadd.f32 0.0, %v1316
      %1318 = vmatmul.f32.gmra.mxu0 %v1204
      %v1319 = vpop.f32.mrf.mxu0
      %v1320 = vadd.f32 0.0, %v1319
      %1321 = vmatmul.f32.gmra.mxu0 %v1207
      %v1322 = vpop.f32.mrf.mxu0
      %v1323 = vadd.f32 0.0, %v1322
      %1324 = vmatmul.f32.gmra.mxu0 %v1210
      %v1325 = vpop.f32.mrf.mxu0
      %v1326 = vadd.f32 0.0, %v1325
      %1327 = vmatmul.f32.gmra.mxu0 %v1213
      %v1328 = vpop.f32.mrf.mxu0
      %v1329 = vadd.f32 0.0, %v1328
      %1330 = vmatmul.f32.gmra.mxu0 %v1216
      %v1331 = vpop.f32.mrf.mxu0
      %v1332 = vadd.f32 0.0, %v1331
      %1333 = vmatmul.f32.gmra.mxu0 %v1219
      %v1334 = vpop.f32.mrf.mxu0
      %v1335 = vadd.f32 0.0, %v1334
      %1336 = vmatmul.f32.gmra.mxu0 %v1222
      %v1337 = vpop.f32.mrf.mxu0
      %v1338 = vadd.f32 0.0, %v1337
      %1339 = vmatmul.f32.gmra.mxu0 %v1225
      %v1340 = vpop.f32.mrf.mxu0
      %v1341 = vadd.f32 0.0, %v1340
      %1342 = vmatmul.f32.gmra.mxu0 %v1228
      %v1343 = vpop.f32.mrf.mxu0
      %v1344 = vadd.f32 0.0, %v1343
      %1345 = vmatmul.f32.gmra.mxu0 %v1231
      %v1346 = vpop.f32.mrf.mxu0
      %v1347 = vadd.f32 0.0, %v1346
      %1348 = vmatmul.f32.gmra.mxu0 %v1234
      %v1349 = vpop.f32.mrf.mxu0
      %v1350 = vadd.f32 0.0, %v1349
      %1351 = vmatmul.f32.gmra.mxu0 %v1237
      %v1352 = vpop.f32.mrf.mxu0
      %v1353 = vadd.f32 0.0, %v1352
      %1354 = vmatmul.f32.gmra.mxu0 %v1240
      %v1355 = vpop.f32.mrf.mxu0
      %v1356 = vadd.f32 0.0, %v1355
      %1357 = vmatmul.f32.gmra.mxu0 %v1243
      %v1358 = vpop.f32.mrf.mxu0
      %v1359 = vadd.f32 0.0, %v1358
      %1360 = vmatmul.f32.gmra.mxu0 %v1246
      %v1361 = vpop.f32.mrf.mxu0
      %v1362 = vadd.f32 0.0, %v1361
      %1363 = vdwg.mxu0
      %v1364 = vadd.f32 %v1086, %v1269
      %v1365 = vadd.f32 %v1087, %v1272
      %v1366 = vadd.f32 %v1088, %v1275
      %v1367 = vadd.f32 %v1089, %v1278
      %v1368 = vadd.f32 %v1090, %v1281
      %v1369 = vadd.f32 %v1091, %v1284
      %v1370 = vadd.f32 %v1092, %v1287
      %v1371 = vadd.f32 %v1093, %v1290
      %v1372 = vadd.f32 %v1094, %v1293
      %v1373 = vadd.f32 %v1095, %v1296
      %v1374 = vadd.f32 %v1096, %v1299
      %v1375 = vadd.f32 %v1097, %v1302
      %v1376 = vadd.f32 %v1098, %v1305
      %v1377 = vadd.f32 %v1099, %v1308
      %v1378 = vadd.f32 %v1100, %v1311
      %v1379 = vadd.f32 %v1101, %v1314
      %v1380 = vadd.f32 %v1102, %v1317
      %v1381 = vadd.f32 %v1103, %v1320
      %v1382 = vadd.f32 %v1104, %v1323
      %v1383 = vadd.f32 %v1105, %v1326
      %v1384 = vadd.f32 %v1106, %v1329
      %v1385 = vadd.f32 %v1107, %v1332
      %v1386 = vadd.f32 %v1108, %v1335
      %v1387 = vadd.f32 %v1109, %v1338
      %v1388 = vadd.f32 %v1110, %v1341
      %v1389 = vadd.f32 %v1111, %v1344
      %v1390 = vadd.f32 %v1112, %v1347
      %v1391 = vadd.f32 %v1113, %v1350
      %v1392 = vadd.f32 %v1114, %v1353
      %v1393 = vadd.f32 %v1115, %v1356
      %v1394 = vadd.f32 %v1116, %v1359
      %v1395 = vadd.f32 %v1117, %v1362
      %v1396 = vld [vmem:[%s315 + $0x1] sm:$0xff]
      %v1397 = vld [vmem:[%s315 + $0x9] sm:$0xff]
      %v1398 = vld [vmem:[%s315 + $0x19] sm:$0xff]
      %v1399 = vld [vmem:[%s315 + $0x21] sm:$0xff]
      %v1400 = vld [vmem:[%s315 + $0x31] sm:$0xff]
      %v1401 = vld [vmem:[%s315 + $0x39] sm:$0xff]
      %v1402 = vld [vmem:[%s315 + $0x49] sm:$0xff]
      %v1403 = vld [vmem:[%s315 + $0x51] sm:$0xff]
      %v1404 = vld [vmem:[%s315 + $0x61] sm:$0xff]
      %v1405 = vld [vmem:[%s315 + $0x69] sm:$0xff]
      %v1406 = vld [vmem:[%s315 + $0x79] sm:$0xff]
      %v1407 = vld [vmem:[%s315 + $0x81] sm:$0xff]
      %v1408 = vld [vmem:[%s315 + $0x91] sm:$0xff]
      %v1409 = vld [vmem:[%s315 + $0x99] sm:$0xff]
      %v1410 = vld [vmem:[%s315 + $0xa9] sm:$0xff]
      %v1411 = vld [vmem:[%s315 + $0xb1] sm:$0xff]
      %v1412 = vld [vmem:[%s315 + $0xc1] sm:$0xff]
      %v1413 = vld [vmem:[%s315 + $0xc9] sm:$0xff]
      %v1414 = vld [vmem:[%s315 + $0xd9] sm:$0xff]
      %v1415 = vld [vmem:[%s315 + $0xe1] sm:$0xff]
      %v1416 = vld [vmem:[%s315 + $0xf1] sm:$0xff]
      %v1417 = vld [vmem:[%s315 + $0xf9] sm:$0xff]
      %v1418 = vld [vmem:[%s315 + $0x109] sm:$0xff]
      %v1419 = vld [vmem:[%s315 + $0x111] sm:$0xff]
      %v1420 = vld [vmem:[%s315 + $0x121] sm:$0xff]
      %v1421 = vld [vmem:[%s315 + $0x129] sm:$0xff]
      %v1422 = vld [vmem:[%s315 + $0x139] sm:$0xff]
      %v1423 = vld [vmem:[%s315 + $0x141] sm:$0xff]
      %v1424 = vld [vmem:[%s315 + $0x151] sm:$0xff]
      %v1425 = vld [vmem:[%s315 + $0x159] sm:$0xff]
      %v1426 = vld [vmem:[%s315 + $0x169] sm:$0xff]
      %v1427 = vld [vmem:[%s315 + $0x171] sm:$0xff]
      %s1428 = scalar_lea.vmem %s1, 16
      %v1429 = vld [vmem:[%s1428] sm:$0xf]
      %v1431 = vsel %vm225, %v1396, 0
      %v1434 = vsel %vm225, %v1397, 0
      %v1437 = vsel %vm225, %v1398, 0
      %v1440 = vsel %vm225, %v1399, 0
      %v1443 = vsel %vm225, %v1400, 0
      %v1446 = vsel %vm225, %v1401, 0
      %v1449 = vsel %vm225, %v1402, 0
      %v1452 = vsel %vm225, %v1403, 0
      %v1455 = vsel %vm225, %v1404, 0
      %v1458 = vsel %vm225, %v1405, 0
      %v1461 = vsel %vm225, %v1406, 0
      %v1464 = vsel %vm225, %v1407, 0
      %v1467 = vsel %vm225, %v1408, 0
      %v1470 = vsel %vm225, %v1409, 0
      %v1473 = vsel %vm225, %v1410, 0
      %v1476 = vsel %vm225, %v1411, 0
      %v1479 = vsel %vm225, %v1412, 0
      %v1482 = vsel %vm225, %v1413, 0
      %v1485 = vsel %vm225, %v1414, 0
      %v1488 = vsel %vm225, %v1415, 0
      %v1491 = vsel %vm225, %v1416, 0
      %v1494 = vsel %vm225, %v1417, 0
      %v1497 = vsel %vm225, %v1418, 0
      %v1500 = vsel %vm225, %v1419, 0
      %v1503 = vsel %vm225, %v1420, 0
      %v1506 = vsel %vm225, %v1421, 0
      %v1509 = vsel %vm225, %v1422, 0
      %v1512 = vsel %vm225, %v1423, 0
      %v1515 = vsel %vm225, %v1424, 0
      %v1518 = vsel %vm225, %v1425, 0
      %v1521 = vsel %vm225, %v1426, 0
      %v1524 = vsel %vm225, %v1427, 0
      %v1527 = vsel %vm511, %v1429, 0
      %1529 = vmatpush.msra.mxu0 0.0
      %1530 = vmatpush.msra.mxu0 0.0
      %1531 = vmatpush.msra.mxu0 0.0
      %1532 = vmatpush.msra.mxu0 0.0
      %1533 = vmatpush.msra.mxu0 0.0
      %1534 = vmatpush.msra.mxu0 0.0
      %1535 = vmatpush.msra.mxu0 0.0
      %1536 = vmatpush.msra.mxu0 0.0
      %1537 = vmatpush.msra.mxu0 0.0
      %1538 = vmatpush.msra.mxu0 0.0
      %1539 = vmatpush.msra.mxu0 0.0
      %1540 = vmatpush.msra.mxu0 0.0
      %1541 = vmatpush.msra.mxu0 0.0
      %1542 = vmatpush.msra.mxu0 0.0
      %1543 = vmatpush.msra.mxu0 0.0
      %1544 = vmatpush.msra.mxu0 %v1527
      %1545 = vmatmul.f32.gmra.mxu0 %v1431
      %v1546 = vpop.f32.mrf.mxu0
      %v1547 = vadd.f32 0.0, %v1546
      %1548 = vmatmul.f32.gmra.mxu0 %v1434
      %v1549 = vpop.f32.mrf.mxu0
      %v1550 = vadd.f32 0.0, %v1549
      %1551 = vmatmul.f32.gmra.mxu0 %v1437
      %v1552 = vpop.f32.mrf.mxu0
      %v1553 = vadd.f32 0.0, %v1552
      %1554 = vmatmul.f32.gmra.mxu0 %v1440
      %v1555 = vpop.f32.mrf.mxu0
      %v1556 = vadd.f32 0.0, %v1555
      %1557 = vmatmul.f32.gmra.mxu0 %v1443
      %v1558 = vpop.f32.mrf.mxu0
      %v1559 = vadd.f32 0.0, %v1558
      %1560 = vmatmul.f32.gmra.mxu0 %v1446
      %v1561 = vpop.f32.mrf.mxu0
      %v1562 = vadd.f32 0.0, %v1561
      %1563 = vmatmul.f32.gmra.mxu0 %v1449
      %v1564 = vpop.f32.mrf.mxu0
      %v1565 = vadd.f32 0.0, %v1564
      %1566 = vmatmul.f32.gmra.mxu0 %v1452
      %v1567 = vpop.f32.mrf.mxu0
      %v1568 = vadd.f32 0.0, %v1567
      %1569 = vmatmul.f32.gmra.mxu0 %v1455
      %v1570 = vpop.f32.mrf.mxu0
      %v1571 = vadd.f32 0.0, %v1570
      %1572 = vmatmul.f32.gmra.mxu0 %v1458
      %v1573 = vpop.f32.mrf.mxu0
      %v1574 = vadd.f32 0.0, %v1573
      %1575 = vmatmul.f32.gmra.mxu0 %v1461
      %v1576 = vpop.f32.mrf.mxu0
      %v1577 = vadd.f32 0.0, %v1576
      %1578 = vmatmul.f32.gmra.mxu0 %v1464
      %v1579 = vpop.f32.mrf.mxu0
      %v1580 = vadd.f32 0.0, %v1579
      %1581 = vmatmul.f32.gmra.mxu0 %v1467
      %v1582 = vpop.f32.mrf.mxu0
      %v1583 = vadd.f32 0.0, %v1582
      %1584 = vmatmul.f32.gmra.mxu0 %v1470
      %v1585 = vpop.f32.mrf.mxu0
      %v1586 = vadd.f32 0.0, %v1585
      %1587 = vmatmul.f32.gmra.mxu0 %v1473
      %v1588 = vpop.f32.mrf.mxu0
      %v1589 = vadd.f32 0.0, %v1588
      %1590 = vmatmul.f32.gmra.mxu0 %v1476
      %v1591 = vpop.f32.mrf.mxu0
      %v1592 = vadd.f32 0.0, %v1591
      %1593 = vmatmul.f32.gmra.mxu0 %v1479
      %v1594 = vpop.f32.mrf.mxu0
      %v1595 = vadd.f32 0.0, %v1594
      %1596 = vmatmul.f32.gmra.mxu0 %v1482
      %v1597 = vpop.f32.mrf.mxu0
      %v1598 = vadd.f32 0.0, %v1597
      %1599 = vmatmul.f32.gmra.mxu0 %v1485
      %v1600 = vpop.f32.mrf.mxu0
      %v1601 = vadd.f32 0.0, %v1600
      %1602 = vmatmul.f32.gmra.mxu0 %v1488
      %v1603 = vpop.f32.mrf.mxu0
      %v1604 = vadd.f32 0.0, %v1603
      %1605 = vmatmul.f32.gmra.mxu0 %v1491
      %v1606 = vpop.f32.mrf.mxu0
      %v1607 = vadd.f32 0.0, %v1606
      %1608 = vmatmul.f32.gmra.mxu0 %v1494
      %v1609 = vpop.f32.mrf.mxu0
      %v1610 = vadd.f32 0.0, %v1609
      %1611 = vmatmul.f32.gmra.mxu0 %v1497
      %v1612 = vpop.f32.mrf.mxu0
      %v1613 = vadd.f32 0.0, %v1612
      %1614 = vmatmul.f32.gmra.mxu0 %v1500
      %v1615 = vpop.f32.mrf.mxu0
      %v1616 = vadd.f32 0.0, %v1615
      %1617 = vmatmul.f32.gmra.mxu0 %v1503
      %v1618 = vpop.f32.mrf.mxu0
      %v1619 = vadd.f32 0.0, %v1618
      %1620 = vmatmul.f32.gmra.mxu0 %v1506
      %v1621 = vpop.f32.mrf.mxu0
      %v1622 = vadd.f32 0.0, %v1621
      %1623 = vmatmul.f32.gmra.mxu0 %v1509
      %v1624 = vpop.f32.mrf.mxu0
      %v1625 = vadd.f32 0.0, %v1624
      %1626 = vmatmul.f32.gmra.mxu0 %v1512
      %v1627 = vpop.f32.mrf.mxu0
      %v1628 = vadd.f32 0.0, %v1627
      %1629 = vmatmul.f32.gmra.mxu0 %v1515
      %v1630 = vpop.f32.mrf.mxu0
      %v1631 = vadd.f32 0.0, %v1630
      %1632 = vmatmul.f32.gmra.mxu0 %v1518
      %v1633 = vpop.f32.mrf.mxu0
      %v1634 = vadd.f32 0.0, %v1633
      %1635 = vmatmul.f32.gmra.mxu0 %v1521
      %v1636 = vpop.f32.mrf.mxu0
      %v1637 = vadd.f32 0.0, %v1636
      %1638 = vmatmul.f32.gmra.mxu0 %v1524
      %v1639 = vpop.f32.mrf.mxu0
      %v1640 = vadd.f32 0.0, %v1639
      %1641 = vdwg.mxu0
      %v1642 = vadd.f32 %v1364, %v1547
      %v1643 = vadd.f32 %v1365, %v1550
      %v1644 = vadd.f32 %v1366, %v1553
      %v1645 = vadd.f32 %v1367, %v1556
      %v1646 = vadd.f32 %v1368, %v1559
      %v1647 = vadd.f32 %v1369, %v1562
      %v1648 = vadd.f32 %v1370, %v1565
      %v1649 = vadd.f32 %v1371, %v1568
      %v1650 = vadd.f32 %v1372, %v1571
      %v1651 = vadd.f32 %v1373, %v1574
      %v1652 = vadd.f32 %v1374, %v1577
      %v1653 = vadd.f32 %v1375, %v1580
      %v1654 = vadd.f32 %v1376, %v1583
      %v1655 = vadd.f32 %v1377, %v1586
      %v1656 = vadd.f32 %v1378, %v1589
      %v1657 = vadd.f32 %v1379, %v1592
      %v1658 = vadd.f32 %v1380, %v1595
      %v1659 = vadd.f32 %v1381, %v1598
      %v1660 = vadd.f32 %v1382, %v1601
      %v1661 = vadd.f32 %v1383, %v1604
      %v1662 = vadd.f32 %v1384, %v1607
      %v1663 = vadd.f32 %v1385, %v1610
      %v1664 = vadd.f32 %v1386, %v1613
      %v1665 = vadd.f32 %v1387, %v1616
      %v1666 = vadd.f32 %v1388, %v1619
      %v1667 = vadd.f32 %v1389, %v1622
      %v1668 = vadd.f32 %v1390, %v1625
      %v1669 = vadd.f32 %v1391, %v1628
      %v1670 = vadd.f32 %v1392, %v1631
      %v1671 = vadd.f32 %v1393, %v1634
      %v1672 = vadd.f32 %v1394, %v1637
      %v1673 = vadd.f32 %v1395, %v1640
      %v1674 = vld [vmem:[%s315 + $0x2] sm:$0xff]
      %v1675 = vld [vmem:[%s315 + $0xa] sm:$0xff]
      %v1676 = vld [vmem:[%s315 + $0x1a] sm:$0xff]
      %v1677 = vld [vmem:[%s315 + $0x22] sm:$0xff]
      %v1678 = vld [vmem:[%s315 + $0x32] sm:$0xff]
      %v1679 = vld [vmem:[%s315 + $0x3a] sm:$0xff]
      %v1680 = vld [vmem:[%s315 + $0x4a] sm:$0xff]
      %v1681 = vld [vmem:[%s315 + $0x52] sm:$0xff]
      %v1682 = vld [vmem:[%s315 + $0x62] sm:$0xff]
      %v1683 = vld [vmem:[%s315 + $0x6a] sm:$0xff]
      %v1684 = vld [vmem:[%s315 + $0x7a] sm:$0xff]
      %v1685 = vld [vmem:[%s315 + $0x82] sm:$0xff]
      %v1686 = vld [vmem:[%s315 + $0x92] sm:$0xff]
      %v1687 = vld [vmem:[%s315 + $0x9a] sm:$0xff]
      %v1688 = vld [vmem:[%s315 + $0xaa] sm:$0xff]
      %v1689 = vld [vmem:[%s315 + $0xb2] sm:$0xff]
      %v1690 = vld [vmem:[%s315 + $0xc2] sm:$0xff]
      %v1691 = vld [vmem:[%s315 + $0xca] sm:$0xff]
      %v1692 = vld [vmem:[%s315 + $0xda] sm:$0xff]
      %v1693 = vld [vmem:[%s315 + $0xe2] sm:$0xff]
      %v1694 = vld [vmem:[%s315 + $0xf2] sm:$0xff]
      %v1695 = vld [vmem:[%s315 + $0xfa] sm:$0xff]
      %v1696 = vld [vmem:[%s315 + $0x10a] sm:$0xff]
      %v1697 = vld [vmem:[%s315 + $0x112] sm:$0xff]
      %v1698 = vld [vmem:[%s315 + $0x122] sm:$0xff]
      %v1699 = vld [vmem:[%s315 + $0x12a] sm:$0xff]
      %v1700 = vld [vmem:[%s315 + $0x13a] sm:$0xff]
      %v1701 = vld [vmem:[%s315 + $0x142] sm:$0xff]
      %v1702 = vld [vmem:[%s315 + $0x152] sm:$0xff]
      %v1703 = vld [vmem:[%s315 + $0x15a] sm:$0xff]
      %v1704 = vld [vmem:[%s315 + $0x16a] sm:$0xff]
      %v1705 = vld [vmem:[%s315 + $0x172] sm:$0xff]
      %s1706 = scalar_lea.vmem %s1, 20
      %v1707 = vld [vmem:[%s1706] sm:$0xf]
      %v1709 = vsel %vm225, %v1674, 0
      %v1712 = vsel %vm225, %v1675, 0
      %v1715 = vsel %vm225, %v1676, 0
      %v1718 = vsel %vm225, %v1677, 0
      %v1721 = vsel %vm225, %v1678, 0
      %v1724 = vsel %vm225, %v1679, 0
      %v1727 = vsel %vm225, %v1680, 0
      %v1730 = vsel %vm225, %v1681, 0
      %v1733 = vsel %vm225, %v1682, 0
      %v1736 = vsel %vm225, %v1683, 0
      %v1739 = vsel %vm225, %v1684, 0
      %v1742 = vsel %vm225, %v1685, 0
      %v1745 = vsel %vm225, %v1686, 0
      %v1748 = vsel %vm225, %v1687, 0
      %v1751 = vsel %vm225, %v1688, 0
      %v1754 = vsel %vm225, %v1689, 0
      %v1757 = vsel %vm225, %v1690, 0
      %v1760 = vsel %vm225, %v1691, 0
      %v1763 = vsel %vm225, %v1692, 0
      %v1766 = vsel %vm225, %v1693, 0
      %v1769 = vsel %vm225, %v1694, 0
      %v1772 = vsel %vm225, %v1695, 0
      %v1775 = vsel %vm225, %v1696, 0
      %v1778 = vsel %vm225, %v1697, 0
      %v1781 = vsel %vm225, %v1698, 0
      %v1784 = vsel %vm225, %v1699, 0
      %v1787 = vsel %vm225, %v1700, 0
      %v1790 = vsel %vm225, %v1701, 0
      %v1793 = vsel %vm225, %v1702, 0
      %v1796 = vsel %vm225, %v1703, 0
      %v1799 = vsel %vm225, %v1704, 0
      %v1802 = vsel %vm225, %v1705, 0
      %v1805 = vsel %vm511, %v1707, 0
      %1807 = vmatpush.msra.mxu0 0.0
      %1808 = vmatpush.msra.mxu0 0.0
      %1809 = vmatpush.msra.mxu0 0.0
      %1810 = vmatpush.msra.mxu0 0.0
      %1811 = vmatpush.msra.mxu0 0.0
      %1812 = vmatpush.msra.mxu0 0.0
      %1813 = vmatpush.msra.mxu0 0.0
      %1814 = vmatpush.msra.mxu0 0.0
      %1815 = vmatpush.msra.mxu0 0.0
      %1816 = vmatpush.msra.mxu0 0.0
      %1817 = vmatpush.msra.mxu0 0.0
      %1818 = vmatpush.msra.mxu0 0.0
      %1819 = vmatpush.msra.mxu0 0.0
      %1820 = vmatpush.msra.mxu0 0.0
      %1821 = vmatpush.msra.mxu0 0.0
      %1822 = vmatpush.msra.mxu0 %v1805
      %1823 = vmatmul.f32.gmra.mxu0 %v1709
      %v1824 = vpop.f32.mrf.mxu0
      %v1825 = vadd.f32 0.0, %v1824
      %1826 = vmatmul.f32.gmra.mxu0 %v1712
      %v1827 = vpop.f32.mrf.mxu0
      %v1828 = vadd.f32 0.0, %v1827
      %1829 = vmatmul.f32.gmra.mxu0 %v1715
      %v1830 = vpop.f32.mrf.mxu0
      %v1831 = vadd.f32 0.0, %v1830
      %1832 = vmatmul.f32.gmra.mxu0 %v1718
      %v1833 = vpop.f32.mrf.mxu0
      %v1834 = vadd.f32 0.0, %v1833
      %1835 = vmatmul.f32.gmra.mxu0 %v1721
      %v1836 = vpop.f32.mrf.mxu0
      %v1837 = vadd.f32 0.0, %v1836
      %1838 = vmatmul.f32.gmra.mxu0 %v1724
      %v1839 = vpop.f32.mrf.mxu0
      %v1840 = vadd.f32 0.0, %v1839
      %1841 = vmatmul.f32.gmra.mxu0 %v1727
      %v1842 = vpop.f32.mrf.mxu0
      %v1843 = vadd.f32 0.0, %v1842
      %1844 = vmatmul.f32.gmra.mxu0 %v1730
      %v1845 = vpop.f32.mrf.mxu0
      %v1846 = vadd.f32 0.0, %v1845
      %1847 = vmatmul.f32.gmra.mxu0 %v1733
      %v1848 = vpop.f32.mrf.mxu0
      %v1849 = vadd.f32 0.0, %v1848
      %1850 = vmatmul.f32.gmra.mxu0 %v1736
      %v1851 = vpop.f32.mrf.mxu0
      %v1852 = vadd.f32 0.0, %v1851
      %1853 = vmatmul.f32.gmra.mxu0 %v1739
      %v1854 = vpop.f32.mrf.mxu0
      %v1855 = vadd.f32 0.0, %v1854
      %1856 = vmatmul.f32.gmra.mxu0 %v1742
      %v1857 = vpop.f32.mrf.mxu0
      %v1858 = vadd.f32 0.0, %v1857
      %1859 = vmatmul.f32.gmra.mxu0 %v1745
      %v1860 = vpop.f32.mrf.mxu0
      %v1861 = vadd.f32 0.0, %v1860
      %1862 = vmatmul.f32.gmra.mxu0 %v1748
      %v1863 = vpop.f32.mrf.mxu0
      %v1864 = vadd.f32 0.0, %v1863
      %1865 = vmatmul.f32.gmra.mxu0 %v1751
      %v1866 = vpop.f32.mrf.mxu0
      %v1867 = vadd.f32 0.0, %v1866
      %1868 = vmatmul.f32.gmra.mxu0 %v1754
      %v1869 = vpop.f32.mrf.mxu0
      %v1870 = vadd.f32 0.0, %v1869
      %1871 = vmatmul.f32.gmra.mxu0 %v1757
      %v1872 = vpop.f32.mrf.mxu0
      %v1873 = vadd.f32 0.0, %v1872
      %1874 = vmatmul.f32.gmra.mxu0 %v1760
      %v1875 = vpop.f32.mrf.mxu0
      %v1876 = vadd.f32 0.0, %v1875
      %1877 = vmatmul.f32.gmra.mxu0 %v1763
      %v1878 = vpop.f32.mrf.mxu0
      %v1879 = vadd.f32 0.0, %v1878
      %1880 = vmatmul.f32.gmra.mxu0 %v1766
      %v1881 = vpop.f32.mrf.mxu0
      %v1882 = vadd.f32 0.0, %v1881
      %1883 = vmatmul.f32.gmra.mxu0 %v1769
      %v1884 = vpop.f32.mrf.mxu0
      %v1885 = vadd.f32 0.0, %v1884
      %1886 = vmatmul.f32.gmra.mxu0 %v1772
      %v1887 = vpop.f32.mrf.mxu0
      %v1888 = vadd.f32 0.0, %v1887
      %1889 = vmatmul.f32.gmra.mxu0 %v1775
      %v1890 = vpop.f32.mrf.mxu0
      %v1891 = vadd.f32 0.0, %v1890
      %1892 = vmatmul.f32.gmra.mxu0 %v1778
      %v1893 = vpop.f32.mrf.mxu0
      %v1894 = vadd.f32 0.0, %v1893
      %1895 = vmatmul.f32.gmra.mxu0 %v1781
      %v1896 = vpop.f32.mrf.mxu0
      %v1897 = vadd.f32 0.0, %v1896
      %1898 = vmatmul.f32.gmra.mxu0 %v1784
      %v1899 = vpop.f32.mrf.mxu0
      %v1900 = vadd.f32 0.0, %v1899
      %1901 = vmatmul.f32.gmra.mxu0 %v1787
      %v1902 = vpop.f32.mrf.mxu0
      %v1903 = vadd.f32 0.0, %v1902
      %1904 = vmatmul.f32.gmra.mxu0 %v1790
      %v1905 = vpop.f32.mrf.mxu0
      %v1906 = vadd.f32 0.0, %v1905
      %1907 = vmatmul.f32.gmra.mxu0 %v1793
      %v1908 = vpop.f32.mrf.mxu0
      %v1909 = vadd.f32 0.0, %v1908
      %1910 = vmatmul.f32.gmra.mxu0 %v1796
      %v1911 = vpop.f32.mrf.mxu0
      %v1912 = vadd.f32 0.0, %v1911
      %1913 = vmatmul.f32.gmra.mxu0 %v1799
      %v1914 = vpop.f32.mrf.mxu0
      %v1915 = vadd.f32 0.0, %v1914
      %1916 = vmatmul.f32.gmra.mxu0 %v1802
      %v1917 = vpop.f32.mrf.mxu0
      %v1918 = vadd.f32 0.0, %v1917
      %1919 = vdwg.mxu0
      %v1920 = vadd.f32 %v1642, %v1825
      %v1921 = vadd.f32 %v1643, %v1828
      %v1922 = vadd.f32 %v1644, %v1831
      %v1923 = vadd.f32 %v1645, %v1834
      %v1924 = vadd.f32 %v1646, %v1837
      %v1925 = vadd.f32 %v1647, %v1840
      %v1926 = vadd.f32 %v1648, %v1843
      %v1927 = vadd.f32 %v1649, %v1846
      %v1928 = vadd.f32 %v1650, %v1849
      %v1929 = vadd.f32 %v1651, %v1852
      %v1930 = vadd.f32 %v1652, %v1855
      %v1931 = vadd.f32 %v1653, %v1858
      %v1932 = vadd.f32 %v1654, %v1861
      %v1933 = vadd.f32 %v1655, %v1864
      %v1934 = vadd.f32 %v1656, %v1867
      %v1935 = vadd.f32 %v1657, %v1870
      %v1936 = vadd.f32 %v1658, %v1873
      %v1937 = vadd.f32 %v1659, %v1876
      %v1938 = vadd.f32 %v1660, %v1879
      %v1939 = vadd.f32 %v1661, %v1882
      %v1940 = vadd.f32 %v1662, %v1885
      %v1941 = vadd.f32 %v1663, %v1888
      %v1942 = vadd.f32 %v1664, %v1891
      %v1943 = vadd.f32 %v1665, %v1894
      %v1944 = vadd.f32 %v1666, %v1897
      %v1945 = vadd.f32 %v1667, %v1900
      %v1946 = vadd.f32 %v1668, %v1903
      %v1947 = vadd.f32 %v1669, %v1906
      %v1948 = vadd.f32 %v1670, %v1909
      %v1949 = vadd.f32 %v1671, %v1912
      %v1950 = vadd.f32 %v1672, %v1915
      %v1951 = vadd.f32 %v1673, %v1918
      %s1952 = scalar_lea.vmem [#allocation2], 48
      %v1953 = vld [vmem:[%s1952] sm:$0xff]
      %v1954 = vld [vmem:[%s1952 + $0x8] sm:$0xff]
      %v1955 = vld [vmem:[%s1952 + $0x18] sm:$0xff]
      %v1956 = vld [vmem:[%s1952 + $0x20] sm:$0xff]
      %v1957 = vld [vmem:[%s1952 + $0x30] sm:$0xff]
      %v1958 = vld [vmem:[%s1952 + $0x38] sm:$0xff]
      %v1959 = vld [vmem:[%s1952 + $0x48] sm:$0xff]
      %v1960 = vld [vmem:[%s1952 + $0x50] sm:$0xff]
      %v1961 = vld [vmem:[%s1952 + $0x60] sm:$0xff]
      %v1962 = vld [vmem:[%s1952 + $0x68] sm:$0xff]
      %v1963 = vld [vmem:[%s1952 + $0x78] sm:$0xff]
      %v1964 = vld [vmem:[%s1952 + $0x80] sm:$0xff]
      %v1965 = vld [vmem:[%s1952 + $0x90] sm:$0xff]
      %v1966 = vld [vmem:[%s1952 + $0x98] sm:$0xff]
      %v1967 = vld [vmem:[%s1952 + $0xa8] sm:$0xff]
      %v1968 = vld [vmem:[%s1952 + $0xb0] sm:$0xff]
      %v1969 = vld [vmem:[%s1952 + $0xc0] sm:$0xff]
      %v1970 = vld [vmem:[%s1952 + $0xc8] sm:$0xff]
      %v1971 = vld [vmem:[%s1952 + $0xd8] sm:$0xff]
      %v1972 = vld [vmem:[%s1952 + $0xe0] sm:$0xff]
      %v1973 = vld [vmem:[%s1952 + $0xf0] sm:$0xff]
      %v1974 = vld [vmem:[%s1952 + $0xf8] sm:$0xff]
      %v1975 = vld [vmem:[%s1952 + $0x108] sm:$0xff]
      %v1976 = vld [vmem:[%s1952 + $0x110] sm:$0xff]
      %v1977 = vld [vmem:[%s1952 + $0x120] sm:$0xff]
      %v1978 = vld [vmem:[%s1952 + $0x128] sm:$0xff]
      %v1979 = vld [vmem:[%s1952 + $0x138] sm:$0xff]
      %v1980 = vld [vmem:[%s1952 + $0x140] sm:$0xff]
      %v1981 = vld [vmem:[%s1952 + $0x150] sm:$0xff]
      %v1982 = vld [vmem:[%s1952 + $0x158] sm:$0xff]
      %v1983 = vld [vmem:[%s1952 + $0x168] sm:$0xff]
      %v1984 = vld [vmem:[%s1952 + $0x170] sm:$0xff]
      %s1985 = scalar_lea.vmem %s1, 24
      %v1986 = vld [vmem:[%s1985] sm:$0xf]
      %v1988 = vsel %vm225, %v1953, 0
      %v1991 = vsel %vm225, %v1954, 0
      %v1994 = vsel %vm225, %v1955, 0
      %v1997 = vsel %vm225, %v1956, 0
      %v2000 = vsel %vm225, %v1957, 0
      %v2003 = vsel %vm225, %v1958, 0
      %v2006 = vsel %vm225, %v1959, 0
      %v2009 = vsel %vm225, %v1960, 0
      %v2012 = vsel %vm225, %v1961, 0
      %v2015 = vsel %vm225, %v1962, 0
      %v2018 = vsel %vm225, %v1963, 0
      %v2021 = vsel %vm225, %v1964, 0
      %v2024 = vsel %vm225, %v1965, 0
      %v2027 = vsel %vm225, %v1966, 0
      %v2030 = vsel %vm225, %v1967, 0
      %v2033 = vsel %vm225, %v1968, 0
      %v2036 = vsel %vm225, %v1969, 0
      %v2039 = vsel %vm225, %v1970, 0
      %v2042 = vsel %vm225, %v1971, 0
      %v2045 = vsel %vm225, %v1972, 0
      %v2048 = vsel %vm225, %v1973, 0
      %v2051 = vsel %vm225, %v1974, 0
      %v2054 = vsel %vm225, %v1975, 0
      %v2057 = vsel %vm225, %v1976, 0
      %v2060 = vsel %vm225, %v1977, 0
      %v2063 = vsel %vm225, %v1978, 0
      %v2066 = vsel %vm225, %v1979, 0
      %v2069 = vsel %vm225, %v1980, 0
      %v2072 = vsel %vm225, %v1981, 0
      %v2075 = vsel %vm225, %v1982, 0
      %v2078 = vsel %vm225, %v1983, 0
      %v2081 = vsel %vm225, %v1984, 0
      %v2084 = vsel %vm511, %v1986, 0
      %2086 = vmatpush.msra.mxu0 0.0
      %2087 = vmatpush.msra.mxu0 0.0
      %2088 = vmatpush.msra.mxu0 0.0
      %2089 = vmatpush.msra.mxu0 0.0
      %2090 = vmatpush.msra.mxu0 0.0
      %2091 = vmatpush.msra.mxu0 0.0
      %2092 = vmatpush.msra.mxu0 0.0
      %2093 = vmatpush.msra.mxu0 0.0
      %2094 = vmatpush.msra.mxu0 0.0
      %2095 = vmatpush.msra.mxu0 0.0
      %2096 = vmatpush.msra.mxu0 0.0
      %2097 = vmatpush.msra.mxu0 0.0
      %2098 = vmatpush.msra.mxu0 0.0
      %2099 = vmatpush.msra.mxu0 0.0
      %2100 = vmatpush.msra.mxu0 0.0
      %2101 = vmatpush.msra.mxu0 %v2084
      %2102 = vmatmul.f32.gmra.mxu0 %v1988
      %v2103 = vpop.f32.mrf.mxu0
      %v2104 = vadd.f32 0.0, %v2103
      %2105 = vmatmul.f32.gmra.mxu0 %v1991
      %v2106 = vpop.f32.mrf.mxu0
      %v2107 = vadd.f32 0.0, %v2106
      %2108 = vmatmul.f32.gmra.mxu0 %v1994
      %v2109 = vpop.f32.mrf.mxu0
      %v2110 = vadd.f32 0.0, %v2109
      %2111 = vmatmul.f32.gmra.mxu0 %v1997
      %v2112 = vpop.f32.mrf.mxu0
      %v2113 = vadd.f32 0.0, %v2112
      %2114 = vmatmul.f32.gmra.mxu0 %v2000
      %v2115 = vpop.f32.mrf.mxu0
      %v2116 = vadd.f32 0.0, %v2115
      %2117 = vmatmul.f32.gmra.mxu0 %v2003
      %v2118 = vpop.f32.mrf.mxu0
      %v2119 = vadd.f32 0.0, %v2118
      %2120 = vmatmul.f32.gmra.mxu0 %v2006
      %v2121 = vpop.f32.mrf.mxu0
      %v2122 = vadd.f32 0.0, %v2121
      %2123 = vmatmul.f32.gmra.mxu0 %v2009
      %v2124 = vpop.f32.mrf.mxu0
      %v2125 = vadd.f32 0.0, %v2124
      %2126 = vmatmul.f32.gmra.mxu0 %v2012
      %v2127 = vpop.f32.mrf.mxu0
      %v2128 = vadd.f32 0.0, %v2127
      %2129 = vmatmul.f32.gmra.mxu0 %v2015
      %v2130 = vpop.f32.mrf.mxu0
      %v2131 = vadd.f32 0.0, %v2130
      %2132 = vmatmul.f32.gmra.mxu0 %v2018
      %v2133 = vpop.f32.mrf.mxu0
      %v2134 = vadd.f32 0.0, %v2133
      %2135 = vmatmul.f32.gmra.mxu0 %v2021
      %v2136 = vpop.f32.mrf.mxu0
      %v2137 = vadd.f32 0.0, %v2136
      %2138 = vmatmul.f32.gmra.mxu0 %v2024
      %v2139 = vpop.f32.mrf.mxu0
      %v2140 = vadd.f32 0.0, %v2139
      %2141 = vmatmul.f32.gmra.mxu0 %v2027
      %v2142 = vpop.f32.mrf.mxu0
      %v2143 = vadd.f32 0.0, %v2142
      %2144 = vmatmul.f32.gmra.mxu0 %v2030
      %v2145 = vpop.f32.mrf.mxu0
      %v2146 = vadd.f32 0.0, %v2145
      %2147 = vmatmul.f32.gmra.mxu0 %v2033
      %v2148 = vpop.f32.mrf.mxu0
      %v2149 = vadd.f32 0.0, %v2148
      %2150 = vmatmul.f32.gmra.mxu0 %v2036
      %v2151 = vpop.f32.mrf.mxu0
      %v2152 = vadd.f32 0.0, %v2151
      %2153 = vmatmul.f32.gmra.mxu0 %v2039
      %v2154 = vpop.f32.mrf.mxu0
      %v2155 = vadd.f32 0.0, %v2154
      %2156 = vmatmul.f32.gmra.mxu0 %v2042
      %v2157 = vpop.f32.mrf.mxu0
      %v2158 = vadd.f32 0.0, %v2157
      %2159 = vmatmul.f32.gmra.mxu0 %v2045
      %v2160 = vpop.f32.mrf.mxu0
      %v2161 = vadd.f32 0.0, %v2160
      %2162 = vmatmul.f32.gmra.mxu0 %v2048
      %v2163 = vpop.f32.mrf.mxu0
      %v2164 = vadd.f32 0.0, %v2163
      %2165 = vmatmul.f32.gmra.mxu0 %v2051
      %v2166 = vpop.f32.mrf.mxu0
      %v2167 = vadd.f32 0.0, %v2166
      %2168 = vmatmul.f32.gmra.mxu0 %v2054
      %v2169 = vpop.f32.mrf.mxu0
      %v2170 = vadd.f32 0.0, %v2169
      %2171 = vmatmul.f32.gmra.mxu0 %v2057
      %v2172 = vpop.f32.mrf.mxu0
      %v2173 = vadd.f32 0.0, %v2172
      %2174 = vmatmul.f32.gmra.mxu0 %v2060
      %v2175 = vpop.f32.mrf.mxu0
      %v2176 = vadd.f32 0.0, %v2175
      %2177 = vmatmul.f32.gmra.mxu0 %v2063
      %v2178 = vpop.f32.mrf.mxu0
      %v2179 = vadd.f32 0.0, %v2178
      %2180 = vmatmul.f32.gmra.mxu0 %v2066
      %v2181 = vpop.f32.mrf.mxu0
      %v2182 = vadd.f32 0.0, %v2181
      %2183 = vmatmul.f32.gmra.mxu0 %v2069
      %v2184 = vpop.f32.mrf.mxu0
      %v2185 = vadd.f32 0.0, %v2184
      %2186 = vmatmul.f32.gmra.mxu0 %v2072
      %v2187 = vpop.f32.mrf.mxu0
      %v2188 = vadd.f32 0.0, %v2187
      %2189 = vmatmul.f32.gmra.mxu0 %v2075
      %v2190 = vpop.f32.mrf.mxu0
      %v2191 = vadd.f32 0.0, %v2190
      %2192 = vmatmul.f32.gmra.mxu0 %v2078
      %v2193 = vpop.f32.mrf.mxu0
      %v2194 = vadd.f32 0.0, %v2193
      %2195 = vmatmul.f32.gmra.mxu0 %v2081
      %v2196 = vpop.f32.mrf.mxu0
      %v2197 = vadd.f32 0.0, %v2196
      %2198 = vdwg.mxu0
      %v2199 = vadd.f32 %v1920, %v2104
      %v2200 = vadd.f32 %v1921, %v2107
      %v2201 = vadd.f32 %v1922, %v2110
      %v2202 = vadd.f32 %v1923, %v2113
      %v2203 = vadd.f32 %v1924, %v2116
      %v2204 = vadd.f32 %v1925, %v2119
      %v2205 = vadd.f32 %v1926, %v2122
      %v2206 = vadd.f32 %v1927, %v2125
      %v2207 = vadd.f32 %v1928, %v2128
      %v2208 = vadd.f32 %v1929, %v2131
      %v2209 = vadd.f32 %v1930, %v2134
      %v2210 = vadd.f32 %v1931, %v2137
      %v2211 = vadd.f32 %v1932, %v2140
      %v2212 = vadd.f32 %v1933, %v2143
      %v2213 = vadd.f32 %v1934, %v2146
      %v2214 = vadd.f32 %v1935, %v2149
      %v2215 = vadd.f32 %v1936, %v2152
      %v2216 = vadd.f32 %v1937, %v2155
      %v2217 = vadd.f32 %v1938, %v2158
      %v2218 = vadd.f32 %v1939, %v2161
      %v2219 = vadd.f32 %v1940, %v2164
      %v2220 = vadd.f32 %v1941, %v2167
      %v2221 = vadd.f32 %v1942, %v2170
      %v2222 = vadd.f32 %v1943, %v2173
      %v2223 = vadd.f32 %v1944, %v2176
      %v2224 = vadd.f32 %v1945, %v2179
      %v2225 = vadd.f32 %v1946, %v2182
      %v2226 = vadd.f32 %v1947, %v2185
      %v2227 = vadd.f32 %v1948, %v2188
      %v2228 = vadd.f32 %v1949, %v2191
      %v2229 = vadd.f32 %v1950, %v2194
      %v2230 = vadd.f32 %v1951, %v2197
      %v2231 = vld [vmem:[%s1952 + $0x1] sm:$0xff]
      %v2232 = vld [vmem:[%s1952 + $0x9] sm:$0xff]
      %v2233 = vld [vmem:[%s1952 + $0x19] sm:$0xff]
      %v2234 = vld [vmem:[%s1952 + $0x21] sm:$0xff]
      %v2235 = vld [vmem:[%s1952 + $0x31] sm:$0xff]
      %v2236 = vld [vmem:[%s1952 + $0x39] sm:$0xff]
      %v2237 = vld [vmem:[%s1952 + $0x49] sm:$0xff]
      %v2238 = vld [vmem:[%s1952 + $0x51] sm:$0xff]
      %v2239 = vld [vmem:[%s1952 + $0x61] sm:$0xff]
      %v2240 = vld [vmem:[%s1952 + $0x69] sm:$0xff]
      %v2241 = vld [vmem:[%s1952 + $0x79] sm:$0xff]
      %v2242 = vld [vmem:[%s1952 + $0x81] sm:$0xff]
      %v2243 = vld [vmem:[%s1952 + $0x91] sm:$0xff]
      %v2244 = vld [vmem:[%s1952 + $0x99] sm:$0xff]
      %v2245 = vld [vmem:[%s1952 + $0xa9] sm:$0xff]
      %v2246 = vld [vmem:[%s1952 + $0xb1] sm:$0xff]
      %v2247 = vld [vmem:[%s1952 + $0xc1] sm:$0xff]
      %v2248 = vld [vmem:[%s1952 + $0xc9] sm:$0xff]
      %v2249 = vld [vmem:[%s1952 + $0xd9] sm:$0xff]
      %v2250 = vld [vmem:[%s1952 + $0xe1] sm:$0xff]
      %v2251 = vld [vmem:[%s1952 + $0xf1] sm:$0xff]
      %v2252 = vld [vmem:[%s1952 + $0xf9] sm:$0xff]
      %v2253 = vld [vmem:[%s1952 + $0x109] sm:$0xff]
      %v2254 = vld [vmem:[%s1952 + $0x111] sm:$0xff]
      %v2255 = vld [vmem:[%s1952 + $0x121] sm:$0xff]
      %v2256 = vld [vmem:[%s1952 + $0x129] sm:$0xff]
      %v2257 = vld [vmem:[%s1952 + $0x139] sm:$0xff]
      %v2258 = vld [vmem:[%s1952 + $0x141] sm:$0xff]
      %v2259 = vld [vmem:[%s1952 + $0x151] sm:$0xff]
      %v2260 = vld [vmem:[%s1952 + $0x159] sm:$0xff]
      %v2261 = vld [vmem:[%s1952 + $0x169] sm:$0xff]
      %v2262 = vld [vmem:[%s1952 + $0x171] sm:$0xff]
      %s2263 = scalar_lea.vmem %s1, 28
      %v2264 = vld [vmem:[%s2263] sm:$0xf]
      %v2266 = vsel %vm225, %v2231, 0
      %v2269 = vsel %vm225, %v2232, 0
      %v2272 = vsel %vm225, %v2233, 0
      %v2275 = vsel %vm225, %v2234, 0
      %v2278 = vsel %vm225, %v2235, 0
      %v2281 = vsel %vm225, %v2236, 0
      %v2284 = vsel %vm225, %v2237, 0
      %v2287 = vsel %vm225, %v2238, 0
      %v2290 = vsel %vm225, %v2239, 0
      %v2293 = vsel %vm225, %v2240, 0
      %v2296 = vsel %vm225, %v2241, 0
      %v2299 = vsel %vm225, %v2242, 0
      %v2302 = vsel %vm225, %v2243, 0
      %v2305 = vsel %vm225, %v2244, 0
      %v2308 = vsel %vm225, %v2245, 0
      %v2311 = vsel %vm225, %v2246, 0
      %v2314 = vsel %vm225, %v2247, 0
      %v2317 = vsel %vm225, %v2248, 0
      %v2320 = vsel %vm225, %v2249, 0
      %v2323 = vsel %vm225, %v2250, 0
      %v2326 = vsel %vm225, %v2251, 0
      %v2329 = vsel %vm225, %v2252, 0
      %v2332 = vsel %vm225, %v2253, 0
      %v2335 = vsel %vm225, %v2254, 0
      %v2338 = vsel %vm225, %v2255, 0
      %v2341 = vsel %vm225, %v2256, 0
      %v2344 = vsel %vm225, %v2257, 0
      %v2347 = vsel %vm225, %v2258, 0
      %v2350 = vsel %vm225, %v2259, 0
      %v2353 = vsel %vm225, %v2260, 0
      %v2356 = vsel %vm225, %v2261, 0
      %v2359 = vsel %vm225, %v2262, 0
      %v2362 = vsel %vm511, %v2264, 0
      %2364 = vmatpush.msra.mxu0 0.0
      %2365 = vmatpush.msra.mxu0 0.0
      %2366 = vmatpush.msra.mxu0 0.0
      %2367 = vmatpush.msra.mxu0 0.0
      %2368 = vmatpush.msra.mxu0 0.0
      %2369 = vmatpush.msra.mxu0 0.0
      %2370 = vmatpush.msra.mxu0 0.0
      %2371 = vmatpush.msra.mxu0 0.0
      %2372 = vmatpush.msra.mxu0 0.0
      %2373 = vmatpush.msra.mxu0 0.0
      %2374 = vmatpush.msra.mxu0 0.0
      %2375 = vmatpush.msra.mxu0 0.0
      %2376 = vmatpush.msra.mxu0 0.0
      %2377 = vmatpush.msra.mxu0 0.0
      %2378 = vmatpush.msra.mxu0 0.0
      %2379 = vmatpush.msra.mxu0 %v2362
      %2380 = vmatmul.f32.gmra.mxu0 %v2266
      %v2381 = vpop.f32.mrf.mxu0
      %v2382 = vadd.f32 0.0, %v2381
      %2383 = vmatmul.f32.gmra.mxu0 %v2269
      %v2384 = vpop.f32.mrf.mxu0
      %v2385 = vadd.f32 0.0, %v2384
      %2386 = vmatmul.f32.gmra.mxu0 %v2272
      %v2387 = vpop.f32.mrf.mxu0
      %v2388 = vadd.f32 0.0, %v2387
      %2389 = vmatmul.f32.gmra.mxu0 %v2275
      %v2390 = vpop.f32.mrf.mxu0
      %v2391 = vadd.f32 0.0, %v2390
      %2392 = vmatmul.f32.gmra.mxu0 %v2278
      %v2393 = vpop.f32.mrf.mxu0
      %v2394 = vadd.f32 0.0, %v2393
      %2395 = vmatmul.f32.gmra.mxu0 %v2281
      %v2396 = vpop.f32.mrf.mxu0
      %v2397 = vadd.f32 0.0, %v2396
      %2398 = vmatmul.f32.gmra.mxu0 %v2284
      %v2399 = vpop.f32.mrf.mxu0
      %v2400 = vadd.f32 0.0, %v2399
      %2401 = vmatmul.f32.gmra.mxu0 %v2287
      %v2402 = vpop.f32.mrf.mxu0
      %v2403 = vadd.f32 0.0, %v2402
      %2404 = vmatmul.f32.gmra.mxu0 %v2290
      %v2405 = vpop.f32.mrf.mxu0
      %v2406 = vadd.f32 0.0, %v2405
      %2407 = vmatmul.f32.gmra.mxu0 %v2293
      %v2408 = vpop.f32.mrf.mxu0
      %v2409 = vadd.f32 0.0, %v2408
      %2410 = vmatmul.f32.gmra.mxu0 %v2296
      %v2411 = vpop.f32.mrf.mxu0
      %v2412 = vadd.f32 0.0, %v2411
      %2413 = vmatmul.f32.gmra.mxu0 %v2299
      %v2414 = vpop.f32.mrf.mxu0
      %v2415 = vadd.f32 0.0, %v2414
      %2416 = vmatmul.f32.gmra.mxu0 %v2302
      %v2417 = vpop.f32.mrf.mxu0
      %v2418 = vadd.f32 0.0, %v2417
      %2419 = vmatmul.f32.gmra.mxu0 %v2305
      %v2420 = vpop.f32.mrf.mxu0
      %v2421 = vadd.f32 0.0, %v2420
      %2422 = vmatmul.f32.gmra.mxu0 %v2308
      %v2423 = vpop.f32.mrf.mxu0
      %v2424 = vadd.f32 0.0, %v2423
      %2425 = vmatmul.f32.gmra.mxu0 %v2311
      %v2426 = vpop.f32.mrf.mxu0
      %v2427 = vadd.f32 0.0, %v2426
      %2428 = vmatmul.f32.gmra.mxu0 %v2314
      %v2429 = vpop.f32.mrf.mxu0
      %v2430 = vadd.f32 0.0, %v2429
      %2431 = vmatmul.f32.gmra.mxu0 %v2317
      %v2432 = vpop.f32.mrf.mxu0
      %v2433 = vadd.f32 0.0, %v2432
      %2434 = vmatmul.f32.gmra.mxu0 %v2320
      %v2435 = vpop.f32.mrf.mxu0
      %v2436 = vadd.f32 0.0, %v2435
      %2437 = vmatmul.f32.gmra.mxu0 %v2323
      %v2438 = vpop.f32.mrf.mxu0
      %v2439 = vadd.f32 0.0, %v2438
      %2440 = vmatmul.f32.gmra.mxu0 %v2326
      %v2441 = vpop.f32.mrf.mxu0
      %v2442 = vadd.f32 0.0, %v2441
      %2443 = vmatmul.f32.gmra.mxu0 %v2329
      %v2444 = vpop.f32.mrf.mxu0
      %v2445 = vadd.f32 0.0, %v2444
      %2446 = vmatmul.f32.gmra.mxu0 %v2332
      %v2447 = vpop.f32.mrf.mxu0
      %v2448 = vadd.f32 0.0, %v2447
      %2449 = vmatmul.f32.gmra.mxu0 %v2335
      %v2450 = vpop.f32.mrf.mxu0
      %v2451 = vadd.f32 0.0, %v2450
      %2452 = vmatmul.f32.gmra.mxu0 %v2338
      %v2453 = vpop.f32.mrf.mxu0
      %v2454 = vadd.f32 0.0, %v2453
      %2455 = vmatmul.f32.gmra.mxu0 %v2341
      %v2456 = vpop.f32.mrf.mxu0
      %v2457 = vadd.f32 0.0, %v2456
      %2458 = vmatmul.f32.gmra.mxu0 %v2344
      %v2459 = vpop.f32.mrf.mxu0
      %v2460 = vadd.f32 0.0, %v2459
      %2461 = vmatmul.f32.gmra.mxu0 %v2347
      %v2462 = vpop.f32.mrf.mxu0
      %v2463 = vadd.f32 0.0, %v2462
      %2464 = vmatmul.f32.gmra.mxu0 %v2350
      %v2465 = vpop.f32.mrf.mxu0
      %v2466 = vadd.f32 0.0, %v2465
      %2467 = vmatmul.f32.gmra.mxu0 %v2353
      %v2468 = vpop.f32.mrf.mxu0
      %v2469 = vadd.f32 0.0, %v2468
      %2470 = vmatmul.f32.gmra.mxu0 %v2356
      %v2471 = vpop.f32.mrf.mxu0
      %v2472 = vadd.f32 0.0, %v2471
      %2473 = vmatmul.f32.gmra.mxu0 %v2359
      %v2474 = vpop.f32.mrf.mxu0
      %v2475 = vadd.f32 0.0, %v2474
      %2476 = vdwg.mxu0
      %v2477 = vadd.f32 %v2199, %v2382
      %v2478 = vadd.f32 %v2200, %v2385
      %v2479 = vadd.f32 %v2201, %v2388
      %v2480 = vadd.f32 %v2202, %v2391
      %v2481 = vadd.f32 %v2203, %v2394
      %v2482 = vadd.f32 %v2204, %v2397
      %v2483 = vadd.f32 %v2205, %v2400
      %v2484 = vadd.f32 %v2206, %v2403
      %v2485 = vadd.f32 %v2207, %v2406
      %v2486 = vadd.f32 %v2208, %v2409
      %v2487 = vadd.f32 %v2209, %v2412
      %v2488 = vadd.f32 %v2210, %v2415
      %v2489 = vadd.f32 %v2211, %v2418
      %v2490 = vadd.f32 %v2212, %v2421
      %v2491 = vadd.f32 %v2213, %v2424
      %v2492 = vadd.f32 %v2214, %v2427
      %v2493 = vadd.f32 %v2215, %v2430
      %v2494 = vadd.f32 %v2216, %v2433
      %v2495 = vadd.f32 %v2217, %v2436
      %v2496 = vadd.f32 %v2218, %v2439
      %v2497 = vadd.f32 %v2219, %v2442
      %v2498 = vadd.f32 %v2220, %v2445
      %v2499 = vadd.f32 %v2221, %v2448
      %v2500 = vadd.f32 %v2222, %v2451
      %v2501 = vadd.f32 %v2223, %v2454
      %v2502 = vadd.f32 %v2224, %v2457
      %v2503 = vadd.f32 %v2225, %v2460
      %v2504 = vadd.f32 %v2226, %v2463
      %v2505 = vadd.f32 %v2227, %v2466
      %v2506 = vadd.f32 %v2228, %v2469
      %v2507 = vadd.f32 %v2229, %v2472
      %v2508 = vadd.f32 %v2230, %v2475
      %v2509 = vld [vmem:[%s1952 + $0x2] sm:$0xff]
      %v2510 = vld [vmem:[%s1952 + $0xa] sm:$0xff]
      %v2511 = vld [vmem:[%s1952 + $0x1a] sm:$0xff]
      %v2512 = vld [vmem:[%s1952 + $0x22] sm:$0xff]
      %v2513 = vld [vmem:[%s1952 + $0x32] sm:$0xff]
      %v2514 = vld [vmem:[%s1952 + $0x3a] sm:$0xff]
      %v2515 = vld [vmem:[%s1952 + $0x4a] sm:$0xff]
      %v2516 = vld [vmem:[%s1952 + $0x52] sm:$0xff]
      %v2517 = vld [vmem:[%s1952 + $0x62] sm:$0xff]
      %v2518 = vld [vmem:[%s1952 + $0x6a] sm:$0xff]
      %v2519 = vld [vmem:[%s1952 + $0x7a] sm:$0xff]
      %v2520 = vld [vmem:[%s1952 + $0x82] sm:$0xff]
      %v2521 = vld [vmem:[%s1952 + $0x92] sm:$0xff]
      %v2522 = vld [vmem:[%s1952 + $0x9a] sm:$0xff]
      %v2523 = vld [vmem:[%s1952 + $0xaa] sm:$0xff]
      %v2524 = vld [vmem:[%s1952 + $0xb2] sm:$0xff]
      %v2525 = vld [vmem:[%s1952 + $0xc2] sm:$0xff]
      %v2526 = vld [vmem:[%s1952 + $0xca] sm:$0xff]
      %v2527 = vld [vmem:[%s1952 + $0xda] sm:$0xff]
      %v2528 = vld [vmem:[%s1952 + $0xe2] sm:$0xff]
      %v2529 = vld [vmem:[%s1952 + $0xf2] sm:$0xff]
      %v2530 = vld [vmem:[%s1952 + $0xfa] sm:$0xff]
      %v2531 = vld [vmem:[%s1952 + $0x10a] sm:$0xff]
      %v2532 = vld [vmem:[%s1952 + $0x112] sm:$0xff]
      %v2533 = vld [vmem:[%s1952 + $0x122] sm:$0xff]
      %v2534 = vld [vmem:[%s1952 + $0x12a] sm:$0xff]
      %v2535 = vld [vmem:[%s1952 + $0x13a] sm:$0xff]
      %v2536 = vld [vmem:[%s1952 + $0x142] sm:$0xff]
      %v2537 = vld [vmem:[%s1952 + $0x152] sm:$0xff]
      %v2538 = vld [vmem:[%s1952 + $0x15a] sm:$0xff]
      %v2539 = vld [vmem:[%s1952 + $0x16a] sm:$0xff]
      %v2540 = vld [vmem:[%s1952 + $0x172] sm:$0xff]
      %s2541 = scalar_lea.vmem %s1, 32
      %v2542 = vld [vmem:[%s2541] sm:$0xf]
      %v2544 = vsel %vm225, %v2509, 0
      %v2547 = vsel %vm225, %v2510, 0
      %v2550 = vsel %vm225, %v2511, 0
      %v2553 = vsel %vm225, %v2512, 0
      %v2556 = vsel %vm225, %v2513, 0
      %v2559 = vsel %vm225, %v2514, 0
      %v2562 = vsel %vm225, %v2515, 0
      %v2565 = vsel %vm225, %v2516, 0
      %v2568 = vsel %vm225, %v2517, 0
      %v2571 = vsel %vm225, %v2518, 0
      %v2574 = vsel %vm225, %v2519, 0
      %v2577 = vsel %vm225, %v2520, 0
      %v2580 = vsel %vm225, %v2521, 0
      %v2583 = vsel %vm225, %v2522, 0
      %v2586 = vsel %vm225, %v2523, 0
      %v2589 = vsel %vm225, %v2524, 0
      %v2592 = vsel %vm225, %v2525, 0
      %v2595 = vsel %vm225, %v2526, 0
      %v2598 = vsel %vm225, %v2527, 0
      %v2601 = vsel %vm225, %v2528, 0
      %v2604 = vsel %vm225, %v2529, 0
      %v2607 = vsel %vm225, %v2530, 0
      %v2610 = vsel %vm225, %v2531, 0
      %v2613 = vsel %vm225, %v2532, 0
      %v2616 = vsel %vm225, %v2533, 0
      %v2619 = vsel %vm225, %v2534, 0
      %v2622 = vsel %vm225, %v2535, 0
      %v2625 = vsel %vm225, %v2536, 0
      %v2628 = vsel %vm225, %v2537, 0
      %v2631 = vsel %vm225, %v2538, 0
      %v2634 = vsel %vm225, %v2539, 0
      %v2637 = vsel %vm225, %v2540, 0
      %v2640 = vsel %vm511, %v2542, 0
      %2642 = vmatpush.msra.mxu0 0.0
      %2643 = vmatpush.msra.mxu0 0.0
      %2644 = vmatpush.msra.mxu0 0.0
      %2645 = vmatpush.msra.mxu0 0.0
      %2646 = vmatpush.msra.mxu0 0.0
      %2647 = vmatpush.msra.mxu0 0.0
      %2648 = vmatpush.msra.mxu0 0.0
      %2649 = vmatpush.msra.mxu0 0.0
      %2650 = vmatpush.msra.mxu0 0.0
      %2651 = vmatpush.msra.mxu0 0.0
      %2652 = vmatpush.msra.mxu0 0.0
      %2653 = vmatpush.msra.mxu0 0.0
      %2654 = vmatpush.msra.mxu0 0.0
      %2655 = vmatpush.msra.mxu0 0.0
      %2656 = vmatpush.msra.mxu0 0.0
      %2657 = vmatpush.msra.mxu0 %v2640
      %2658 = vmatmul.f32.gmra.mxu0 %v2544
      %v2659 = vpop.f32.mrf.mxu0
      %v2660 = vadd.f32 0.0, %v2659
      %2661 = vmatmul.f32.gmra.mxu0 %v2547
      %v2662 = vpop.f32.mrf.mxu0
      %v2663 = vadd.f32 0.0, %v2662
      %2664 = vmatmul.f32.gmra.mxu0 %v2550
      %v2665 = vpop.f32.mrf.mxu0
      %v2666 = vadd.f32 0.0, %v2665
      %2667 = vmatmul.f32.gmra.mxu0 %v2553
      %v2668 = vpop.f32.mrf.mxu0
      %v2669 = vadd.f32 0.0, %v2668
      %2670 = vmatmul.f32.gmra.mxu0 %v2556
      %v2671 = vpop.f32.mrf.mxu0
      %v2672 = vadd.f32 0.0, %v2671
      %2673 = vmatmul.f32.gmra.mxu0 %v2559
      %v2674 = vpop.f32.mrf.mxu0
      %v2675 = vadd.f32 0.0, %v2674
      %2676 = vmatmul.f32.gmra.mxu0 %v2562
      %v2677 = vpop.f32.mrf.mxu0
      %v2678 = vadd.f32 0.0, %v2677
      %2679 = vmatmul.f32.gmra.mxu0 %v2565
      %v2680 = vpop.f32.mrf.mxu0
      %v2681 = vadd.f32 0.0, %v2680
      %2682 = vmatmul.f32.gmra.mxu0 %v2568
      %v2683 = vpop.f32.mrf.mxu0
      %v2684 = vadd.f32 0.0, %v2683
      %2685 = vmatmul.f32.gmra.mxu0 %v2571
      %v2686 = vpop.f32.mrf.mxu0
      %v2687 = vadd.f32 0.0, %v2686
      %2688 = vmatmul.f32.gmra.mxu0 %v2574
      %v2689 = vpop.f32.mrf.mxu0
      %v2690 = vadd.f32 0.0, %v2689
      %2691 = vmatmul.f32.gmra.mxu0 %v2577
      %v2692 = vpop.f32.mrf.mxu0
      %v2693 = vadd.f32 0.0, %v2692
      %2694 = vmatmul.f32.gmra.mxu0 %v2580
      %v2695 = vpop.f32.mrf.mxu0
      %v2696 = vadd.f32 0.0, %v2695
      %2697 = vmatmul.f32.gmra.mxu0 %v2583
      %v2698 = vpop.f32.mrf.mxu0
      %v2699 = vadd.f32 0.0, %v2698
      %2700 = vmatmul.f32.gmra.mxu0 %v2586
      %v2701 = vpop.f32.mrf.mxu0
      %v2702 = vadd.f32 0.0, %v2701
      %2703 = vmatmul.f32.gmra.mxu0 %v2589
      %v2704 = vpop.f32.mrf.mxu0
      %v2705 = vadd.f32 0.0, %v2704
      %2706 = vmatmul.f32.gmra.mxu0 %v2592
      %v2707 = vpop.f32.mrf.mxu0
      %v2708 = vadd.f32 0.0, %v2707
      %2709 = vmatmul.f32.gmra.mxu0 %v2595
      %v2710 = vpop.f32.mrf.mxu0
      %v2711 = vadd.f32 0.0, %v2710
      %2712 = vmatmul.f32.gmra.mxu0 %v2598
      %v2713 = vpop.f32.mrf.mxu0
      %v2714 = vadd.f32 0.0, %v2713
      %2715 = vmatmul.f32.gmra.mxu0 %v2601
      %v2716 = vpop.f32.mrf.mxu0
      %v2717 = vadd.f32 0.0, %v2716
      %2718 = vmatmul.f32.gmra.mxu0 %v2604
      %v2719 = vpop.f32.mrf.mxu0
      %v2720 = vadd.f32 0.0, %v2719
      %2721 = vmatmul.f32.gmra.mxu0 %v2607
      %v2722 = vpop.f32.mrf.mxu0
      %v2723 = vadd.f32 0.0, %v2722
      %2724 = vmatmul.f32.gmra.mxu0 %v2610
      %v2725 = vpop.f32.mrf.mxu0
      %v2726 = vadd.f32 0.0, %v2725
      %2727 = vmatmul.f32.gmra.mxu0 %v2613
      %v2728 = vpop.f32.mrf.mxu0
      %v2729 = vadd.f32 0.0, %v2728
      %2730 = vmatmul.f32.gmra.mxu0 %v2616
      %v2731 = vpop.f32.mrf.mxu0
      %v2732 = vadd.f32 0.0, %v2731
      %2733 = vmatmul.f32.gmra.mxu0 %v2619
      %v2734 = vpop.f32.mrf.mxu0
      %v2735 = vadd.f32 0.0, %v2734
      %2736 = vmatmul.f32.gmra.mxu0 %v2622
      %v2737 = vpop.f32.mrf.mxu0
      %v2738 = vadd.f32 0.0, %v2737
      %2739 = vmatmul.f32.gmra.mxu0 %v2625
      %v2740 = vpop.f32.mrf.mxu0
      %v2741 = vadd.f32 0.0, %v2740
      %2742 = vmatmul.f32.gmra.mxu0 %v2628
      %v2743 = vpop.f32.mrf.mxu0
      %v2744 = vadd.f32 0.0, %v2743
      %2745 = vmatmul.f32.gmra.mxu0 %v2631
      %v2746 = vpop.f32.mrf.mxu0
      %v2747 = vadd.f32 0.0, %v2746
      %2748 = vmatmul.f32.gmra.mxu0 %v2634
      %v2749 = vpop.f32.mrf.mxu0
      %v2750 = vadd.f32 0.0, %v2749
      %2751 = vmatmul.f32.gmra.mxu0 %v2637
      %v2752 = vpop.f32.mrf.mxu0
      %v2753 = vadd.f32 0.0, %v2752
      %2754 = vdwg.mxu0
      %v2755 = vadd.f32 %v2477, %v2660
      %v2756 = vadd.f32 %v2478, %v2663
      %v2757 = vadd.f32 %v2479, %v2666
      %v2758 = vadd.f32 %v2480, %v2669
      %v2759 = vadd.f32 %v2481, %v2672
      %v2760 = vadd.f32 %v2482, %v2675
      %v2761 = vadd.f32 %v2483, %v2678
      %v2762 = vadd.f32 %v2484, %v2681
      %v2763 = vadd.f32 %v2485, %v2684
      %v2764 = vadd.f32 %v2486, %v2687
      %v2765 = vadd.f32 %v2487, %v2690
      %v2766 = vadd.f32 %v2488, %v2693
      %v2767 = vadd.f32 %v2489, %v2696
      %v2768 = vadd.f32 %v2490, %v2699
      %v2769 = vadd.f32 %v2491, %v2702
      %v2770 = vadd.f32 %v2492, %v2705
      %v2771 = vadd.f32 %v2493, %v2708
      %v2772 = vadd.f32 %v2494, %v2711
      %v2773 = vadd.f32 %v2495, %v2714
      %v2774 = vadd.f32 %v2496, %v2717
      %v2775 = vadd.f32 %v2497, %v2720
      %v2776 = vadd.f32 %v2498, %v2723
      %v2777 = vadd.f32 %v2499, %v2726
      %v2778 = vadd.f32 %v2500, %v2729
      %v2779 = vadd.f32 %v2501, %v2732
      %v2780 = vadd.f32 %v2502, %v2735
      %v2781 = vadd.f32 %v2503, %v2738
      %v2782 = vadd.f32 %v2504, %v2741
      %v2783 = vadd.f32 %v2505, %v2744
      %v2784 = vadd.f32 %v2506, %v2747
      %v2785 = vadd.f32 %v2507, %v2750
      %v2786 = vadd.f32 %v2508, %v2753
      %v2788 = vperm.slane %v281, 0
      %v2790 = vadd.f32 %v2755, %v2788
      %v2791 = vadd.f32 %v2756, %v2788
      %v2792 = vadd.f32 %v2757, %v2788
      %v2793 = vadd.f32 %v2758, %v2788
      %v2794 = vadd.f32 %v2759, %v2788
      %v2795 = vadd.f32 %v2760, %v2788
      %v2796 = vadd.f32 %v2761, %v2788
      %v2797 = vadd.f32 %v2762, %v2788
      %v2798 = vadd.f32 %v2763, %v2788
      %v2799 = vadd.f32 %v2764, %v2788
      %v2800 = vadd.f32 %v2765, %v2788
      %v2801 = vadd.f32 %v2766, %v2788
      %v2802 = vadd.f32 %v2767, %v2788
      %v2803 = vadd.f32 %v2768, %v2788
      %v2804 = vadd.f32 %v2769, %v2788
      %v2805 = vadd.f32 %v2770, %v2788
      %v2806 = vadd.f32 %v2771, %v2788
      %v2807 = vadd.f32 %v2772, %v2788
      %v2808 = vadd.f32 %v2773, %v2788
      %v2809 = vadd.f32 %v2774, %v2788
      %v2810 = vadd.f32 %v2775, %v2788
      %v2811 = vadd.f32 %v2776, %v2788
      %v2812 = vadd.f32 %v2777, %v2788
      %v2813 = vadd.f32 %v2778, %v2788
      %v2814 = vadd.f32 %v2779, %v2788
      %v2815 = vadd.f32 %v2780, %v2788
      %v2816 = vadd.f32 %v2781, %v2788
      %v2817 = vadd.f32 %v2782, %v2788
      %v2818 = vadd.f32 %v2783, %v2788
      %v2819 = vadd.f32 %v2784, %v2788
      %v2820 = vadd.f32 %v2785, %v2788
      %v2821 = vadd.f32 %v2786, %v2788
      %v2822 = vmax.f32 %v2790, 0.0
      %v2823 = vmax.f32 %v2791, 0.0
      %v2824 = vmax.f32 %v2792, 0.0
      %v2825 = vmax.f32 %v2793, 0.0
      %v2826 = vmax.f32 %v2794, 0.0
      %v2827 = vmax.f32 %v2795, 0.0
      %v2828 = vmax.f32 %v2796, 0.0
      %v2829 = vmax.f32 %v2797, 0.0
      %v2830 = vmax.f32 %v2798, 0.0
      %v2831 = vmax.f32 %v2799, 0.0
      %v2832 = vmax.f32 %v2800, 0.0
      %v2833 = vmax.f32 %v2801, 0.0
      %v2834 = vmax.f32 %v2802, 0.0
      %v2835 = vmax.f32 %v2803, 0.0
      %v2836 = vmax.f32 %v2804, 0.0
      %v2837 = vmax.f32 %v2805, 0.0
      %v2838 = vmax.f32 %v2806, 0.0
      %v2839 = vmax.f32 %v2807, 0.0
      %v2840 = vmax.f32 %v2808, 0.0
      %v2841 = vmax.f32 %v2809, 0.0
      %v2842 = vmax.f32 %v2810, 0.0
      %v2843 = vmax.f32 %v2811, 0.0
      %v2844 = vmax.f32 %v2812, 0.0
      %v2845 = vmax.f32 %v2813, 0.0
      %v2846 = vmax.f32 %v2814, 0.0
      %v2847 = vmax.f32 %v2815, 0.0
      %v2848 = vmax.f32 %v2816, 0.0
      %v2849 = vmax.f32 %v2817, 0.0
      %v2850 = vmax.f32 %v2818, 0.0
      %v2851 = vmax.f32 %v2819, 0.0
      %v2852 = vmax.f32 %v2820, 0.0
      %v2853 = vmax.f32 %v2821, 0.0
      %2854 = vst.msk [vmem:[%s315 + $0x1] sm:$0xff] %vm225, %v2822
      %2855 = vst.msk [vmem:[%s315 + $0x9] sm:$0xff] %vm225, %v2823
      %2856 = vst.msk [vmem:[%s315 + $0x19] sm:$0xff] %vm225, %v2824
      %2857 = vst.msk [vmem:[%s315 + $0x21] sm:$0xff] %vm225, %v2825
      %2858 = vst.msk [vmem:[%s315 + $0x31] sm:$0xff] %vm225, %v2826
      %2859 = vst.msk [vmem:[%s315 + $0x39] sm:$0xff] %vm225, %v2827
      %2860 = vst.msk [vmem:[%s315 + $0x49] sm:$0xff] %vm225, %v2828
      %2861 = vst.msk [vmem:[%s315 + $0x51] sm:$0xff] %vm225, %v2829
      %2862 = vst.msk [vmem:[%s315 + $0x61] sm:$0xff] %vm225, %v2830
      %2863 = vst.msk [vmem:[%s315 + $0x69] sm:$0xff] %vm225, %v2831
      %2864 = vst.msk [vmem:[%s315 + $0x79] sm:$0xff] %vm225, %v2832
      %2865 = vst.msk [vmem:[%s315 + $0x81] sm:$0xff] %vm225, %v2833
      %2866 = vst.msk [vmem:[%s315 + $0x91] sm:$0xff] %vm225, %v2834
      %2867 = vst.msk [vmem:[%s315 + $0x99] sm:$0xff] %vm225, %v2835
      %2868 = vst.msk [vmem:[%s315 + $0xa9] sm:$0xff] %vm225, %v2836
      %2869 = vst.msk [vmem:[%s315 + $0xb1] sm:$0xff] %vm225, %v2837
      %2870 = vst.msk [vmem:[%s315 + $0xc1] sm:$0xff] %vm225, %v2838
      %2871 = vst.msk [vmem:[%s315 + $0xc9] sm:$0xff] %vm225, %v2839
      %2872 = vst.msk [vmem:[%s315 + $0xd9] sm:$0xff] %vm225, %v2840
      %2873 = vst.msk [vmem:[%s315 + $0xe1] sm:$0xff] %vm225, %v2841
      %2874 = vst.msk [vmem:[%s315 + $0xf1] sm:$0xff] %vm225, %v2842
      %2875 = vst.msk [vmem:[%s315 + $0xf9] sm:$0xff] %vm225, %v2843
      %2876 = vst.msk [vmem:[%s315 + $0x109] sm:$0xff] %vm225, %v2844
      %2877 = vst.msk [vmem:[%s315 + $0x111] sm:$0xff] %vm225, %v2845
      %2878 = vst.msk [vmem:[%s315 + $0x121] sm:$0xff] %vm225, %v2846
      %2879 = vst.msk [vmem:[%s315 + $0x129] sm:$0xff] %vm225, %v2847
      %2880 = vst.msk [vmem:[%s315 + $0x139] sm:$0xff] %vm225, %v2848
      %2881 = vst.msk [vmem:[%s315 + $0x141] sm:$0xff] %vm225, %v2849
      %2882 = vst.msk [vmem:[%s315 + $0x151] sm:$0xff] %vm225, %v2850
      %2883 = vst.msk [vmem:[%s315 + $0x159] sm:$0xff] %vm225, %v2851
      %2884 = vst.msk [vmem:[%s315 + $0x169] sm:$0xff] %vm225, %v2852
      %2885 = vst.msk [vmem:[%s315 + $0x171] sm:$0xff] %vm225, %v2853
      %v2886 = vld [vmem:[#allocation2] sm:$0xff]
      %v2887 = vld [vmem:[#allocation2 + $0x8] sm:$0xff]
      %v2888 = vld [vmem:[#allocation2 + $0x18] sm:$0xff]
      %v2889 = vld [vmem:[#allocation2 + $0x20] sm:$0xff]
      %v2890 = vld [vmem:[#allocation2 + $0x30] sm:$0xff]
      %v2891 = vld [vmem:[#allocation2 + $0x38] sm:$0xff]
      %v2892 = vld [vmem:[#allocation2 + $0x48] sm:$0xff]
      %v2893 = vld [vmem:[#allocation2 + $0x50] sm:$0xff]
      %v2894 = vld [vmem:[#allocation2 + $0x60] sm:$0xff]
      %v2895 = vld [vmem:[#allocation2 + $0x68] sm:$0xff]
      %v2896 = vld [vmem:[#allocation2 + $0x78] sm:$0xff]
      %v2897 = vld [vmem:[#allocation2 + $0x80] sm:$0xff]
      %v2898 = vld [vmem:[#allocation2 + $0x90] sm:$0xff]
      %v2899 = vld [vmem:[#allocation2 + $0x98] sm:$0xff]
      %v2900 = vld [vmem:[#allocation2 + $0xa8] sm:$0xff]
      %v2901 = vld [vmem:[#allocation2 + $0xb0] sm:$0xff]
      %v2902 = vld [vmem:[#allocation2 + $0xc0] sm:$0xff]
      %v2903 = vld [vmem:[#allocation2 + $0xc8] sm:$0xff]
      %v2904 = vld [vmem:[#allocation2 + $0xd8] sm:$0xff]
      %v2905 = vld [vmem:[#allocation2 + $0xe0] sm:$0xff]
      %v2906 = vld [vmem:[#allocation2 + $0xf0] sm:$0xff]
      %v2907 = vld [vmem:[#allocation2 + $0xf8] sm:$0xff]
      %v2908 = vld [vmem:[#allocation2 + $0x108] sm:$0xff]
      %v2909 = vld [vmem:[#allocation2 + $0x110] sm:$0xff]
      %v2910 = vld [vmem:[#allocation2 + $0x120] sm:$0xff]
      %v2911 = vld [vmem:[#allocation2 + $0x128] sm:$0xff]
      %v2912 = vld [vmem:[#allocation2 + $0x138] sm:$0xff]
      %v2913 = vld [vmem:[#allocation2 + $0x140] sm:$0xff]
      %v2914 = vld [vmem:[#allocation2 + $0x150] sm:$0xff]
      %v2915 = vld [vmem:[#allocation2 + $0x158] sm:$0xff]
      %v2916 = vld [vmem:[#allocation2 + $0x168] sm:$0xff]
      %v2917 = vld [vmem:[#allocation2 + $0x170] sm:$0xff]
      %v2918 = vld [vmem:[%s3] sm:$0xf]
      %v2919 = vld [vmem:[#allocation2 + $0x1] sm:$0xff]
      %v2920 = vld [vmem:[#allocation2 + $0x9] sm:$0xff]
      %v2921 = vld [vmem:[#allocation2 + $0x19] sm:$0xff]
      %v2922 = vld [vmem:[#allocation2 + $0x21] sm:$0xff]
      %v2923 = vld [vmem:[#allocation2 + $0x31] sm:$0xff]
      %v2924 = vld [vmem:[#allocation2 + $0x39] sm:$0xff]
      %v2925 = vld [vmem:[#allocation2 + $0x49] sm:$0xff]
      %v2926 = vld [vmem:[#allocation2 + $0x51] sm:$0xff]
      %v2927 = vld [vmem:[#allocation2 + $0x61] sm:$0xff]
      %v2928 = vld [vmem:[#allocation2 + $0x69] sm:$0xff]
      %v2929 = vld [vmem:[#allocation2 + $0x79] sm:$0xff]
      %v2930 = vld [vmem:[#allocation2 + $0x81] sm:$0xff]
      %v2931 = vld [vmem:[#allocation2 + $0x91] sm:$0xff]
      %v2932 = vld [vmem:[#allocation2 + $0x99] sm:$0xff]
      %v2933 = vld [vmem:[#allocation2 + $0xa9] sm:$0xff]
      %v2934 = vld [vmem:[#allocation2 + $0xb1] sm:$0xff]
      %v2935 = vld [vmem:[#allocation2 + $0xc1] sm:$0xff]
      %v2936 = vld [vmem:[#allocation2 + $0xc9] sm:$0xff]
      %v2937 = vld [vmem:[#allocation2 + $0xd9] sm:$0xff]
      %v2938 = vld [vmem:[#allocation2 + $0xe1] sm:$0xff]
      %v2939 = vld [vmem:[#allocation2 + $0xf1] sm:$0xff]
      %v2940 = vld [vmem:[#allocation2 + $0xf9] sm:$0xff]
      %v2941 = vld [vmem:[#allocation2 + $0x109] sm:$0xff]
      %v2942 = vld [vmem:[#allocation2 + $0x111] sm:$0xff]
      %v2943 = vld [vmem:[#allocation2 + $0x121] sm:$0xff]
      %v2944 = vld [vmem:[#allocation2 + $0x129] sm:$0xff]
      %v2945 = vld [vmem:[#allocation2 + $0x139] sm:$0xff]
      %v2946 = vld [vmem:[#allocation2 + $0x141] sm:$0xff]
      %v2947 = vld [vmem:[#allocation2 + $0x151] sm:$0xff]
      %v2948 = vld [vmem:[#allocation2 + $0x159] sm:$0xff]
      %v2949 = vld [vmem:[#allocation2 + $0x169] sm:$0xff]
      %v2950 = vld [vmem:[#allocation2 + $0x171] sm:$0xff]
      %s2951 = scalar_lea.vmem %s3, 4
      %v2952 = vld [vmem:[%s2951] sm:$0xf]
      %v2954 = vsel %vm225, %v2919, 0
      %v2957 = vsel %vm225, %v2920, 0
      %v2960 = vsel %vm225, %v2921, 0
      %v2963 = vsel %vm225, %v2922, 0
      %v2966 = vsel %vm225, %v2923, 0
      %v2969 = vsel %vm225, %v2924, 0
      %v2972 = vsel %vm225, %v2925, 0
      %v2975 = vsel %vm225, %v2926, 0
      %v2978 = vsel %vm225, %v2927, 0
      %v2981 = vsel %vm225, %v2928, 0
      %v2984 = vsel %vm225, %v2929, 0
      %v2987 = vsel %vm225, %v2930, 0
      %v2990 = vsel %vm225, %v2931, 0
      %v2993 = vsel %vm225, %v2932, 0
      %v2996 = vsel %vm225, %v2933, 0
      %v2999 = vsel %vm225, %v2934, 0
      %v3002 = vsel %vm225, %v2935, 0
      %v3005 = vsel %vm225, %v2936, 0
      %v3008 = vsel %vm225, %v2937, 0
      %v3011 = vsel %vm225, %v2938, 0
      %v3014 = vsel %vm225, %v2939, 0
      %v3017 = vsel %vm225, %v2940, 0
      %v3020 = vsel %vm225, %v2941, 0
      %v3023 = vsel %vm225, %v2942, 0
      %v3026 = vsel %vm225, %v2943, 0
      %v3029 = vsel %vm225, %v2944, 0
      %v3032 = vsel %vm225, %v2945, 0
      %v3035 = vsel %vm225, %v2946, 0
      %v3038 = vsel %vm225, %v2947, 0
      %v3041 = vsel %vm225, %v2948, 0
      %v3044 = vsel %vm225, %v2949, 0
      %v3047 = vsel %vm225, %v2950, 0
      %v3050 = vsel %vm511, %v2952, 0
      %3052 = vmatpush.msra.mxu0 0.0
      %3053 = vmatpush.msra.mxu0 0.0
      %3054 = vmatpush.msra.mxu0 0.0
      %3055 = vmatpush.msra.mxu0 0.0
      %3056 = vmatpush.msra.mxu0 0.0
      %3057 = vmatpush.msra.mxu0 0.0
      %3058 = vmatpush.msra.mxu0 0.0
      %3059 = vmatpush.msra.mxu0 0.0
      %3060 = vmatpush.msra.mxu0 0.0
      %3061 = vmatpush.msra.mxu0 0.0
      %3062 = vmatpush.msra.mxu0 0.0
      %3063 = vmatpush.msra.mxu0 0.0
      %3064 = vmatpush.msra.mxu0 0.0
      %3065 = vmatpush.msra.mxu0 0.0
      %3066 = vmatpush.msra.mxu0 0.0
      %3067 = vmatpush.msra.mxu0 %v3050
      %3068 = vmatmul.f32.gmra.mxu0 %v2954
      %v3069 = vpop.f32.mrf.mxu0
      %v3070 = vadd.f32 0.0, %v3069
      %3071 = vmatmul.f32.gmra.mxu0 %v2957
      %v3072 = vpop.f32.mrf.mxu0
      %v3073 = vadd.f32 0.0, %v3072
      %3074 = vmatmul.f32.gmra.mxu0 %v2960
      %v3075 = vpop.f32.mrf.mxu0
      %v3076 = vadd.f32 0.0, %v3075
      %3077 = vmatmul.f32.gmra.mxu0 %v2963
      %v3078 = vpop.f32.mrf.mxu0
      %v3079 = vadd.f32 0.0, %v3078
      %3080 = vmatmul.f32.gmra.mxu0 %v2966
      %v3081 = vpop.f32.mrf.mxu0
      %v3082 = vadd.f32 0.0, %v3081
      %3083 = vmatmul.f32.gmra.mxu0 %v2969
      %v3084 = vpop.f32.mrf.mxu0
      %v3085 = vadd.f32 0.0, %v3084
      %3086 = vmatmul.f32.gmra.mxu0 %v2972
      %v3087 = vpop.f32.mrf.mxu0
      %v3088 = vadd.f32 0.0, %v3087
      %3089 = vmatmul.f32.gmra.mxu0 %v2975
      %v3090 = vpop.f32.mrf.mxu0
      %v3091 = vadd.f32 0.0, %v3090
      %3092 = vmatmul.f32.gmra.mxu0 %v2978
      %v3093 = vpop.f32.mrf.mxu0
      %v3094 = vadd.f32 0.0, %v3093
      %3095 = vmatmul.f32.gmra.mxu0 %v2981
      %v3096 = vpop.f32.mrf.mxu0
      %v3097 = vadd.f32 0.0, %v3096
      %3098 = vmatmul.f32.gmra.mxu0 %v2984
      %v3099 = vpop.f32.mrf.mxu0
      %v3100 = vadd.f32 0.0, %v3099
      %3101 = vmatmul.f32.gmra.mxu0 %v2987
      %v3102 = vpop.f32.mrf.mxu0
      %v3103 = vadd.f32 0.0, %v3102
      %3104 = vmatmul.f32.gmra.mxu0 %v2990
      %v3105 = vpop.f32.mrf.mxu0
      %v3106 = vadd.f32 0.0, %v3105
      %3107 = vmatmul.f32.gmra.mxu0 %v2993
      %v3108 = vpop.f32.mrf.mxu0
      %v3109 = vadd.f32 0.0, %v3108
      %3110 = vmatmul.f32.gmra.mxu0 %v2996
      %v3111 = vpop.f32.mrf.mxu0
      %v3112 = vadd.f32 0.0, %v3111
      %3113 = vmatmul.f32.gmra.mxu0 %v2999
      %v3114 = vpop.f32.mrf.mxu0
      %v3115 = vadd.f32 0.0, %v3114
      %3116 = vmatmul.f32.gmra.mxu0 %v3002
      %v3117 = vpop.f32.mrf.mxu0
      %v3118 = vadd.f32 0.0, %v3117
      %3119 = vmatmul.f32.gmra.mxu0 %v3005
      %v3120 = vpop.f32.mrf.mxu0
      %v3121 = vadd.f32 0.0, %v3120
      %3122 = vmatmul.f32.gmra.mxu0 %v3008
      %v3123 = vpop.f32.mrf.mxu0
      %v3124 = vadd.f32 0.0, %v3123
      %3125 = vmatmul.f32.gmra.mxu0 %v3011
      %v3126 = vpop.f32.mrf.mxu0
      %v3127 = vadd.f32 0.0, %v3126
      %3128 = vmatmul.f32.gmra.mxu0 %v3014
      %v3129 = vpop.f32.mrf.mxu0
      %v3130 = vadd.f32 0.0, %v3129
      %3131 = vmatmul.f32.gmra.mxu0 %v3017
      %v3132 = vpop.f32.mrf.mxu0
      %v3133 = vadd.f32 0.0, %v3132
      %3134 = vmatmul.f32.gmra.mxu0 %v3020
      %v3135 = vpop.f32.mrf.mxu0
      %v3136 = vadd.f32 0.0, %v3135
      %3137 = vmatmul.f32.gmra.mxu0 %v3023
      %v3138 = vpop.f32.mrf.mxu0
      %v3139 = vadd.f32 0.0, %v3138
      %3140 = vmatmul.f32.gmra.mxu0 %v3026
      %v3141 = vpop.f32.mrf.mxu0
      %v3142 = vadd.f32 0.0, %v3141
      %3143 = vmatmul.f32.gmra.mxu0 %v3029
      %v3144 = vpop.f32.mrf.mxu0
      %v3145 = vadd.f32 0.0, %v3144
      %3146 = vmatmul.f32.gmra.mxu0 %v3032
      %v3147 = vpop.f32.mrf.mxu0
      %v3148 = vadd.f32 0.0, %v3147
      %3149 = vmatmul.f32.gmra.mxu0 %v3035
      %v3150 = vpop.f32.mrf.mxu0
      %v3151 = vadd.f32 0.0, %v3150
      %3152 = vmatmul.f32.gmra.mxu0 %v3038
      %v3153 = vpop.f32.mrf.mxu0
      %v3154 = vadd.f32 0.0, %v3153
      %3155 = vmatmul.f32.gmra.mxu0 %v3041
      %v3156 = vpop.f32.mrf.mxu0
      %v3157 = vadd.f32 0.0, %v3156
      %3158 = vmatmul.f32.gmra.mxu0 %v3044
      %v3159 = vpop.f32.mrf.mxu0
      %v3160 = vadd.f32 0.0, %v3159
      %3161 = vmatmul.f32.gmra.mxu0 %v3047
      %v3162 = vpop.f32.mrf.mxu0
      %v3163 = vadd.f32 0.0, %v3162
      %3164 = vdwg.mxu0
      %v3166 = vsel %vm225, %v2886, 0
      %v3169 = vsel %vm225, %v2887, 0
      %v3172 = vsel %vm225, %v2888, 0
      %v3175 = vsel %vm225, %v2889, 0
      %v3178 = vsel %vm225, %v2890, 0
      %v3181 = vsel %vm225, %v2891, 0
      %v3184 = vsel %vm225, %v2892, 0
      %v3187 = vsel %vm225, %v2893, 0
      %v3190 = vsel %vm225, %v2894, 0
      %v3193 = vsel %vm225, %v2895, 0
      %v3196 = vsel %vm225, %v2896, 0
      %v3199 = vsel %vm225, %v2897, 0
      %v3202 = vsel %vm225, %v2898, 0
      %v3205 = vsel %vm225, %v2899, 0
      %v3208 = vsel %vm225, %v2900, 0
      %v3211 = vsel %vm225, %v2901, 0
      %v3214 = vsel %vm225, %v2902, 0
      %v3217 = vsel %vm225, %v2903, 0
      %v3220 = vsel %vm225, %v2904, 0
      %v3223 = vsel %vm225, %v2905, 0
      %v3226 = vsel %vm225, %v2906, 0
      %v3229 = vsel %vm225, %v2907, 0
      %v3232 = vsel %vm225, %v2908, 0
      %v3235 = vsel %vm225, %v2909, 0
      %v3238 = vsel %vm225, %v2910, 0
      %v3241 = vsel %vm225, %v2911, 0
      %v3244 = vsel %vm225, %v2912, 0
      %v3247 = vsel %vm225, %v2913, 0
      %v3250 = vsel %vm225, %v2914, 0
      %v3253 = vsel %vm225, %v2915, 0
      %v3256 = vsel %vm225, %v2916, 0
      %v3259 = vsel %vm225, %v2917, 0
      %v3262 = vsel %vm511, %v2918, 0
      %3264 = vmatpush.msra.mxu0 0.0
      %3265 = vmatpush.msra.mxu0 0.0
      %3266 = vmatpush.msra.mxu0 0.0
      %3267 = vmatpush.msra.mxu0 0.0
      %3268 = vmatpush.msra.mxu0 0.0
      %3269 = vmatpush.msra.mxu0 0.0
      %3270 = vmatpush.msra.mxu0 0.0
      %3271 = vmatpush.msra.mxu0 0.0
      %3272 = vmatpush.msra.mxu0 0.0
      %3273 = vmatpush.msra.mxu0 0.0
      %3274 = vmatpush.msra.mxu0 0.0
      %3275 = vmatpush.msra.mxu0 0.0
      %3276 = vmatpush.msra.mxu0 0.0
      %3277 = vmatpush.msra.mxu0 0.0
      %3278 = vmatpush.msra.mxu0 0.0
      %3279 = vmatpush.msra.mxu0 %v3262
      %3280 = vmatmul.f32.gmra.mxu0 %v3166
      %v3281 = vpop.f32.mrf.mxu0
      %v3282 = vadd.f32 %v3070, %v3281
      %3283 = vmatmul.f32.gmra.mxu0 %v3169
      %v3284 = vpop.f32.mrf.mxu0
      %v3285 = vadd.f32 %v3073, %v3284
      %3286 = vmatmul.f32.gmra.mxu0 %v3172
      %v3287 = vpop.f32.mrf.mxu0
      %v3288 = vadd.f32 %v3076, %v3287
      %3289 = vmatmul.f32.gmra.mxu0 %v3175
      %v3290 = vpop.f32.mrf.mxu0
      %v3291 = vadd.f32 %v3079, %v3290
      %3292 = vmatmul.f32.gmra.mxu0 %v3178
      %v3293 = vpop.f32.mrf.mxu0
      %v3294 = vadd.f32 %v3082, %v3293
      %3295 = vmatmul.f32.gmra.mxu0 %v3181
      %v3296 = vpop.f32.mrf.mxu0
      %v3297 = vadd.f32 %v3085, %v3296
      %3298 = vmatmul.f32.gmra.mxu0 %v3184
      %v3299 = vpop.f32.mrf.mxu0
      %v3300 = vadd.f32 %v3088, %v3299
      %3301 = vmatmul.f32.gmra.mxu0 %v3187
      %v3302 = vpop.f32.mrf.mxu0
      %v3303 = vadd.f32 %v3091, %v3302
      %3304 = vmatmul.f32.gmra.mxu0 %v3190
      %v3305 = vpop.f32.mrf.mxu0
      %v3306 = vadd.f32 %v3094, %v3305
      %3307 = vmatmul.f32.gmra.mxu0 %v3193
      %v3308 = vpop.f32.mrf.mxu0
      %v3309 = vadd.f32 %v3097, %v3308
      %3310 = vmatmul.f32.gmra.mxu0 %v3196
      %v3311 = vpop.f32.mrf.mxu0
      %v3312 = vadd.f32 %v3100, %v3311
      %3313 = vmatmul.f32.gmra.mxu0 %v3199
      %v3314 = vpop.f32.mrf.mxu0
      %v3315 = vadd.f32 %v3103, %v3314
      %3316 = vmatmul.f32.gmra.mxu0 %v3202
      %v3317 = vpop.f32.mrf.mxu0
      %v3318 = vadd.f32 %v3106, %v3317
      %3319 = vmatmul.f32.gmra.mxu0 %v3205
      %v3320 = vpop.f32.mrf.mxu0
      %v3321 = vadd.f32 %v3109, %v3320
      %3322 = vmatmul.f32.gmra.mxu0 %v3208
      %v3323 = vpop.f32.mrf.mxu0
      %v3324 = vadd.f32 %v3112, %v3323
      %3325 = vmatmul.f32.gmra.mxu0 %v3211
      %v3326 = vpop.f32.mrf.mxu0
      %v3327 = vadd.f32 %v3115, %v3326
      %3328 = vmatmul.f32.gmra.mxu0 %v3214
      %v3329 = vpop.f32.mrf.mxu0
      %v3330 = vadd.f32 %v3118, %v3329
      %3331 = vmatmul.f32.gmra.mxu0 %v3217
      %v3332 = vpop.f32.mrf.mxu0
      %v3333 = vadd.f32 %v3121, %v3332
      %3334 = vmatmul.f32.gmra.mxu0 %v3220
      %v3335 = vpop.f32.mrf.mxu0
      %v3336 = vadd.f32 %v3124, %v3335
      %3337 = vmatmul.f32.gmra.mxu0 %v3223
      %v3338 = vpop.f32.mrf.mxu0
      %v3339 = vadd.f32 %v3127, %v3338
      %3340 = vmatmul.f32.gmra.mxu0 %v3226
      %v3341 = vpop.f32.mrf.mxu0
      %v3342 = vadd.f32 %v3130, %v3341
      %3343 = vmatmul.f32.gmra.mxu0 %v3229
      %v3344 = vpop.f32.mrf.mxu0
      %v3345 = vadd.f32 %v3133, %v3344
      %3346 = vmatmul.f32.gmra.mxu0 %v3232
      %v3347 = vpop.f32.mrf.mxu0
      %v3348 = vadd.f32 %v3136, %v3347
      %3349 = vmatmul.f32.gmra.mxu0 %v3235
      %v3350 = vpop.f32.mrf.mxu0
      %v3351 = vadd.f32 %v3139, %v3350
      %3352 = vmatmul.f32.gmra.mxu0 %v3238
      %v3353 = vpop.f32.mrf.mxu0
      %v3354 = vadd.f32 %v3142, %v3353
      %3355 = vmatmul.f32.gmra.mxu0 %v3241
      %v3356 = vpop.f32.mrf.mxu0
      %v3357 = vadd.f32 %v3145, %v3356
      %3358 = vmatmul.f32.gmra.mxu0 %v3244
      %v3359 = vpop.f32.mrf.mxu0
      %v3360 = vadd.f32 %v3148, %v3359
      %3361 = vmatmul.f32.gmra.mxu0 %v3247
      %v3362 = vpop.f32.mrf.mxu0
      %v3363 = vadd.f32 %v3151, %v3362
      %3364 = vmatmul.f32.gmra.mxu0 %v3250
      %v3365 = vpop.f32.mrf.mxu0
      %v3366 = vadd.f32 %v3154, %v3365
      %3367 = vmatmul.f32.gmra.mxu0 %v3253
      %v3368 = vpop.f32.mrf.mxu0
      %v3369 = vadd.f32 %v3157, %v3368
      %3370 = vmatmul.f32.gmra.mxu0 %v3256
      %v3371 = vpop.f32.mrf.mxu0
      %v3372 = vadd.f32 %v3160, %v3371
      %3373 = vmatmul.f32.gmra.mxu0 %v3259
      %v3374 = vpop.f32.mrf.mxu0
      %v3375 = vadd.f32 %v3163, %v3374
      %3376 = vdwg.mxu0
      %v3377 = vld [vmem:[#allocation2 + $0x2] sm:$0xff]
      %v3378 = vld [vmem:[#allocation2 + $0xa] sm:$0xff]
      %v3379 = vld [vmem:[#allocation2 + $0x1a] sm:$0xff]
      %v3380 = vld [vmem:[#allocation2 + $0x22] sm:$0xff]
      %v3381 = vld [vmem:[#allocation2 + $0x32] sm:$0xff]
      %v3382 = vld [vmem:[#allocation2 + $0x3a] sm:$0xff]
      %v3383 = vld [vmem:[#allocation2 + $0x4a] sm:$0xff]
      %v3384 = vld [vmem:[#allocation2 + $0x52] sm:$0xff]
      %v3385 = vld [vmem:[#allocation2 + $0x62] sm:$0xff]
      %v3386 = vld [vmem:[#allocation2 + $0x6a] sm:$0xff]
      %v3387 = vld [vmem:[#allocation2 + $0x7a] sm:$0xff]
      %v3388 = vld [vmem:[#allocation2 + $0x82] sm:$0xff]
      %v3389 = vld [vmem:[#allocation2 + $0x92] sm:$0xff]
      %v3390 = vld [vmem:[#allocation2 + $0x9a] sm:$0xff]
      %v3391 = vld [vmem:[#allocation2 + $0xaa] sm:$0xff]
      %v3392 = vld [vmem:[#allocation2 + $0xb2] sm:$0xff]
      %v3393 = vld [vmem:[#allocation2 + $0xc2] sm:$0xff]
      %v3394 = vld [vmem:[#allocation2 + $0xca] sm:$0xff]
      %v3395 = vld [vmem:[#allocation2 + $0xda] sm:$0xff]
      %v3396 = vld [vmem:[#allocation2 + $0xe2] sm:$0xff]
      %v3397 = vld [vmem:[#allocation2 + $0xf2] sm:$0xff]
      %v3398 = vld [vmem:[#allocation2 + $0xfa] sm:$0xff]
      %v3399 = vld [vmem:[#allocation2 + $0x10a] sm:$0xff]
      %v3400 = vld [vmem:[#allocation2 + $0x112] sm:$0xff]
      %v3401 = vld [vmem:[#allocation2 + $0x122] sm:$0xff]
      %v3402 = vld [vmem:[#allocation2 + $0x12a] sm:$0xff]
      %v3403 = vld [vmem:[#allocation2 + $0x13a] sm:$0xff]
      %v3404 = vld [vmem:[#allocation2 + $0x142] sm:$0xff]
      %v3405 = vld [vmem:[#allocation2 + $0x152] sm:$0xff]
      %v3406 = vld [vmem:[#allocation2 + $0x15a] sm:$0xff]
      %v3407 = vld [vmem:[#allocation2 + $0x16a] sm:$0xff]
      %v3408 = vld [vmem:[#allocation2 + $0x172] sm:$0xff]
      %s3409 = scalar_lea.vmem %s3, 8
      %v3410 = vld [vmem:[%s3409] sm:$0xf]
      %v3412 = vsel %vm225, %v3377, 0
      %v3415 = vsel %vm225, %v3378, 0
      %v3418 = vsel %vm225, %v3379, 0
      %v3421 = vsel %vm225, %v3380, 0
      %v3424 = vsel %vm225, %v3381, 0
      %v3427 = vsel %vm225, %v3382, 0
      %v3430 = vsel %vm225, %v3383, 0
      %v3433 = vsel %vm225, %v3384, 0
      %v3436 = vsel %vm225, %v3385, 0
      %v3439 = vsel %vm225, %v3386, 0
      %v3442 = vsel %vm225, %v3387, 0
      %v3445 = vsel %vm225, %v3388, 0
      %v3448 = vsel %vm225, %v3389, 0
      %v3451 = vsel %vm225, %v3390, 0
      %v3454 = vsel %vm225, %v3391, 0
      %v3457 = vsel %vm225, %v3392, 0
      %v3460 = vsel %vm225, %v3393, 0
      %v3463 = vsel %vm225, %v3394, 0
      %v3466 = vsel %vm225, %v3395, 0
      %v3469 = vsel %vm225, %v3396, 0
      %v3472 = vsel %vm225, %v3397, 0
      %v3475 = vsel %vm225, %v3398, 0
      %v3478 = vsel %vm225, %v3399, 0
      %v3481 = vsel %vm225, %v3400, 0
      %v3484 = vsel %vm225, %v3401, 0
      %v3487 = vsel %vm225, %v3402, 0
      %v3490 = vsel %vm225, %v3403, 0
      %v3493 = vsel %vm225, %v3404, 0
      %v3496 = vsel %vm225, %v3405, 0
      %v3499 = vsel %vm225, %v3406, 0
      %v3502 = vsel %vm225, %v3407, 0
      %v3505 = vsel %vm225, %v3408, 0
      %v3508 = vsel %vm511, %v3410, 0
      %3510 = vmatpush.msra.mxu0 0.0
      %3511 = vmatpush.msra.mxu0 0.0
      %3512 = vmatpush.msra.mxu0 0.0
      %3513 = vmatpush.msra.mxu0 0.0
      %3514 = vmatpush.msra.mxu0 0.0
      %3515 = vmatpush.msra.mxu0 0.0
      %3516 = vmatpush.msra.mxu0 0.0
      %3517 = vmatpush.msra.mxu0 0.0
      %3518 = vmatpush.msra.mxu0 0.0
      %3519 = vmatpush.msra.mxu0 0.0
      %3520 = vmatpush.msra.mxu0 0.0
      %3521 = vmatpush.msra.mxu0 0.0
      %3522 = vmatpush.msra.mxu0 0.0
      %3523 = vmatpush.msra.mxu0 0.0
      %3524 = vmatpush.msra.mxu0 0.0
      %3525 = vmatpush.msra.mxu0 %v3508
      %3526 = vmatmul.f32.gmra.mxu0 %v3412
      %v3527 = vpop.f32.mrf.mxu0
      %v3528 = vadd.f32 0.0, %v3527
      %3529 = vmatmul.f32.gmra.mxu0 %v3415
      %v3530 = vpop.f32.mrf.mxu0
      %v3531 = vadd.f32 0.0, %v3530
      %3532 = vmatmul.f32.gmra.mxu0 %v3418
      %v3533 = vpop.f32.mrf.mxu0
      %v3534 = vadd.f32 0.0, %v3533
      %3535 = vmatmul.f32.gmra.mxu0 %v3421
      %v3536 = vpop.f32.mrf.mxu0
      %v3537 = vadd.f32 0.0, %v3536
      %3538 = vmatmul.f32.gmra.mxu0 %v3424
      %v3539 = vpop.f32.mrf.mxu0
      %v3540 = vadd.f32 0.0, %v3539
      %3541 = vmatmul.f32.gmra.mxu0 %v3427
      %v3542 = vpop.f32.mrf.mxu0
      %v3543 = vadd.f32 0.0, %v3542
      %3544 = vmatmul.f32.gmra.mxu0 %v3430
      %v3545 = vpop.f32.mrf.mxu0
      %v3546 = vadd.f32 0.0, %v3545
      %3547 = vmatmul.f32.gmra.mxu0 %v3433
      %v3548 = vpop.f32.mrf.mxu0
      %v3549 = vadd.f32 0.0, %v3548
      %3550 = vmatmul.f32.gmra.mxu0 %v3436
      %v3551 = vpop.f32.mrf.mxu0
      %v3552 = vadd.f32 0.0, %v3551
      %3553 = vmatmul.f32.gmra.mxu0 %v3439
      %v3554 = vpop.f32.mrf.mxu0
      %v3555 = vadd.f32 0.0, %v3554
      %3556 = vmatmul.f32.gmra.mxu0 %v3442
      %v3557 = vpop.f32.mrf.mxu0
      %v3558 = vadd.f32 0.0, %v3557
      %3559 = vmatmul.f32.gmra.mxu0 %v3445
      %v3560 = vpop.f32.mrf.mxu0
      %v3561 = vadd.f32 0.0, %v3560
      %3562 = vmatmul.f32.gmra.mxu0 %v3448
      %v3563 = vpop.f32.mrf.mxu0
      %v3564 = vadd.f32 0.0, %v3563
      %3565 = vmatmul.f32.gmra.mxu0 %v3451
      %v3566 = vpop.f32.mrf.mxu0
      %v3567 = vadd.f32 0.0, %v3566
      %3568 = vmatmul.f32.gmra.mxu0 %v3454
      %v3569 = vpop.f32.mrf.mxu0
      %v3570 = vadd.f32 0.0, %v3569
      %3571 = vmatmul.f32.gmra.mxu0 %v3457
      %v3572 = vpop.f32.mrf.mxu0
      %v3573 = vadd.f32 0.0, %v3572
      %3574 = vmatmul.f32.gmra.mxu0 %v3460
      %v3575 = vpop.f32.mrf.mxu0
      %v3576 = vadd.f32 0.0, %v3575
      %3577 = vmatmul.f32.gmra.mxu0 %v3463
      %v3578 = vpop.f32.mrf.mxu0
      %v3579 = vadd.f32 0.0, %v3578
      %3580 = vmatmul.f32.gmra.mxu0 %v3466
      %v3581 = vpop.f32.mrf.mxu0
      %v3582 = vadd.f32 0.0, %v3581
      %3583 = vmatmul.f32.gmra.mxu0 %v3469
      %v3584 = vpop.f32.mrf.mxu0
      %v3585 = vadd.f32 0.0, %v3584
      %3586 = vmatmul.f32.gmra.mxu0 %v3472
      %v3587 = vpop.f32.mrf.mxu0
      %v3588 = vadd.f32 0.0, %v3587
      %3589 = vmatmul.f32.gmra.mxu0 %v3475
      %v3590 = vpop.f32.mrf.mxu0
      %v3591 = vadd.f32 0.0, %v3590
      %3592 = vmatmul.f32.gmra.mxu0 %v3478
      %v3593 = vpop.f32.mrf.mxu0
      %v3594 = vadd.f32 0.0, %v3593
      %3595 = vmatmul.f32.gmra.mxu0 %v3481
      %v3596 = vpop.f32.mrf.mxu0
      %v3597 = vadd.f32 0.0, %v3596
      %3598 = vmatmul.f32.gmra.mxu0 %v3484
      %v3599 = vpop.f32.mrf.mxu0
      %v3600 = vadd.f32 0.0, %v3599
      %3601 = vmatmul.f32.gmra.mxu0 %v3487
      %v3602 = vpop.f32.mrf.mxu0
      %v3603 = vadd.f32 0.0, %v3602
      %3604 = vmatmul.f32.gmra.mxu0 %v3490
      %v3605 = vpop.f32.mrf.mxu0
      %v3606 = vadd.f32 0.0, %v3605
      %3607 = vmatmul.f32.gmra.mxu0 %v3493
      %v3608 = vpop.f32.mrf.mxu0
      %v3609 = vadd.f32 0.0, %v3608
      %3610 = vmatmul.f32.gmra.mxu0 %v3496
      %v3611 = vpop.f32.mrf.mxu0
      %v3612 = vadd.f32 0.0, %v3611
      %3613 = vmatmul.f32.gmra.mxu0 %v3499
      %v3614 = vpop.f32.mrf.mxu0
      %v3615 = vadd.f32 0.0, %v3614
      %3616 = vmatmul.f32.gmra.mxu0 %v3502
      %v3617 = vpop.f32.mrf.mxu0
      %v3618 = vadd.f32 0.0, %v3617
      %3619 = vmatmul.f32.gmra.mxu0 %v3505
      %v3620 = vpop.f32.mrf.mxu0
      %v3621 = vadd.f32 0.0, %v3620
      %3622 = vdwg.mxu0
      %v3623 = vadd.f32 %v3282, %v3528
      %v3624 = vadd.f32 %v3285, %v3531
      %v3625 = vadd.f32 %v3288, %v3534
      %v3626 = vadd.f32 %v3291, %v3537
      %v3627 = vadd.f32 %v3294, %v3540
      %v3628 = vadd.f32 %v3297, %v3543
      %v3629 = vadd.f32 %v3300, %v3546
      %v3630 = vadd.f32 %v3303, %v3549
      %v3631 = vadd.f32 %v3306, %v3552
      %v3632 = vadd.f32 %v3309, %v3555
      %v3633 = vadd.f32 %v3312, %v3558
      %v3634 = vadd.f32 %v3315, %v3561
      %v3635 = vadd.f32 %v3318, %v3564
      %v3636 = vadd.f32 %v3321, %v3567
      %v3637 = vadd.f32 %v3324, %v3570
      %v3638 = vadd.f32 %v3327, %v3573
      %v3639 = vadd.f32 %v3330, %v3576
      %v3640 = vadd.f32 %v3333, %v3579
      %v3641 = vadd.f32 %v3336, %v3582
      %v3642 = vadd.f32 %v3339, %v3585
      %v3643 = vadd.f32 %v3342, %v3588
      %v3644 = vadd.f32 %v3345, %v3591
      %v3645 = vadd.f32 %v3348, %v3594
      %v3646 = vadd.f32 %v3351, %v3597
      %v3647 = vadd.f32 %v3354, %v3600
      %v3648 = vadd.f32 %v3357, %v3603
      %v3649 = vadd.f32 %v3360, %v3606
      %v3650 = vadd.f32 %v3363, %v3609
      %v3651 = vadd.f32 %v3366, %v3612
      %v3652 = vadd.f32 %v3369, %v3615
      %v3653 = vadd.f32 %v3372, %v3618
      %v3654 = vadd.f32 %v3375, %v3621
      %v3655 = vld [vmem:[%s315] sm:$0xff]
      %v3656 = vld [vmem:[%s315 + $0x8] sm:$0xff]
      %v3657 = vld [vmem:[%s315 + $0x18] sm:$0xff]
      %v3658 = vld [vmem:[%s315 + $0x20] sm:$0xff]
      %v3659 = vld [vmem:[%s315 + $0x30] sm:$0xff]
      %v3660 = vld [vmem:[%s315 + $0x38] sm:$0xff]
      %v3661 = vld [vmem:[%s315 + $0x48] sm:$0xff]
      %v3662 = vld [vmem:[%s315 + $0x50] sm:$0xff]
      %v3663 = vld [vmem:[%s315 + $0x60] sm:$0xff]
      %v3664 = vld [vmem:[%s315 + $0x68] sm:$0xff]
      %v3665 = vld [vmem:[%s315 + $0x78] sm:$0xff]
      %v3666 = vld [vmem:[%s315 + $0x80] sm:$0xff]
      %v3667 = vld [vmem:[%s315 + $0x90] sm:$0xff]
      %v3668 = vld [vmem:[%s315 + $0x98] sm:$0xff]
      %v3669 = vld [vmem:[%s315 + $0xa8] sm:$0xff]
      %v3670 = vld [vmem:[%s315 + $0xb0] sm:$0xff]
      %v3671 = vld [vmem:[%s315 + $0xc0] sm:$0xff]
      %v3672 = vld [vmem:[%s315 + $0xc8] sm:$0xff]
      %v3673 = vld [vmem:[%s315 + $0xd8] sm:$0xff]
      %v3674 = vld [vmem:[%s315 + $0xe0] sm:$0xff]
      %v3675 = vld [vmem:[%s315 + $0xf0] sm:$0xff]
      %v3676 = vld [vmem:[%s315 + $0xf8] sm:$0xff]
      %v3677 = vld [vmem:[%s315 + $0x108] sm:$0xff]
      %v3678 = vld [vmem:[%s315 + $0x110] sm:$0xff]
      %v3679 = vld [vmem:[%s315 + $0x120] sm:$0xff]
      %v3680 = vld [vmem:[%s315 + $0x128] sm:$0xff]
      %v3681 = vld [vmem:[%s315 + $0x138] sm:$0xff]
      %v3682 = vld [vmem:[%s315 + $0x140] sm:$0xff]
      %v3683 = vld [vmem:[%s315 + $0x150] sm:$0xff]
      %v3684 = vld [vmem:[%s315 + $0x158] sm:$0xff]
      %v3685 = vld [vmem:[%s315 + $0x168] sm:$0xff]
      %v3686 = vld [vmem:[%s315 + $0x170] sm:$0xff]
      %s3687 = scalar_lea.vmem %s3, 12
      %v3688 = vld [vmem:[%s3687] sm:$0xf]
      %v3690 = vsel %vm225, %v3655, 0
      %v3693 = vsel %vm225, %v3656, 0
      %v3696 = vsel %vm225, %v3657, 0
      %v3699 = vsel %vm225, %v3658, 0
      %v3702 = vsel %vm225, %v3659, 0
      %v3705 = vsel %vm225, %v3660, 0
      %v3708 = vsel %vm225, %v3661, 0
      %v3711 = vsel %vm225, %v3662, 0
      %v3714 = vsel %vm225, %v3663, 0
      %v3717 = vsel %vm225, %v3664, 0
      %v3720 = vsel %vm225, %v3665, 0
      %v3723 = vsel %vm225, %v3666, 0
      %v3726 = vsel %vm225, %v3667, 0
      %v3729 = vsel %vm225, %v3668, 0
      %v3732 = vsel %vm225, %v3669, 0
      %v3735 = vsel %vm225, %v3670, 0
      %v3738 = vsel %vm225, %v3671, 0
      %v3741 = vsel %vm225, %v3672, 0
      %v3744 = vsel %vm225, %v3673, 0
      %v3747 = vsel %vm225, %v3674, 0
      %v3750 = vsel %vm225, %v3675, 0
      %v3753 = vsel %vm225, %v3676, 0
      %v3756 = vsel %vm225, %v3677, 0
      %v3759 = vsel %vm225, %v3678, 0
      %v3762 = vsel %vm225, %v3679, 0
      %v3765 = vsel %vm225, %v3680, 0
      %v3768 = vsel %vm225, %v3681, 0
      %v3771 = vsel %vm225, %v3682, 0
      %v3774 = vsel %vm225, %v3683, 0
      %v3777 = vsel %vm225, %v3684, 0
      %v3780 = vsel %vm225, %v3685, 0
      %v3783 = vsel %vm225, %v3686, 0
      %v3786 = vsel %vm511, %v3688, 0
      %3788 = vmatpush.msra.mxu0 0.0
      %3789 = vmatpush.msra.mxu0 0.0
      %3790 = vmatpush.msra.mxu0 0.0
      %3791 = vmatpush.msra.mxu0 0.0
      %3792 = vmatpush.msra.mxu0 0.0
      %3793 = vmatpush.msra.mxu0 0.0
      %3794 = vmatpush.msra.mxu0 0.0
      %3795 = vmatpush.msra.mxu0 0.0
      %3796 = vmatpush.msra.mxu0 0.0
      %3797 = vmatpush.msra.mxu0 0.0
      %3798 = vmatpush.msra.mxu0 0.0
      %3799 = vmatpush.msra.mxu0 0.0
      %3800 = vmatpush.msra.mxu0 0.0
      %3801 = vmatpush.msra.mxu0 0.0
      %3802 = vmatpush.msra.mxu0 0.0
      %3803 = vmatpush.msra.mxu0 %v3786
      %3804 = vmatmul.f32.gmra.mxu0 %v3690
      %v3805 = vpop.f32.mrf.mxu0
      %v3806 = vadd.f32 0.0, %v3805
      %3807 = vmatmul.f32.gmra.mxu0 %v3693
      %v3808 = vpop.f32.mrf.mxu0
      %v3809 = vadd.f32 0.0, %v3808
      %3810 = vmatmul.f32.gmra.mxu0 %v3696
      %v3811 = vpop.f32.mrf.mxu0
      %v3812 = vadd.f32 0.0, %v3811
      %3813 = vmatmul.f32.gmra.mxu0 %v3699
      %v3814 = vpop.f32.mrf.mxu0
      %v3815 = vadd.f32 0.0, %v3814
      %3816 = vmatmul.f32.gmra.mxu0 %v3702
      %v3817 = vpop.f32.mrf.mxu0
      %v3818 = vadd.f32 0.0, %v3817
      %3819 = vmatmul.f32.gmra.mxu0 %v3705
      %v3820 = vpop.f32.mrf.mxu0
      %v3821 = vadd.f32 0.0, %v3820
      %3822 = vmatmul.f32.gmra.mxu0 %v3708
      %v3823 = vpop.f32.mrf.mxu0
      %v3824 = vadd.f32 0.0, %v3823
      %3825 = vmatmul.f32.gmra.mxu0 %v3711
      %v3826 = vpop.f32.mrf.mxu0
      %v3827 = vadd.f32 0.0, %v3826
      %3828 = vmatmul.f32.gmra.mxu0 %v3714
      %v3829 = vpop.f32.mrf.mxu0
      %v3830 = vadd.f32 0.0, %v3829
      %3831 = vmatmul.f32.gmra.mxu0 %v3717
      %v3832 = vpop.f32.mrf.mxu0
      %v3833 = vadd.f32 0.0, %v3832
      %3834 = vmatmul.f32.gmra.mxu0 %v3720
      %v3835 = vpop.f32.mrf.mxu0
      %v3836 = vadd.f32 0.0, %v3835
      %3837 = vmatmul.f32.gmra.mxu0 %v3723
      %v3838 = vpop.f32.mrf.mxu0
      %v3839 = vadd.f32 0.0, %v3838
      %3840 = vmatmul.f32.gmra.mxu0 %v3726
      %v3841 = vpop.f32.mrf.mxu0
      %v3842 = vadd.f32 0.0, %v3841
      %3843 = vmatmul.f32.gmra.mxu0 %v3729
      %v3844 = vpop.f32.mrf.mxu0
      %v3845 = vadd.f32 0.0, %v3844
      %3846 = vmatmul.f32.gmra.mxu0 %v3732
      %v3847 = vpop.f32.mrf.mxu0
      %v3848 = vadd.f32 0.0, %v3847
      %3849 = vmatmul.f32.gmra.mxu0 %v3735
      %v3850 = vpop.f32.mrf.mxu0
      %v3851 = vadd.f32 0.0, %v3850
      %3852 = vmatmul.f32.gmra.mxu0 %v3738
      %v3853 = vpop.f32.mrf.mxu0
      %v3854 = vadd.f32 0.0, %v3853
      %3855 = vmatmul.f32.gmra.mxu0 %v3741
      %v3856 = vpop.f32.mrf.mxu0
      %v3857 = vadd.f32 0.0, %v3856
      %3858 = vmatmul.f32.gmra.mxu0 %v3744
      %v3859 = vpop.f32.mrf.mxu0
      %v3860 = vadd.f32 0.0, %v3859
      %3861 = vmatmul.f32.gmra.mxu0 %v3747
      %v3862 = vpop.f32.mrf.mxu0
      %v3863 = vadd.f32 0.0, %v3862
      %3864 = vmatmul.f32.gmra.mxu0 %v3750
      %v3865 = vpop.f32.mrf.mxu0
      %v3866 = vadd.f32 0.0, %v3865
      %3867 = vmatmul.f32.gmra.mxu0 %v3753
      %v3868 = vpop.f32.mrf.mxu0
      %v3869 = vadd.f32 0.0, %v3868
      %3870 = vmatmul.f32.gmra.mxu0 %v3756
      %v3871 = vpop.f32.mrf.mxu0
      %v3872 = vadd.f32 0.0, %v3871
      %3873 = vmatmul.f32.gmra.mxu0 %v3759
      %v3874 = vpop.f32.mrf.mxu0
      %v3875 = vadd.f32 0.0, %v3874
      %3876 = vmatmul.f32.gmra.mxu0 %v3762
      %v3877 = vpop.f32.mrf.mxu0
      %v3878 = vadd.f32 0.0, %v3877
      %3879 = vmatmul.f32.gmra.mxu0 %v3765
      %v3880 = vpop.f32.mrf.mxu0
      %v3881 = vadd.f32 0.0, %v3880
      %3882 = vmatmul.f32.gmra.mxu0 %v3768
      %v3883 = vpop.f32.mrf.mxu0
      %v3884 = vadd.f32 0.0, %v3883
      %3885 = vmatmul.f32.gmra.mxu0 %v3771
      %v3886 = vpop.f32.mrf.mxu0
      %v3887 = vadd.f32 0.0, %v3886
      %3888 = vmatmul.f32.gmra.mxu0 %v3774
      %v3889 = vpop.f32.mrf.mxu0
      %v3890 = vadd.f32 0.0, %v3889
      %3891 = vmatmul.f32.gmra.mxu0 %v3777
      %v3892 = vpop.f32.mrf.mxu0
      %v3893 = vadd.f32 0.0, %v3892
      %3894 = vmatmul.f32.gmra.mxu0 %v3780
      %v3895 = vpop.f32.mrf.mxu0
      %v3896 = vadd.f32 0.0, %v3895
      %3897 = vmatmul.f32.gmra.mxu0 %v3783
      %v3898 = vpop.f32.mrf.mxu0
      %v3899 = vadd.f32 0.0, %v3898
      %3900 = vdwg.mxu0
      %v3901 = vadd.f32 %v3623, %v3806
      %v3902 = vadd.f32 %v3624, %v3809
      %v3903 = vadd.f32 %v3625, %v3812
      %v3904 = vadd.f32 %v3626, %v3815
      %v3905 = vadd.f32 %v3627, %v3818
      %v3906 = vadd.f32 %v3628, %v3821
      %v3907 = vadd.f32 %v3629, %v3824
      %v3908 = vadd.f32 %v3630, %v3827
      %v3909 = vadd.f32 %v3631, %v3830
      %v3910 = vadd.f32 %v3632, %v3833
      %v3911 = vadd.f32 %v3633, %v3836
      %v3912 = vadd.f32 %v3634, %v3839
      %v3913 = vadd.f32 %v3635, %v3842
      %v3914 = vadd.f32 %v3636, %v3845
      %v3915 = vadd.f32 %v3637, %v3848
      %v3916 = vadd.f32 %v3638, %v3851
      %v3917 = vadd.f32 %v3639, %v3854
      %v3918 = vadd.f32 %v3640, %v3857
      %v3919 = vadd.f32 %v3641, %v3860
      %v3920 = vadd.f32 %v3642, %v3863
      %v3921 = vadd.f32 %v3643, %v3866
      %v3922 = vadd.f32 %v3644, %v3869
      %v3923 = vadd.f32 %v3645, %v3872
      %v3924 = vadd.f32 %v3646, %v3875
      %v3925 = vadd.f32 %v3647, %v3878
      %v3926 = vadd.f32 %v3648, %v3881
      %v3927 = vadd.f32 %v3649, %v3884
      %v3928 = vadd.f32 %v3650, %v3887
      %v3929 = vadd.f32 %v3651, %v3890
      %v3930 = vadd.f32 %v3652, %v3893
      %v3931 = vadd.f32 %v3653, %v3896
      %v3932 = vadd.f32 %v3654, %v3899
      %v3933 = vld [vmem:[%s315 + $0x1] sm:$0xff]
      %v3934 = vld [vmem:[%s315 + $0x9] sm:$0xff]
      %v3935 = vld [vmem:[%s315 + $0x19] sm:$0xff]
      %v3936 = vld [vmem:[%s315 + $0x21] sm:$0xff]
      %v3937 = vld [vmem:[%s315 + $0x31] sm:$0xff]
      %v3938 = vld [vmem:[%s315 + $0x39] sm:$0xff]
      %v3939 = vld [vmem:[%s315 + $0x49] sm:$0xff]
      %v3940 = vld [vmem:[%s315 + $0x51] sm:$0xff]
      %v3941 = vld [vmem:[%s315 + $0x61] sm:$0xff]
      %v3942 = vld [vmem:[%s315 + $0x69] sm:$0xff]
      %v3943 = vld [vmem:[%s315 + $0x79] sm:$0xff]
      %v3944 = vld [vmem:[%s315 + $0x81] sm:$0xff]
      %v3945 = vld [vmem:[%s315 + $0x91] sm:$0xff]
      %v3946 = vld [vmem:[%s315 + $0x99] sm:$0xff]
      %v3947 = vld [vmem:[%s315 + $0xa9] sm:$0xff]
      %v3948 = vld [vmem:[%s315 + $0xb1] sm:$0xff]
      %v3949 = vld [vmem:[%s315 + $0xc1] sm:$0xff]
      %v3950 = vld [vmem:[%s315 + $0xc9] sm:$0xff]
      %v3951 = vld [vmem:[%s315 + $0xd9] sm:$0xff]
      %v3952 = vld [vmem:[%s315 + $0xe1] sm:$0xff]
      %v3953 = vld [vmem:[%s315 + $0xf1] sm:$0xff]
      %v3954 = vld [vmem:[%s315 + $0xf9] sm:$0xff]
      %v3955 = vld [vmem:[%s315 + $0x109] sm:$0xff]
      %v3956 = vld [vmem:[%s315 + $0x111] sm:$0xff]
      %v3957 = vld [vmem:[%s315 + $0x121] sm:$0xff]
      %v3958 = vld [vmem:[%s315 + $0x129] sm:$0xff]
      %v3959 = vld [vmem:[%s315 + $0x139] sm:$0xff]
      %v3960 = vld [vmem:[%s315 + $0x141] sm:$0xff]
      %v3961 = vld [vmem:[%s315 + $0x151] sm:$0xff]
      %v3962 = vld [vmem:[%s315 + $0x159] sm:$0xff]
      %v3963 = vld [vmem:[%s315 + $0x169] sm:$0xff]
      %v3964 = vld [vmem:[%s315 + $0x171] sm:$0xff]
      %s3965 = scalar_lea.vmem %s3, 16
      %v3966 = vld [vmem:[%s3965] sm:$0xf]
      %v3968 = vsel %vm225, %v3933, 0
      %v3971 = vsel %vm225, %v3934, 0
      %v3974 = vsel %vm225, %v3935, 0
      %v3977 = vsel %vm225, %v3936, 0
      %v3980 = vsel %vm225, %v3937, 0
      %v3983 = vsel %vm225, %v3938, 0
      %v3986 = vsel %vm225, %v3939, 0
      %v3989 = vsel %vm225, %v3940, 0
      %v3992 = vsel %vm225, %v3941, 0
      %v3995 = vsel %vm225, %v3942, 0
      %v3998 = vsel %vm225, %v3943, 0
      %v4001 = vsel %vm225, %v3944, 0
      %v4004 = vsel %vm225, %v3945, 0
      %v4007 = vsel %vm225, %v3946, 0
      %v4010 = vsel %vm225, %v3947, 0
      %v4013 = vsel %vm225, %v3948, 0
      %v4016 = vsel %vm225, %v3949, 0
      %v4019 = vsel %vm225, %v3950, 0
      %v4022 = vsel %vm225, %v3951, 0
      %v4025 = vsel %vm225, %v3952, 0
      %v4028 = vsel %vm225, %v3953, 0
      %v4031 = vsel %vm225, %v3954, 0
      %v4034 = vsel %vm225, %v3955, 0
      %v4037 = vsel %vm225, %v3956, 0
      %v4040 = vsel %vm225, %v3957, 0
      %v4043 = vsel %vm225, %v3958, 0
      %v4046 = vsel %vm225, %v3959, 0
      %v4049 = vsel %vm225, %v3960, 0
      %v4052 = vsel %vm225, %v3961, 0
      %v4055 = vsel %vm225, %v3962, 0
      %v4058 = vsel %vm225, %v3963, 0
      %v4061 = vsel %vm225, %v3964, 0
      %v4064 = vsel %vm511, %v3966, 0
      %4066 = vmatpush.msra.mxu0 0.0
      %4067 = vmatpush.msra.mxu0 0.0
      %4068 = vmatpush.msra.mxu0 0.0
      %4069 = vmatpush.msra.mxu0 0.0
      %4070 = vmatpush.msra.mxu0 0.0
      %4071 = vmatpush.msra.mxu0 0.0
      %4072 = vmatpush.msra.mxu0 0.0
      %4073 = vmatpush.msra.mxu0 0.0
      %4074 = vmatpush.msra.mxu0 0.0
      %4075 = vmatpush.msra.mxu0 0.0
      %4076 = vmatpush.msra.mxu0 0.0
      %4077 = vmatpush.msra.mxu0 0.0
      %4078 = vmatpush.msra.mxu0 0.0
      %4079 = vmatpush.msra.mxu0 0.0
      %4080 = vmatpush.msra.mxu0 0.0
      %4081 = vmatpush.msra.mxu0 %v4064
      %4082 = vmatmul.f32.gmra.mxu0 %v3968
      %v4083 = vpop.f32.mrf.mxu0
      %v4084 = vadd.f32 0.0, %v4083
      %4085 = vmatmul.f32.gmra.mxu0 %v3971
      %v4086 = vpop.f32.mrf.mxu0
      %v4087 = vadd.f32 0.0, %v4086
      %4088 = vmatmul.f32.gmra.mxu0 %v3974
      %v4089 = vpop.f32.mrf.mxu0
      %v4090 = vadd.f32 0.0, %v4089
      %4091 = vmatmul.f32.gmra.mxu0 %v3977
      %v4092 = vpop.f32.mrf.mxu0
      %v4093 = vadd.f32 0.0, %v4092
      %4094 = vmatmul.f32.gmra.mxu0 %v3980
      %v4095 = vpop.f32.mrf.mxu0
      %v4096 = vadd.f32 0.0, %v4095
      %4097 = vmatmul.f32.gmra.mxu0 %v3983
      %v4098 = vpop.f32.mrf.mxu0
      %v4099 = vadd.f32 0.0, %v4098
      %4100 = vmatmul.f32.gmra.mxu0 %v3986
      %v4101 = vpop.f32.mrf.mxu0
      %v4102 = vadd.f32 0.0, %v4101
      %4103 = vmatmul.f32.gmra.mxu0 %v3989
      %v4104 = vpop.f32.mrf.mxu0
      %v4105 = vadd.f32 0.0, %v4104
      %4106 = vmatmul.f32.gmra.mxu0 %v3992
      %v4107 = vpop.f32.mrf.mxu0
      %v4108 = vadd.f32 0.0, %v4107
      %4109 = vmatmul.f32.gmra.mxu0 %v3995
      %v4110 = vpop.f32.mrf.mxu0
      %v4111 = vadd.f32 0.0, %v4110
      %4112 = vmatmul.f32.gmra.mxu0 %v3998
      %v4113 = vpop.f32.mrf.mxu0
      %v4114 = vadd.f32 0.0, %v4113
      %4115 = vmatmul.f32.gmra.mxu0 %v4001
      %v4116 = vpop.f32.mrf.mxu0
      %v4117 = vadd.f32 0.0, %v4116
      %4118 = vmatmul.f32.gmra.mxu0 %v4004
      %v4119 = vpop.f32.mrf.mxu0
      %v4120 = vadd.f32 0.0, %v4119
      %4121 = vmatmul.f32.gmra.mxu0 %v4007
      %v4122 = vpop.f32.mrf.mxu0
      %v4123 = vadd.f32 0.0, %v4122
      %4124 = vmatmul.f32.gmra.mxu0 %v4010
      %v4125 = vpop.f32.mrf.mxu0
      %v4126 = vadd.f32 0.0, %v4125
      %4127 = vmatmul.f32.gmra.mxu0 %v4013
      %v4128 = vpop.f32.mrf.mxu0
      %v4129 = vadd.f32 0.0, %v4128
      %4130 = vmatmul.f32.gmra.mxu0 %v4016
      %v4131 = vpop.f32.mrf.mxu0
      %v4132 = vadd.f32 0.0, %v4131
      %4133 = vmatmul.f32.gmra.mxu0 %v4019
      %v4134 = vpop.f32.mrf.mxu0
      %v4135 = vadd.f32 0.0, %v4134
      %4136 = vmatmul.f32.gmra.mxu0 %v4022
      %v4137 = vpop.f32.mrf.mxu0
      %v4138 = vadd.f32 0.0, %v4137
      %4139 = vmatmul.f32.gmra.mxu0 %v4025
      %v4140 = vpop.f32.mrf.mxu0
      %v4141 = vadd.f32 0.0, %v4140
      %4142 = vmatmul.f32.gmra.mxu0 %v4028
      %v4143 = vpop.f32.mrf.mxu0
      %v4144 = vadd.f32 0.0, %v4143
      %4145 = vmatmul.f32.gmra.mxu0 %v4031
      %v4146 = vpop.f32.mrf.mxu0
      %v4147 = vadd.f32 0.0, %v4146
      %4148 = vmatmul.f32.gmra.mxu0 %v4034
      %v4149 = vpop.f32.mrf.mxu0
      %v4150 = vadd.f32 0.0, %v4149
      %4151 = vmatmul.f32.gmra.mxu0 %v4037
      %v4152 = vpop.f32.mrf.mxu0
      %v4153 = vadd.f32 0.0, %v4152
      %4154 = vmatmul.f32.gmra.mxu0 %v4040
      %v4155 = vpop.f32.mrf.mxu0
      %v4156 = vadd.f32 0.0, %v4155
      %4157 = vmatmul.f32.gmra.mxu0 %v4043
      %v4158 = vpop.f32.mrf.mxu0
      %v4159 = vadd.f32 0.0, %v4158
      %4160 = vmatmul.f32.gmra.mxu0 %v4046
      %v4161 = vpop.f32.mrf.mxu0
      %v4162 = vadd.f32 0.0, %v4161
      %4163 = vmatmul.f32.gmra.mxu0 %v4049
      %v4164 = vpop.f32.mrf.mxu0
      %v4165 = vadd.f32 0.0, %v4164
      %4166 = vmatmul.f32.gmra.mxu0 %v4052
      %v4167 = vpop.f32.mrf.mxu0
      %v4168 = vadd.f32 0.0, %v4167
      %4169 = vmatmul.f32.gmra.mxu0 %v4055
      %v4170 = vpop.f32.mrf.mxu0
      %v4171 = vadd.f32 0.0, %v4170
      %4172 = vmatmul.f32.gmra.mxu0 %v4058
      %v4173 = vpop.f32.mrf.mxu0
      %v4174 = vadd.f32 0.0, %v4173
      %4175 = vmatmul.f32.gmra.mxu0 %v4061
      %v4176 = vpop.f32.mrf.mxu0
      %v4177 = vadd.f32 0.0, %v4176
      %4178 = vdwg.mxu0
      %v4179 = vadd.f32 %v3901, %v4084
      %v4180 = vadd.f32 %v3902, %v4087
      %v4181 = vadd.f32 %v3903, %v4090
      %v4182 = vadd.f32 %v3904, %v4093
      %v4183 = vadd.f32 %v3905, %v4096
      %v4184 = vadd.f32 %v3906, %v4099
      %v4185 = vadd.f32 %v3907, %v4102
      %v4186 = vadd.f32 %v3908, %v4105
      %v4187 = vadd.f32 %v3909, %v4108
      %v4188 = vadd.f32 %v3910, %v4111
      %v4189 = vadd.f32 %v3911, %v4114
      %v4190 = vadd.f32 %v3912, %v4117
      %v4191 = vadd.f32 %v3913, %v4120
      %v4192 = vadd.f32 %v3914, %v4123
      %v4193 = vadd.f32 %v3915, %v4126
      %v4194 = vadd.f32 %v3916, %v4129
      %v4195 = vadd.f32 %v3917, %v4132
      %v4196 = vadd.f32 %v3918, %v4135
      %v4197 = vadd.f32 %v3919, %v4138
      %v4198 = vadd.f32 %v3920, %v4141
      %v4199 = vadd.f32 %v3921, %v4144
      %v4200 = vadd.f32 %v3922, %v4147
      %v4201 = vadd.f32 %v3923, %v4150
      %v4202 = vadd.f32 %v3924, %v4153
      %v4203 = vadd.f32 %v3925, %v4156
      %v4204 = vadd.f32 %v3926, %v4159
      %v4205 = vadd.f32 %v3927, %v4162
      %v4206 = vadd.f32 %v3928, %v4165
      %v4207 = vadd.f32 %v3929, %v4168
      %v4208 = vadd.f32 %v3930, %v4171
      %v4209 = vadd.f32 %v3931, %v4174
      %v4210 = vadd.f32 %v3932, %v4177
      %v4211 = vld [vmem:[%s315 + $0x2] sm:$0xff]
      %v4212 = vld [vmem:[%s315 + $0xa] sm:$0xff]
      %v4213 = vld [vmem:[%s315 + $0x1a] sm:$0xff]
      %v4214 = vld [vmem:[%s315 + $0x22] sm:$0xff]
      %v4215 = vld [vmem:[%s315 + $0x32] sm:$0xff]
      %v4216 = vld [vmem:[%s315 + $0x3a] sm:$0xff]
      %v4217 = vld [vmem:[%s315 + $0x4a] sm:$0xff]
      %v4218 = vld [vmem:[%s315 + $0x52] sm:$0xff]
      %v4219 = vld [vmem:[%s315 + $0x62] sm:$0xff]
      %v4220 = vld [vmem:[%s315 + $0x6a] sm:$0xff]
      %v4221 = vld [vmem:[%s315 + $0x7a] sm:$0xff]
      %v4222 = vld [vmem:[%s315 + $0x82] sm:$0xff]
      %v4223 = vld [vmem:[%s315 + $0x92] sm:$0xff]
      %v4224 = vld [vmem:[%s315 + $0x9a] sm:$0xff]
      %v4225 = vld [vmem:[%s315 + $0xaa] sm:$0xff]
      %v4226 = vld [vmem:[%s315 + $0xb2] sm:$0xff]
      %v4227 = vld [vmem:[%s315 + $0xc2] sm:$0xff]
      %v4228 = vld [vmem:[%s315 + $0xca] sm:$0xff]
      %v4229 = vld [vmem:[%s315 + $0xda] sm:$0xff]
      %v4230 = vld [vmem:[%s315 + $0xe2] sm:$0xff]
      %v4231 = vld [vmem:[%s315 + $0xf2] sm:$0xff]
      %v4232 = vld [vmem:[%s315 + $0xfa] sm:$0xff]
      %v4233 = vld [vmem:[%s315 + $0x10a] sm:$0xff]
      %v4234 = vld [vmem:[%s315 + $0x112] sm:$0xff]
      %v4235 = vld [vmem:[%s315 + $0x122] sm:$0xff]
      %v4236 = vld [vmem:[%s315 + $0x12a] sm:$0xff]
      %v4237 = vld [vmem:[%s315 + $0x13a] sm:$0xff]
      %v4238 = vld [vmem:[%s315 + $0x142] sm:$0xff]
      %v4239 = vld [vmem:[%s315 + $0x152] sm:$0xff]
      %v4240 = vld [vmem:[%s315 + $0x15a] sm:$0xff]
      %v4241 = vld [vmem:[%s315 + $0x16a] sm:$0xff]
      %v4242 = vld [vmem:[%s315 + $0x172] sm:$0xff]
      %s4243 = scalar_lea.vmem %s3, 20
      %v4244 = vld [vmem:[%s4243] sm:$0xf]
      %v4246 = vsel %vm225, %v4211, 0
      %v4249 = vsel %vm225, %v4212, 0
      %v4252 = vsel %vm225, %v4213, 0
      %v4255 = vsel %vm225, %v4214, 0
      %v4258 = vsel %vm225, %v4215, 0
      %v4261 = vsel %vm225, %v4216, 0
      %v4264 = vsel %vm225, %v4217, 0
      %v4267 = vsel %vm225, %v4218, 0
      %v4270 = vsel %vm225, %v4219, 0
      %v4273 = vsel %vm225, %v4220, 0
      %v4276 = vsel %vm225, %v4221, 0
      %v4279 = vsel %vm225, %v4222, 0
      %v4282 = vsel %vm225, %v4223, 0
      %v4285 = vsel %vm225, %v4224, 0
      %v4288 = vsel %vm225, %v4225, 0
      %v4291 = vsel %vm225, %v4226, 0
      %v4294 = vsel %vm225, %v4227, 0
      %v4297 = vsel %vm225, %v4228, 0
      %v4300 = vsel %vm225, %v4229, 0
      %v4303 = vsel %vm225, %v4230, 0
      %v4306 = vsel %vm225, %v4231, 0
      %v4309 = vsel %vm225, %v4232, 0
      %v4312 = vsel %vm225, %v4233, 0
      %v4315 = vsel %vm225, %v4234, 0
      %v4318 = vsel %vm225, %v4235, 0
      %v4321 = vsel %vm225, %v4236, 0
      %v4324 = vsel %vm225, %v4237, 0
      %v4327 = vsel %vm225, %v4238, 0
      %v4330 = vsel %vm225, %v4239, 0
      %v4333 = vsel %vm225, %v4240, 0
      %v4336 = vsel %vm225, %v4241, 0
      %v4339 = vsel %vm225, %v4242, 0
      %v4342 = vsel %vm511, %v4244, 0
      %4344 = vmatpush.msra.mxu0 0.0
      %4345 = vmatpush.msra.mxu0 0.0
      %4346 = vmatpush.msra.mxu0 0.0
      %4347 = vmatpush.msra.mxu0 0.0
      %4348 = vmatpush.msra.mxu0 0.0
      %4349 = vmatpush.msra.mxu0 0.0
      %4350 = vmatpush.msra.mxu0 0.0
      %4351 = vmatpush.msra.mxu0 0.0
      %4352 = vmatpush.msra.mxu0 0.0
      %4353 = vmatpush.msra.mxu0 0.0
      %4354 = vmatpush.msra.mxu0 0.0
      %4355 = vmatpush.msra.mxu0 0.0
      %4356 = vmatpush.msra.mxu0 0.0
      %4357 = vmatpush.msra.mxu0 0.0
      %4358 = vmatpush.msra.mxu0 0.0
      %4359 = vmatpush.msra.mxu0 %v4342
      %4360 = vmatmul.f32.gmra.mxu0 %v4246
      %v4361 = vpop.f32.mrf.mxu0
      %v4362 = vadd.f32 0.0, %v4361
      %4363 = vmatmul.f32.gmra.mxu0 %v4249
      %v4364 = vpop.f32.mrf.mxu0
      %v4365 = vadd.f32 0.0, %v4364
      %4366 = vmatmul.f32.gmra.mxu0 %v4252
      %v4367 = vpop.f32.mrf.mxu0
      %v4368 = vadd.f32 0.0, %v4367
      %4369 = vmatmul.f32.gmra.mxu0 %v4255
      %v4370 = vpop.f32.mrf.mxu0
      %v4371 = vadd.f32 0.0, %v4370
      %4372 = vmatmul.f32.gmra.mxu0 %v4258
      %v4373 = vpop.f32.mrf.mxu0
      %v4374 = vadd.f32 0.0, %v4373
      %4375 = vmatmul.f32.gmra.mxu0 %v4261
      %v4376 = vpop.f32.mrf.mxu0
      %v4377 = vadd.f32 0.0, %v4376
      %4378 = vmatmul.f32.gmra.mxu0 %v4264
      %v4379 = vpop.f32.mrf.mxu0
      %v4380 = vadd.f32 0.0, %v4379
      %4381 = vmatmul.f32.gmra.mxu0 %v4267
      %v4382 = vpop.f32.mrf.mxu0
      %v4383 = vadd.f32 0.0, %v4382
      %4384 = vmatmul.f32.gmra.mxu0 %v4270
      %v4385 = vpop.f32.mrf.mxu0
      %v4386 = vadd.f32 0.0, %v4385
      %4387 = vmatmul.f32.gmra.mxu0 %v4273
      %v4388 = vpop.f32.mrf.mxu0
      %v4389 = vadd.f32 0.0, %v4388
      %4390 = vmatmul.f32.gmra.mxu0 %v4276
      %v4391 = vpop.f32.mrf.mxu0
      %v4392 = vadd.f32 0.0, %v4391
      %4393 = vmatmul.f32.gmra.mxu0 %v4279
      %v4394 = vpop.f32.mrf.mxu0
      %v4395 = vadd.f32 0.0, %v4394
      %4396 = vmatmul.f32.gmra.mxu0 %v4282
      %v4397 = vpop.f32.mrf.mxu0
      %v4398 = vadd.f32 0.0, %v4397
      %4399 = vmatmul.f32.gmra.mxu0 %v4285
      %v4400 = vpop.f32.mrf.mxu0
      %v4401 = vadd.f32 0.0, %v4400
      %4402 = vmatmul.f32.gmra.mxu0 %v4288
      %v4403 = vpop.f32.mrf.mxu0
      %v4404 = vadd.f32 0.0, %v4403
      %4405 = vmatmul.f32.gmra.mxu0 %v4291
      %v4406 = vpop.f32.mrf.mxu0
      %v4407 = vadd.f32 0.0, %v4406
      %4408 = vmatmul.f32.gmra.mxu0 %v4294
      %v4409 = vpop.f32.mrf.mxu0
      %v4410 = vadd.f32 0.0, %v4409
      %4411 = vmatmul.f32.gmra.mxu0 %v4297
      %v4412 = vpop.f32.mrf.mxu0
      %v4413 = vadd.f32 0.0, %v4412
      %4414 = vmatmul.f32.gmra.mxu0 %v4300
      %v4415 = vpop.f32.mrf.mxu0
      %v4416 = vadd.f32 0.0, %v4415
      %4417 = vmatmul.f32.gmra.mxu0 %v4303
      %v4418 = vpop.f32.mrf.mxu0
      %v4419 = vadd.f32 0.0, %v4418
      %4420 = vmatmul.f32.gmra.mxu0 %v4306
      %v4421 = vpop.f32.mrf.mxu0
      %v4422 = vadd.f32 0.0, %v4421
      %4423 = vmatmul.f32.gmra.mxu0 %v4309
      %v4424 = vpop.f32.mrf.mxu0
      %v4425 = vadd.f32 0.0, %v4424
      %4426 = vmatmul.f32.gmra.mxu0 %v4312
      %v4427 = vpop.f32.mrf.mxu0
      %v4428 = vadd.f32 0.0, %v4427
      %4429 = vmatmul.f32.gmra.mxu0 %v4315
      %v4430 = vpop.f32.mrf.mxu0
      %v4431 = vadd.f32 0.0, %v4430
      %4432 = vmatmul.f32.gmra.mxu0 %v4318
      %v4433 = vpop.f32.mrf.mxu0
      %v4434 = vadd.f32 0.0, %v4433
      %4435 = vmatmul.f32.gmra.mxu0 %v4321
      %v4436 = vpop.f32.mrf.mxu0
      %v4437 = vadd.f32 0.0, %v4436
      %4438 = vmatmul.f32.gmra.mxu0 %v4324
      %v4439 = vpop.f32.mrf.mxu0
      %v4440 = vadd.f32 0.0, %v4439
      %4441 = vmatmul.f32.gmra.mxu0 %v4327
      %v4442 = vpop.f32.mrf.mxu0
      %v4443 = vadd.f32 0.0, %v4442
      %4444 = vmatmul.f32.gmra.mxu0 %v4330
      %v4445 = vpop.f32.mrf.mxu0
      %v4446 = vadd.f32 0.0, %v4445
      %4447 = vmatmul.f32.gmra.mxu0 %v4333
      %v4448 = vpop.f32.mrf.mxu0
      %v4449 = vadd.f32 0.0, %v4448
      %4450 = vmatmul.f32.gmra.mxu0 %v4336
      %v4451 = vpop.f32.mrf.mxu0
      %v4452 = vadd.f32 0.0, %v4451
      %4453 = vmatmul.f32.gmra.mxu0 %v4339
      %v4454 = vpop.f32.mrf.mxu0
      %v4455 = vadd.f32 0.0, %v4454
      %4456 = vdwg.mxu0
      %v4457 = vadd.f32 %v4179, %v4362
      %v4458 = vadd.f32 %v4180, %v4365
      %v4459 = vadd.f32 %v4181, %v4368
      %v4460 = vadd.f32 %v4182, %v4371
      %v4461 = vadd.f32 %v4183, %v4374
      %v4462 = vadd.f32 %v4184, %v4377
      %v4463 = vadd.f32 %v4185, %v4380
      %v4464 = vadd.f32 %v4186, %v4383
      %v4465 = vadd.f32 %v4187, %v4386
      %v4466 = vadd.f32 %v4188, %v4389
      %v4467 = vadd.f32 %v4189, %v4392
      %v4468 = vadd.f32 %v4190, %v4395
      %v4469 = vadd.f32 %v4191, %v4398
      %v4470 = vadd.f32 %v4192, %v4401
      %v4471 = vadd.f32 %v4193, %v4404
      %v4472 = vadd.f32 %v4194, %v4407
      %v4473 = vadd.f32 %v4195, %v4410
      %v4474 = vadd.f32 %v4196, %v4413
      %v4475 = vadd.f32 %v4197, %v4416
      %v4476 = vadd.f32 %v4198, %v4419
      %v4477 = vadd.f32 %v4199, %v4422
      %v4478 = vadd.f32 %v4200, %v4425
      %v4479 = vadd.f32 %v4201, %v4428
      %v4480 = vadd.f32 %v4202, %v4431
      %v4481 = vadd.f32 %v4203, %v4434
      %v4482 = vadd.f32 %v4204, %v4437
      %v4483 = vadd.f32 %v4205, %v4440
      %v4484 = vadd.f32 %v4206, %v4443
      %v4485 = vadd.f32 %v4207, %v4446
      %v4486 = vadd.f32 %v4208, %v4449
      %v4487 = vadd.f32 %v4209, %v4452
      %v4488 = vadd.f32 %v4210, %v4455
      %v4489 = vld [vmem:[%s1952] sm:$0xff]
      %v4490 = vld [vmem:[%s1952 + $0x8] sm:$0xff]
      %v4491 = vld [vmem:[%s1952 + $0x18] sm:$0xff]
      %v4492 = vld [vmem:[%s1952 + $0x20] sm:$0xff]
      %v4493 = vld [vmem:[%s1952 + $0x30] sm:$0xff]
      %v4494 = vld [vmem:[%s1952 + $0x38] sm:$0xff]
      %v4495 = vld [vmem:[%s1952 + $0x48] sm:$0xff]
      %v4496 = vld [vmem:[%s1952 + $0x50] sm:$0xff]
      %v4497 = vld [vmem:[%s1952 + $0x60] sm:$0xff]
      %v4498 = vld [vmem:[%s1952 + $0x68] sm:$0xff]
      %v4499 = vld [vmem:[%s1952 + $0x78] sm:$0xff]
      %v4500 = vld [vmem:[%s1952 + $0x80] sm:$0xff]
      %v4501 = vld [vmem:[%s1952 + $0x90] sm:$0xff]
      %v4502 = vld [vmem:[%s1952 + $0x98] sm:$0xff]
      %v4503 = vld [vmem:[%s1952 + $0xa8] sm:$0xff]
      %v4504 = vld [vmem:[%s1952 + $0xb0] sm:$0xff]
      %v4505 = vld [vmem:[%s1952 + $0xc0] sm:$0xff]
      %v4506 = vld [vmem:[%s1952 + $0xc8] sm:$0xff]
      %v4507 = vld [vmem:[%s1952 + $0xd8] sm:$0xff]
      %v4508 = vld [vmem:[%s1952 + $0xe0] sm:$0xff]
      %v4509 = vld [vmem:[%s1952 + $0xf0] sm:$0xff]
      %v4510 = vld [vmem:[%s1952 + $0xf8] sm:$0xff]
      %v4511 = vld [vmem:[%s1952 + $0x108] sm:$0xff]
      %v4512 = vld [vmem:[%s1952 + $0x110] sm:$0xff]
      %v4513 = vld [vmem:[%s1952 + $0x120] sm:$0xff]
      %v4514 = vld [vmem:[%s1952 + $0x128] sm:$0xff]
      %v4515 = vld [vmem:[%s1952 + $0x138] sm:$0xff]
      %v4516 = vld [vmem:[%s1952 + $0x140] sm:$0xff]
      %v4517 = vld [vmem:[%s1952 + $0x150] sm:$0xff]
      %v4518 = vld [vmem:[%s1952 + $0x158] sm:$0xff]
      %v4519 = vld [vmem:[%s1952 + $0x168] sm:$0xff]
      %v4520 = vld [vmem:[%s1952 + $0x170] sm:$0xff]
      %s4521 = scalar_lea.vmem %s3, 24
      %v4522 = vld [vmem:[%s4521] sm:$0xf]
      %v4524 = vsel %vm225, %v4489, 0
      %v4527 = vsel %vm225, %v4490, 0
      %v4530 = vsel %vm225, %v4491, 0
      %v4533 = vsel %vm225, %v4492, 0
      %v4536 = vsel %vm225, %v4493, 0
      %v4539 = vsel %vm225, %v4494, 0
      %v4542 = vsel %vm225, %v4495, 0
      %v4545 = vsel %vm225, %v4496, 0
      %v4548 = vsel %vm225, %v4497, 0
      %v4551 = vsel %vm225, %v4498, 0
      %v4554 = vsel %vm225, %v4499, 0
      %v4557 = vsel %vm225, %v4500, 0
      %v4560 = vsel %vm225, %v4501, 0
      %v4563 = vsel %vm225, %v4502, 0
      %v4566 = vsel %vm225, %v4503, 0
      %v4569 = vsel %vm225, %v4504, 0
      %v4572 = vsel %vm225, %v4505, 0
      %v4575 = vsel %vm225, %v4506, 0
      %v4578 = vsel %vm225, %v4507, 0
      %v4581 = vsel %vm225, %v4508, 0
      %v4584 = vsel %vm225, %v4509, 0
      %v4587 = vsel %vm225, %v4510, 0
      %v4590 = vsel %vm225, %v4511, 0
      %v4593 = vsel %vm225, %v4512, 0
      %v4596 = vsel %vm225, %v4513, 0
      %v4599 = vsel %vm225, %v4514, 0
      %v4602 = vsel %vm225, %v4515, 0
      %v4605 = vsel %vm225, %v4516, 0
      %v4608 = vsel %vm225, %v4517, 0
      %v4611 = vsel %vm225, %v4518, 0
      %v4614 = vsel %vm225, %v4519, 0
      %v4617 = vsel %vm225, %v4520, 0
      %v4620 = vsel %vm511, %v4522, 0
      %4622 = vmatpush.msra.mxu0 0.0
      %4623 = vmatpush.msra.mxu0 0.0
      %4624 = vmatpush.msra.mxu0 0.0
      %4625 = vmatpush.msra.mxu0 0.0
      %4626 = vmatpush.msra.mxu0 0.0
      %4627 = vmatpush.msra.mxu0 0.0
      %4628 = vmatpush.msra.mxu0 0.0
      %4629 = vmatpush.msra.mxu0 0.0
      %4630 = vmatpush.msra.mxu0 0.0
      %4631 = vmatpush.msra.mxu0 0.0
      %4632 = vmatpush.msra.mxu0 0.0
      %4633 = vmatpush.msra.mxu0 0.0
      %4634 = vmatpush.msra.mxu0 0.0
      %4635 = vmatpush.msra.mxu0 0.0
      %4636 = vmatpush.msra.mxu0 0.0
      %4637 = vmatpush.msra.mxu0 %v4620
      %4638 = vmatmul.f32.gmra.mxu0 %v4524
      %v4639 = vpop.f32.mrf.mxu0
      %v4640 = vadd.f32 0.0, %v4639
      %4641 = vmatmul.f32.gmra.mxu0 %v4527
      %v4642 = vpop.f32.mrf.mxu0
      %v4643 = vadd.f32 0.0, %v4642
      %4644 = vmatmul.f32.gmra.mxu0 %v4530
      %v4645 = vpop.f32.mrf.mxu0
      %v4646 = vadd.f32 0.0, %v4645
      %4647 = vmatmul.f32.gmra.mxu0 %v4533
      %v4648 = vpop.f32.mrf.mxu0
      %v4649 = vadd.f32 0.0, %v4648
      %4650 = vmatmul.f32.gmra.mxu0 %v4536
      %v4651 = vpop.f32.mrf.mxu0
      %v4652 = vadd.f32 0.0, %v4651
      %4653 = vmatmul.f32.gmra.mxu0 %v4539
      %v4654 = vpop.f32.mrf.mxu0
      %v4655 = vadd.f32 0.0, %v4654
      %4656 = vmatmul.f32.gmra.mxu0 %v4542
      %v4657 = vpop.f32.mrf.mxu0
      %v4658 = vadd.f32 0.0, %v4657
      %4659 = vmatmul.f32.gmra.mxu0 %v4545
      %v4660 = vpop.f32.mrf.mxu0
      %v4661 = vadd.f32 0.0, %v4660
      %4662 = vmatmul.f32.gmra.mxu0 %v4548
      %v4663 = vpop.f32.mrf.mxu0
      %v4664 = vadd.f32 0.0, %v4663
      %4665 = vmatmul.f32.gmra.mxu0 %v4551
      %v4666 = vpop.f32.mrf.mxu0
      %v4667 = vadd.f32 0.0, %v4666
      %4668 = vmatmul.f32.gmra.mxu0 %v4554
      %v4669 = vpop.f32.mrf.mxu0
      %v4670 = vadd.f32 0.0, %v4669
      %4671 = vmatmul.f32.gmra.mxu0 %v4557
      %v4672 = vpop.f32.mrf.mxu0
      %v4673 = vadd.f32 0.0, %v4672
      %4674 = vmatmul.f32.gmra.mxu0 %v4560
      %v4675 = vpop.f32.mrf.mxu0
      %v4676 = vadd.f32 0.0, %v4675
      %4677 = vmatmul.f32.gmra.mxu0 %v4563
      %v4678 = vpop.f32.mrf.mxu0
      %v4679 = vadd.f32 0.0, %v4678
      %4680 = vmatmul.f32.gmra.mxu0 %v4566
      %v4681 = vpop.f32.mrf.mxu0
      %v4682 = vadd.f32 0.0, %v4681
      %4683 = vmatmul.f32.gmra.mxu0 %v4569
      %v4684 = vpop.f32.mrf.mxu0
      %v4685 = vadd.f32 0.0, %v4684
      %4686 = vmatmul.f32.gmra.mxu0 %v4572
      %v4687 = vpop.f32.mrf.mxu0
      %v4688 = vadd.f32 0.0, %v4687
      %4689 = vmatmul.f32.gmra.mxu0 %v4575
      %v4690 = vpop.f32.mrf.mxu0
      %v4691 = vadd.f32 0.0, %v4690
      %4692 = vmatmul.f32.gmra.mxu0 %v4578
      %v4693 = vpop.f32.mrf.mxu0
      %v4694 = vadd.f32 0.0, %v4693
      %4695 = vmatmul.f32.gmra.mxu0 %v4581
      %v4696 = vpop.f32.mrf.mxu0
      %v4697 = vadd.f32 0.0, %v4696
      %4698 = vmatmul.f32.gmra.mxu0 %v4584
      %v4699 = vpop.f32.mrf.mxu0
      %v4700 = vadd.f32 0.0, %v4699
      %4701 = vmatmul.f32.gmra.mxu0 %v4587
      %v4702 = vpop.f32.mrf.mxu0
      %v4703 = vadd.f32 0.0, %v4702
      %4704 = vmatmul.f32.gmra.mxu0 %v4590
      %v4705 = vpop.f32.mrf.mxu0
      %v4706 = vadd.f32 0.0, %v4705
      %4707 = vmatmul.f32.gmra.mxu0 %v4593
      %v4708 = vpop.f32.mrf.mxu0
      %v4709 = vadd.f32 0.0, %v4708
      %4710 = vmatmul.f32.gmra.mxu0 %v4596
      %v4711 = vpop.f32.mrf.mxu0
      %v4712 = vadd.f32 0.0, %v4711
      %4713 = vmatmul.f32.gmra.mxu0 %v4599
      %v4714 = vpop.f32.mrf.mxu0
      %v4715 = vadd.f32 0.0, %v4714
      %4716 = vmatmul.f32.gmra.mxu0 %v4602
      %v4717 = vpop.f32.mrf.mxu0
      %v4718 = vadd.f32 0.0, %v4717
      %4719 = vmatmul.f32.gmra.mxu0 %v4605
      %v4720 = vpop.f32.mrf.mxu0
      %v4721 = vadd.f32 0.0, %v4720
      %4722 = vmatmul.f32.gmra.mxu0 %v4608
      %v4723 = vpop.f32.mrf.mxu0
      %v4724 = vadd.f32 0.0, %v4723
      %4725 = vmatmul.f32.gmra.mxu0 %v4611
      %v4726 = vpop.f32.mrf.mxu0
      %v4727 = vadd.f32 0.0, %v4726
      %4728 = vmatmul.f32.gmra.mxu0 %v4614
      %v4729 = vpop.f32.mrf.mxu0
      %v4730 = vadd.f32 0.0, %v4729
      %4731 = vmatmul.f32.gmra.mxu0 %v4617
      %v4732 = vpop.f32.mrf.mxu0
      %v4733 = vadd.f32 0.0, %v4732
      %4734 = vdwg.mxu0
      %v4735 = vadd.f32 %v4457, %v4640
      %v4736 = vadd.f32 %v4458, %v4643
      %v4737 = vadd.f32 %v4459, %v4646
      %v4738 = vadd.f32 %v4460, %v4649
      %v4739 = vadd.f32 %v4461, %v4652
      %v4740 = vadd.f32 %v4462, %v4655
      %v4741 = vadd.f32 %v4463, %v4658
      %v4742 = vadd.f32 %v4464, %v4661
      %v4743 = vadd.f32 %v4465, %v4664
      %v4744 = vadd.f32 %v4466, %v4667
      %v4745 = vadd.f32 %v4467, %v4670
      %v4746 = vadd.f32 %v4468, %v4673
      %v4747 = vadd.f32 %v4469, %v4676
      %v4748 = vadd.f32 %v4470, %v4679
      %v4749 = vadd.f32 %v4471, %v4682
      %v4750 = vadd.f32 %v4472, %v4685
      %v4751 = vadd.f32 %v4473, %v4688
      %v4752 = vadd.f32 %v4474, %v4691
      %v4753 = vadd.f32 %v4475, %v4694
      %v4754 = vadd.f32 %v4476, %v4697
      %v4755 = vadd.f32 %v4477, %v4700
      %v4756 = vadd.f32 %v4478, %v4703
      %v4757 = vadd.f32 %v4479, %v4706
      %v4758 = vadd.f32 %v4480, %v4709
      %v4759 = vadd.f32 %v4481, %v4712
      %v4760 = vadd.f32 %v4482, %v4715
      %v4761 = vadd.f32 %v4483, %v4718
      %v4762 = vadd.f32 %v4484, %v4721
      %v4763 = vadd.f32 %v4485, %v4724
      %v4764 = vadd.f32 %v4486, %v4727
      %v4765 = vadd.f32 %v4487, %v4730
      %v4766 = vadd.f32 %v4488, %v4733
      %v4767 = vld [vmem:[%s1952 + $0x1] sm:$0xff]
      %v4768 = vld [vmem:[%s1952 + $0x9] sm:$0xff]
      %v4769 = vld [vmem:[%s1952 + $0x19] sm:$0xff]
      %v4770 = vld [vmem:[%s1952 + $0x21] sm:$0xff]
      %v4771 = vld [vmem:[%s1952 + $0x31] sm:$0xff]
      %v4772 = vld [vmem:[%s1952 + $0x39] sm:$0xff]
      %v4773 = vld [vmem:[%s1952 + $0x49] sm:$0xff]
      %v4774 = vld [vmem:[%s1952 + $0x51] sm:$0xff]
      %v4775 = vld [vmem:[%s1952 + $0x61] sm:$0xff]
      %v4776 = vld [vmem:[%s1952 + $0x69] sm:$0xff]
      %v4777 = vld [vmem:[%s1952 + $0x79] sm:$0xff]
      %v4778 = vld [vmem:[%s1952 + $0x81] sm:$0xff]
      %v4779 = vld [vmem:[%s1952 + $0x91] sm:$0xff]
      %v4780 = vld [vmem:[%s1952 + $0x99] sm:$0xff]
      %v4781 = vld [vmem:[%s1952 + $0xa9] sm:$0xff]
      %v4782 = vld [vmem:[%s1952 + $0xb1] sm:$0xff]
      %v4783 = vld [vmem:[%s1952 + $0xc1] sm:$0xff]
      %v4784 = vld [vmem:[%s1952 + $0xc9] sm:$0xff]
      %v4785 = vld [vmem:[%s1952 + $0xd9] sm:$0xff]
      %v4786 = vld [vmem:[%s1952 + $0xe1] sm:$0xff]
      %v4787 = vld [vmem:[%s1952 + $0xf1] sm:$0xff]
      %v4788 = vld [vmem:[%s1952 + $0xf9] sm:$0xff]
      %v4789 = vld [vmem:[%s1952 + $0x109] sm:$0xff]
      %v4790 = vld [vmem:[%s1952 + $0x111] sm:$0xff]
      %v4791 = vld [vmem:[%s1952 + $0x121] sm:$0xff]
      %v4792 = vld [vmem:[%s1952 + $0x129] sm:$0xff]
      %v4793 = vld [vmem:[%s1952 + $0x139] sm:$0xff]
      %v4794 = vld [vmem:[%s1952 + $0x141] sm:$0xff]
      %v4795 = vld [vmem:[%s1952 + $0x151] sm:$0xff]
      %v4796 = vld [vmem:[%s1952 + $0x159] sm:$0xff]
      %v4797 = vld [vmem:[%s1952 + $0x169] sm:$0xff]
      %v4798 = vld [vmem:[%s1952 + $0x171] sm:$0xff]
      %s4799 = scalar_lea.vmem %s3, 28
      %v4800 = vld [vmem:[%s4799] sm:$0xf]
      %v4802 = vsel %vm225, %v4767, 0
      %v4805 = vsel %vm225, %v4768, 0
      %v4808 = vsel %vm225, %v4769, 0
      %v4811 = vsel %vm225, %v4770, 0
      %v4814 = vsel %vm225, %v4771, 0
      %v4817 = vsel %vm225, %v4772, 0
      %v4820 = vsel %vm225, %v4773, 0
      %v4823 = vsel %vm225, %v4774, 0
      %v4826 = vsel %vm225, %v4775, 0
      %v4829 = vsel %vm225, %v4776, 0
      %v4832 = vsel %vm225, %v4777, 0
      %v4835 = vsel %vm225, %v4778, 0
      %v4838 = vsel %vm225, %v4779, 0
      %v4841 = vsel %vm225, %v4780, 0
      %v4844 = vsel %vm225, %v4781, 0
      %v4847 = vsel %vm225, %v4782, 0
      %v4850 = vsel %vm225, %v4783, 0
      %v4853 = vsel %vm225, %v4784, 0
      %v4856 = vsel %vm225, %v4785, 0
      %v4859 = vsel %vm225, %v4786, 0
      %v4862 = vsel %vm225, %v4787, 0
      %v4865 = vsel %vm225, %v4788, 0
      %v4868 = vsel %vm225, %v4789, 0
      %v4871 = vsel %vm225, %v4790, 0
      %v4874 = vsel %vm225, %v4791, 0
      %v4877 = vsel %vm225, %v4792, 0
      %v4880 = vsel %vm225, %v4793, 0
      %v4883 = vsel %vm225, %v4794, 0
      %v4886 = vsel %vm225, %v4795, 0
      %v4889 = vsel %vm225, %v4796, 0
      %v4892 = vsel %vm225, %v4797, 0
      %v4895 = vsel %vm225, %v4798, 0
      %v4898 = vsel %vm511, %v4800, 0
      %4900 = vmatpush.msra.mxu0 0.0
      %4901 = vmatpush.msra.mxu0 0.0
      %4902 = vmatpush.msra.mxu0 0.0
      %4903 = vmatpush.msra.mxu0 0.0
      %4904 = vmatpush.msra.mxu0 0.0
      %4905 = vmatpush.msra.mxu0 0.0
      %4906 = vmatpush.msra.mxu0 0.0
      %4907 = vmatpush.msra.mxu0 0.0
      %4908 = vmatpush.msra.mxu0 0.0
      %4909 = vmatpush.msra.mxu0 0.0
      %4910 = vmatpush.msra.mxu0 0.0
      %4911 = vmatpush.msra.mxu0 0.0
      %4912 = vmatpush.msra.mxu0 0.0
      %4913 = vmatpush.msra.mxu0 0.0
      %4914 = vmatpush.msra.mxu0 0.0
      %4915 = vmatpush.msra.mxu0 %v4898
      %4916 = vmatmul.f32.gmra.mxu0 %v4802
      %v4917 = vpop.f32.mrf.mxu0
      %v4918 = vadd.f32 0.0, %v4917
      %4919 = vmatmul.f32.gmra.mxu0 %v4805
      %v4920 = vpop.f32.mrf.mxu0
      %v4921 = vadd.f32 0.0, %v4920
      %4922 = vmatmul.f32.gmra.mxu0 %v4808
      %v4923 = vpop.f32.mrf.mxu0
      %v4924 = vadd.f32 0.0, %v4923
      %4925 = vmatmul.f32.gmra.mxu0 %v4811
      %v4926 = vpop.f32.mrf.mxu0
      %v4927 = vadd.f32 0.0, %v4926
      %4928 = vmatmul.f32.gmra.mxu0 %v4814
      %v4929 = vpop.f32.mrf.mxu0
      %v4930 = vadd.f32 0.0, %v4929
      %4931 = vmatmul.f32.gmra.mxu0 %v4817
      %v4932 = vpop.f32.mrf.mxu0
      %v4933 = vadd.f32 0.0, %v4932
      %4934 = vmatmul.f32.gmra.mxu0 %v4820
      %v4935 = vpop.f32.mrf.mxu0
      %v4936 = vadd.f32 0.0, %v4935
      %4937 = vmatmul.f32.gmra.mxu0 %v4823
      %v4938 = vpop.f32.mrf.mxu0
      %v4939 = vadd.f32 0.0, %v4938
      %4940 = vmatmul.f32.gmra.mxu0 %v4826
      %v4941 = vpop.f32.mrf.mxu0
      %v4942 = vadd.f32 0.0, %v4941
      %4943 = vmatmul.f32.gmra.mxu0 %v4829
      %v4944 = vpop.f32.mrf.mxu0
      %v4945 = vadd.f32 0.0, %v4944
      %4946 = vmatmul.f32.gmra.mxu0 %v4832
      %v4947 = vpop.f32.mrf.mxu0
      %v4948 = vadd.f32 0.0, %v4947
      %4949 = vmatmul.f32.gmra.mxu0 %v4835
      %v4950 = vpop.f32.mrf.mxu0
      %v4951 = vadd.f32 0.0, %v4950
      %4952 = vmatmul.f32.gmra.mxu0 %v4838
      %v4953 = vpop.f32.mrf.mxu0
      %v4954 = vadd.f32 0.0, %v4953
      %4955 = vmatmul.f32.gmra.mxu0 %v4841
      %v4956 = vpop.f32.mrf.mxu0
      %v4957 = vadd.f32 0.0, %v4956
      %4958 = vmatmul.f32.gmra.mxu0 %v4844
      %v4959 = vpop.f32.mrf.mxu0
      %v4960 = vadd.f32 0.0, %v4959
      %4961 = vmatmul.f32.gmra.mxu0 %v4847
      %v4962 = vpop.f32.mrf.mxu0
      %v4963 = vadd.f32 0.0, %v4962
      %4964 = vmatmul.f32.gmra.mxu0 %v4850
      %v4965 = vpop.f32.mrf.mxu0
      %v4966 = vadd.f32 0.0, %v4965
      %4967 = vmatmul.f32.gmra.mxu0 %v4853
      %v4968 = vpop.f32.mrf.mxu0
      %v4969 = vadd.f32 0.0, %v4968
      %4970 = vmatmul.f32.gmra.mxu0 %v4856
      %v4971 = vpop.f32.mrf.mxu0
      %v4972 = vadd.f32 0.0, %v4971
      %4973 = vmatmul.f32.gmra.mxu0 %v4859
      %v4974 = vpop.f32.mrf.mxu0
      %v4975 = vadd.f32 0.0, %v4974
      %4976 = vmatmul.f32.gmra.mxu0 %v4862
      %v4977 = vpop.f32.mrf.mxu0
      %v4978 = vadd.f32 0.0, %v4977
      %4979 = vmatmul.f32.gmra.mxu0 %v4865
      %v4980 = vpop.f32.mrf.mxu0
      %v4981 = vadd.f32 0.0, %v4980
      %4982 = vmatmul.f32.gmra.mxu0 %v4868
      %v4983 = vpop.f32.mrf.mxu0
      %v4984 = vadd.f32 0.0, %v4983
      %4985 = vmatmul.f32.gmra.mxu0 %v4871
      %v4986 = vpop.f32.mrf.mxu0
      %v4987 = vadd.f32 0.0, %v4986
      %4988 = vmatmul.f32.gmra.mxu0 %v4874
      %v4989 = vpop.f32.mrf.mxu0
      %v4990 = vadd.f32 0.0, %v4989
      %4991 = vmatmul.f32.gmra.mxu0 %v4877
      %v4992 = vpop.f32.mrf.mxu0
      %v4993 = vadd.f32 0.0, %v4992
      %4994 = vmatmul.f32.gmra.mxu0 %v4880
      %v4995 = vpop.f32.mrf.mxu0
      %v4996 = vadd.f32 0.0, %v4995
      %4997 = vmatmul.f32.gmra.mxu0 %v4883
      %v4998 = vpop.f32.mrf.mxu0
      %v4999 = vadd.f32 0.0, %v4998
      %5000 = vmatmul.f32.gmra.mxu0 %v4886
      %v5001 = vpop.f32.mrf.mxu0
      %v5002 = vadd.f32 0.0, %v5001
      %5003 = vmatmul.f32.gmra.mxu0 %v4889
      %v5004 = vpop.f32.mrf.mxu0
      %v5005 = vadd.f32 0.0, %v5004
      %5006 = vmatmul.f32.gmra.mxu0 %v4892
      %v5007 = vpop.f32.mrf.mxu0
      %v5008 = vadd.f32 0.0, %v5007
      %5009 = vmatmul.f32.gmra.mxu0 %v4895
      %v5010 = vpop.f32.mrf.mxu0
      %v5011 = vadd.f32 0.0, %v5010
      %5012 = vdwg.mxu0
      %v5013 = vadd.f32 %v4735, %v4918
      %v5014 = vadd.f32 %v4736, %v4921
      %v5015 = vadd.f32 %v4737, %v4924
      %v5016 = vadd.f32 %v4738, %v4927
      %v5017 = vadd.f32 %v4739, %v4930
      %v5018 = vadd.f32 %v4740, %v4933
      %v5019 = vadd.f32 %v4741, %v4936
      %v5020 = vadd.f32 %v4742, %v4939
      %v5021 = vadd.f32 %v4743, %v4942
      %v5022 = vadd.f32 %v4744, %v4945
      %v5023 = vadd.f32 %v4745, %v4948
      %v5024 = vadd.f32 %v4746, %v4951
      %v5025 = vadd.f32 %v4747, %v4954
      %v5026 = vadd.f32 %v4748, %v4957
      %v5027 = vadd.f32 %v4749, %v4960
      %v5028 = vadd.f32 %v4750, %v4963
      %v5029 = vadd.f32 %v4751, %v4966
      %v5030 = vadd.f32 %v4752, %v4969
      %v5031 = vadd.f32 %v4753, %v4972
      %v5032 = vadd.f32 %v4754, %v4975
      %v5033 = vadd.f32 %v4755, %v4978
      %v5034 = vadd.f32 %v4756, %v4981
      %v5035 = vadd.f32 %v4757, %v4984
      %v5036 = vadd.f32 %v4758, %v4987
      %v5037 = vadd.f32 %v4759, %v4990
      %v5038 = vadd.f32 %v4760, %v4993
      %v5039 = vadd.f32 %v4761, %v4996
      %v5040 = vadd.f32 %v4762, %v4999
      %v5041 = vadd.f32 %v4763, %v5002
      %v5042 = vadd.f32 %v4764, %v5005
      %v5043 = vadd.f32 %v4765, %v5008
      %v5044 = vadd.f32 %v4766, %v5011
      %v5045 = vld [vmem:[%s1952 + $0x2] sm:$0xff]
      %v5046 = vld [vmem:[%s1952 + $0xa] sm:$0xff]
      %v5047 = vld [vmem:[%s1952 + $0x1a] sm:$0xff]
      %v5048 = vld [vmem:[%s1952 + $0x22] sm:$0xff]
      %v5049 = vld [vmem:[%s1952 + $0x32] sm:$0xff]
      %v5050 = vld [vmem:[%s1952 + $0x3a] sm:$0xff]
      %v5051 = vld [vmem:[%s1952 + $0x4a] sm:$0xff]
      %v5052 = vld [vmem:[%s1952 + $0x52] sm:$0xff]
      %v5053 = vld [vmem:[%s1952 + $0x62] sm:$0xff]
      %v5054 = vld [vmem:[%s1952 + $0x6a] sm:$0xff]
      %v5055 = vld [vmem:[%s1952 + $0x7a] sm:$0xff]
      %v5056 = vld [vmem:[%s1952 + $0x82] sm:$0xff]
      %v5057 = vld [vmem:[%s1952 + $0x92] sm:$0xff]
      %v5058 = vld [vmem:[%s1952 + $0x9a] sm:$0xff]
      %v5059 = vld [vmem:[%s1952 + $0xaa] sm:$0xff]
      %v5060 = vld [vmem:[%s1952 + $0xb2] sm:$0xff]
      %v5061 = vld [vmem:[%s1952 + $0xc2] sm:$0xff]
      %v5062 = vld [vmem:[%s1952 + $0xca] sm:$0xff]
      %v5063 = vld [vmem:[%s1952 + $0xda] sm:$0xff]
      %v5064 = vld [vmem:[%s1952 + $0xe2] sm:$0xff]
      %v5065 = vld [vmem:[%s1952 + $0xf2] sm:$0xff]
      %v5066 = vld [vmem:[%s1952 + $0xfa] sm:$0xff]
      %v5067 = vld [vmem:[%s1952 + $0x10a] sm:$0xff]
      %v5068 = vld [vmem:[%s1952 + $0x112] sm:$0xff]
      %v5069 = vld [vmem:[%s1952 + $0x122] sm:$0xff]
      %v5070 = vld [vmem:[%s1952 + $0x12a] sm:$0xff]
      %v5071 = vld [vmem:[%s1952 + $0x13a] sm:$0xff]
      %v5072 = vld [vmem:[%s1952 + $0x142] sm:$0xff]
      %v5073 = vld [vmem:[%s1952 + $0x152] sm:$0xff]
      %v5074 = vld [vmem:[%s1952 + $0x15a] sm:$0xff]
      %v5075 = vld [vmem:[%s1952 + $0x16a] sm:$0xff]
      %v5076 = vld [vmem:[%s1952 + $0x172] sm:$0xff]
      %s5077 = scalar_lea.vmem %s3, 32
      %v5078 = vld [vmem:[%s5077] sm:$0xf]
      %v5080 = vsel %vm225, %v5045, 0
      %v5083 = vsel %vm225, %v5046, 0
      %v5086 = vsel %vm225, %v5047, 0
      %v5089 = vsel %vm225, %v5048, 0
      %v5092 = vsel %vm225, %v5049, 0
      %v5095 = vsel %vm225, %v5050, 0
      %v5098 = vsel %vm225, %v5051, 0
      %v5101 = vsel %vm225, %v5052, 0
      %v5104 = vsel %vm225, %v5053, 0
      %v5107 = vsel %vm225, %v5054, 0
      %v5110 = vsel %vm225, %v5055, 0
      %v5113 = vsel %vm225, %v5056, 0
      %v5116 = vsel %vm225, %v5057, 0
      %v5119 = vsel %vm225, %v5058, 0
      %v5122 = vsel %vm225, %v5059, 0
      %v5125 = vsel %vm225, %v5060, 0
      %v5128 = vsel %vm225, %v5061, 0
      %v5131 = vsel %vm225, %v5062, 0
      %v5134 = vsel %vm225, %v5063, 0
      %v5137 = vsel %vm225, %v5064, 0
      %v5140 = vsel %vm225, %v5065, 0
      %v5143 = vsel %vm225, %v5066, 0
      %v5146 = vsel %vm225, %v5067, 0
      %v5149 = vsel %vm225, %v5068, 0
      %v5152 = vsel %vm225, %v5069, 0
      %v5155 = vsel %vm225, %v5070, 0
      %v5158 = vsel %vm225, %v5071, 0
      %v5161 = vsel %vm225, %v5072, 0
      %v5164 = vsel %vm225, %v5073, 0
      %v5167 = vsel %vm225, %v5074, 0
      %v5170 = vsel %vm225, %v5075, 0
      %v5173 = vsel %vm225, %v5076, 0
      %v5176 = vsel %vm511, %v5078, 0
      %5178 = vmatpush.msra.mxu0 0.0
      %5179 = vmatpush.msra.mxu0 0.0
      %5180 = vmatpush.msra.mxu0 0.0
      %5181 = vmatpush.msra.mxu0 0.0
      %5182 = vmatpush.msra.mxu0 0.0
      %5183 = vmatpush.msra.mxu0 0.0
      %5184 = vmatpush.msra.mxu0 0.0
      %5185 = vmatpush.msra.mxu0 0.0
      %5186 = vmatpush.msra.mxu0 0.0
      %5187 = vmatpush.msra.mxu0 0.0
      %5188 = vmatpush.msra.mxu0 0.0
      %5189 = vmatpush.msra.mxu0 0.0
      %5190 = vmatpush.msra.mxu0 0.0
      %5191 = vmatpush.msra.mxu0 0.0
      %5192 = vmatpush.msra.mxu0 0.0
      %5193 = vmatpush.msra.mxu0 %v5176
      %5194 = vmatmul.f32.gmra.mxu0 %v5080
      %v5195 = vpop.f32.mrf.mxu0
      %v5196 = vadd.f32 0.0, %v5195
      %5197 = vmatmul.f32.gmra.mxu0 %v5083
      %v5198 = vpop.f32.mrf.mxu0
      %v5199 = vadd.f32 0.0, %v5198
      %5200 = vmatmul.f32.gmra.mxu0 %v5086
      %v5201 = vpop.f32.mrf.mxu0
      %v5202 = vadd.f32 0.0, %v5201
      %5203 = vmatmul.f32.gmra.mxu0 %v5089
      %v5204 = vpop.f32.mrf.mxu0
      %v5205 = vadd.f32 0.0, %v5204
      %5206 = vmatmul.f32.gmra.mxu0 %v5092
      %v5207 = vpop.f32.mrf.mxu0
      %v5208 = vadd.f32 0.0, %v5207
      %5209 = vmatmul.f32.gmra.mxu0 %v5095
      %v5210 = vpop.f32.mrf.mxu0
      %v5211 = vadd.f32 0.0, %v5210
      %5212 = vmatmul.f32.gmra.mxu0 %v5098
      %v5213 = vpop.f32.mrf.mxu0
      %v5214 = vadd.f32 0.0, %v5213
      %5215 = vmatmul.f32.gmra.mxu0 %v5101
      %v5216 = vpop.f32.mrf.mxu0
      %v5217 = vadd.f32 0.0, %v5216
      %5218 = vmatmul.f32.gmra.mxu0 %v5104
      %v5219 = vpop.f32.mrf.mxu0
      %v5220 = vadd.f32 0.0, %v5219
      %5221 = vmatmul.f32.gmra.mxu0 %v5107
      %v5222 = vpop.f32.mrf.mxu0
      %v5223 = vadd.f32 0.0, %v5222
      %5224 = vmatmul.f32.gmra.mxu0 %v5110
      %v5225 = vpop.f32.mrf.mxu0
      %v5226 = vadd.f32 0.0, %v5225
      %5227 = vmatmul.f32.gmra.mxu0 %v5113
      %v5228 = vpop.f32.mrf.mxu0
      %v5229 = vadd.f32 0.0, %v5228
      %5230 = vmatmul.f32.gmra.mxu0 %v5116
      %v5231 = vpop.f32.mrf.mxu0
      %v5232 = vadd.f32 0.0, %v5231
      %5233 = vmatmul.f32.gmra.mxu0 %v5119
      %v5234 = vpop.f32.mrf.mxu0
      %v5235 = vadd.f32 0.0, %v5234
      %5236 = vmatmul.f32.gmra.mxu0 %v5122
      %v5237 = vpop.f32.mrf.mxu0
      %v5238 = vadd.f32 0.0, %v5237
      %5239 = vmatmul.f32.gmra.mxu0 %v5125
      %v5240 = vpop.f32.mrf.mxu0
      %v5241 = vadd.f32 0.0, %v5240
      %5242 = vmatmul.f32.gmra.mxu0 %v5128
      %v5243 = vpop.f32.mrf.mxu0
      %v5244 = vadd.f32 0.0, %v5243
      %5245 = vmatmul.f32.gmra.mxu0 %v5131
      %v5246 = vpop.f32.mrf.mxu0
      %v5247 = vadd.f32 0.0, %v5246
      %5248 = vmatmul.f32.gmra.mxu0 %v5134
      %v5249 = vpop.f32.mrf.mxu0
      %v5250 = vadd.f32 0.0, %v5249
      %5251 = vmatmul.f32.gmra.mxu0 %v5137
      %v5252 = vpop.f32.mrf.mxu0
      %v5253 = vadd.f32 0.0, %v5252
      %5254 = vmatmul.f32.gmra.mxu0 %v5140
      %v5255 = vpop.f32.mrf.mxu0
      %v5256 = vadd.f32 0.0, %v5255
      %5257 = vmatmul.f32.gmra.mxu0 %v5143
      %v5258 = vpop.f32.mrf.mxu0
      %v5259 = vadd.f32 0.0, %v5258
      %5260 = vmatmul.f32.gmra.mxu0 %v5146
      %v5261 = vpop.f32.mrf.mxu0
      %v5262 = vadd.f32 0.0, %v5261
      %5263 = vmatmul.f32.gmra.mxu0 %v5149
      %v5264 = vpop.f32.mrf.mxu0
      %v5265 = vadd.f32 0.0, %v5264
      %5266 = vmatmul.f32.gmra.mxu0 %v5152
      %v5267 = vpop.f32.mrf.mxu0
      %v5268 = vadd.f32 0.0, %v5267
      %5269 = vmatmul.f32.gmra.mxu0 %v5155
      %v5270 = vpop.f32.mrf.mxu0
      %v5271 = vadd.f32 0.0, %v5270
      %5272 = vmatmul.f32.gmra.mxu0 %v5158
      %v5273 = vpop.f32.mrf.mxu0
      %v5274 = vadd.f32 0.0, %v5273
      %5275 = vmatmul.f32.gmra.mxu0 %v5161
      %v5276 = vpop.f32.mrf.mxu0
      %v5277 = vadd.f32 0.0, %v5276
      %5278 = vmatmul.f32.gmra.mxu0 %v5164
      %v5279 = vpop.f32.mrf.mxu0
      %v5280 = vadd.f32 0.0, %v5279
      %5281 = vmatmul.f32.gmra.mxu0 %v5167
      %v5282 = vpop.f32.mrf.mxu0
      %v5283 = vadd.f32 0.0, %v5282
      %5284 = vmatmul.f32.gmra.mxu0 %v5170
      %v5285 = vpop.f32.mrf.mxu0
      %v5286 = vadd.f32 0.0, %v5285
      %5287 = vmatmul.f32.gmra.mxu0 %v5173
      %v5288 = vpop.f32.mrf.mxu0
      %v5289 = vadd.f32 0.0, %v5288
      %5290 = vdwg.mxu0
      %v5291 = vadd.f32 %v5013, %v5196
      %v5292 = vadd.f32 %v5014, %v5199
      %v5293 = vadd.f32 %v5015, %v5202
      %v5294 = vadd.f32 %v5016, %v5205
      %v5295 = vadd.f32 %v5017, %v5208
      %v5296 = vadd.f32 %v5018, %v5211
      %v5297 = vadd.f32 %v5019, %v5214
      %v5298 = vadd.f32 %v5020, %v5217
      %v5299 = vadd.f32 %v5021, %v5220
      %v5300 = vadd.f32 %v5022, %v5223
      %v5301 = vadd.f32 %v5023, %v5226
      %v5302 = vadd.f32 %v5024, %v5229
      %v5303 = vadd.f32 %v5025, %v5232
      %v5304 = vadd.f32 %v5026, %v5235
      %v5305 = vadd.f32 %v5027, %v5238
      %v5306 = vadd.f32 %v5028, %v5241
      %v5307 = vadd.f32 %v5029, %v5244
      %v5308 = vadd.f32 %v5030, %v5247
      %v5309 = vadd.f32 %v5031, %v5250
      %v5310 = vadd.f32 %v5032, %v5253
      %v5311 = vadd.f32 %v5033, %v5256
      %v5312 = vadd.f32 %v5034, %v5259
      %v5313 = vadd.f32 %v5035, %v5262
      %v5314 = vadd.f32 %v5036, %v5265
      %v5315 = vadd.f32 %v5037, %v5268
      %v5316 = vadd.f32 %v5038, %v5271
      %v5317 = vadd.f32 %v5039, %v5274
      %v5318 = vadd.f32 %v5040, %v5277
      %v5319 = vadd.f32 %v5041, %v5280
      %v5320 = vadd.f32 %v5042, %v5283
      %v5321 = vadd.f32 %v5043, %v5286
      %v5322 = vadd.f32 %v5044, %v5289
      %v5324 = vperm.slane %v282, 0
      %v5326 = vadd.f32 %v5291, %v5324
      %v5327 = vadd.f32 %v5292, %v5324
      %v5328 = vadd.f32 %v5293, %v5324
      %v5329 = vadd.f32 %v5294, %v5324
      %v5330 = vadd.f32 %v5295, %v5324
      %v5331 = vadd.f32 %v5296, %v5324
      %v5332 = vadd.f32 %v5297, %v5324
      %v5333 = vadd.f32 %v5298, %v5324
      %v5334 = vadd.f32 %v5299, %v5324
      %v5335 = vadd.f32 %v5300, %v5324
      %v5336 = vadd.f32 %v5301, %v5324
      %v5337 = vadd.f32 %v5302, %v5324
      %v5338 = vadd.f32 %v5303, %v5324
      %v5339 = vadd.f32 %v5304, %v5324
      %v5340 = vadd.f32 %v5305, %v5324
      %v5341 = vadd.f32 %v5306, %v5324
      %v5342 = vadd.f32 %v5307, %v5324
      %v5343 = vadd.f32 %v5308, %v5324
      %v5344 = vadd.f32 %v5309, %v5324
      %v5345 = vadd.f32 %v5310, %v5324
      %v5346 = vadd.f32 %v5311, %v5324
      %v5347 = vadd.f32 %v5312, %v5324
      %v5348 = vadd.f32 %v5313, %v5324
      %v5349 = vadd.f32 %v5314, %v5324
      %v5350 = vadd.f32 %v5315, %v5324
      %v5351 = vadd.f32 %v5316, %v5324
      %v5352 = vadd.f32 %v5317, %v5324
      %v5353 = vadd.f32 %v5318, %v5324
      %v5354 = vadd.f32 %v5319, %v5324
      %v5355 = vadd.f32 %v5320, %v5324
      %v5356 = vadd.f32 %v5321, %v5324
      %v5357 = vadd.f32 %v5322, %v5324
      %v5358 = vld [vmem:[%s219] sm:$0xff]
      %v5359 = vld [vmem:[%s219 + $0x8] sm:$0xff]
      %v5360 = vld [vmem:[%s219 + $0x10] sm:$0xff]
      %v5361 = vld [vmem:[%s219 + $0x18] sm:$0xff]
      %v5362 = vld [vmem:[%s219 + $0x20] sm:$0xff]
      %v5363 = vld [vmem:[%s219 + $0x28] sm:$0xff]
      %v5364 = vld [vmem:[%s219 + $0x30] sm:$0xff]
      %v5365 = vld [vmem:[%s219 + $0x38] sm:$0xff]
      %v5366 = vld [vmem:[%s219 + $0x40] sm:$0xff]
      %v5367 = vld [vmem:[%s219 + $0x48] sm:$0xff]
      %v5368 = vld [vmem:[%s219 + $0x50] sm:$0xff]
      %v5369 = vld [vmem:[%s219 + $0x58] sm:$0xff]
      %v5370 = vld [vmem:[%s219 + $0x60] sm:$0xff]
      %v5371 = vld [vmem:[%s219 + $0x68] sm:$0xff]
      %v5372 = vld [vmem:[%s219 + $0x70] sm:$0xff]
      %v5373 = vld [vmem:[%s219 + $0x78] sm:$0xff]
      %v5374 = vld [vmem:[%s219 + $0x80] sm:$0xff]
      %v5375 = vld [vmem:[%s219 + $0x88] sm:$0xff]
      %v5376 = vld [vmem:[%s219 + $0x90] sm:$0xff]
      %v5377 = vld [vmem:[%s219 + $0x98] sm:$0xff]
      %v5378 = vld [vmem:[%s219 + $0xa0] sm:$0xff]
      %v5379 = vld [vmem:[%s219 + $0xa8] sm:$0xff]
      %v5380 = vld [vmem:[%s219 + $0xb0] sm:$0xff]
      %v5381 = vld [vmem:[%s219 + $0xb8] sm:$0xff]
      %v5382 = vld [vmem:[%s219 + $0xc0] sm:$0xff]
      %v5383 = vld [vmem:[%s219 + $0xc8] sm:$0xff]
      %v5384 = vld [vmem:[%s219 + $0xd0] sm:$0xff]
      %v5385 = vld [vmem:[%s219 + $0xd8] sm:$0xff]
      %v5386 = vld [vmem:[%s219 + $0xe0] sm:$0xff]
      %v5387 = vld [vmem:[%s219 + $0xe8] sm:$0xff]
      %v5388 = vld [vmem:[%s219 + $0xf0] sm:$0xff]
      %v5389 = vld [vmem:[%s219 + $0xf8] sm:$0xff]
      %v5390 = vadd.f32 %v5326, %v5358
      %v5391 = vadd.f32 %v5327, %v5359
      %v5392 = vadd.f32 %v5328, %v5360
      %v5393 = vadd.f32 %v5329, %v5361
      %v5394 = vadd.f32 %v5330, %v5362
      %v5395 = vadd.f32 %v5331, %v5363
      %v5396 = vadd.f32 %v5332, %v5364
      %v5397 = vadd.f32 %v5333, %v5365
      %v5398 = vadd.f32 %v5334, %v5366
      %v5399 = vadd.f32 %v5335, %v5367
      %v5400 = vadd.f32 %v5336, %v5368
      %v5401 = vadd.f32 %v5337, %v5369
      %v5402 = vadd.f32 %v5338, %v5370
      %v5403 = vadd.f32 %v5339, %v5371
      %v5404 = vadd.f32 %v5340, %v5372
      %v5405 = vadd.f32 %v5341, %v5373
      %v5406 = vadd.f32 %v5342, %v5374
      %v5407 = vadd.f32 %v5343, %v5375
      %v5408 = vadd.f32 %v5344, %v5376
      %v5409 = vadd.f32 %v5345, %v5377
      %v5410 = vadd.f32 %v5346, %v5378
      %v5411 = vadd.f32 %v5347, %v5379
      %v5412 = vadd.f32 %v5348, %v5380
      %v5413 = vadd.f32 %v5349, %v5381
      %v5414 = vadd.f32 %v5350, %v5382
      %v5415 = vadd.f32 %v5351, %v5383
      %v5416 = vadd.f32 %v5352, %v5384
      %v5417 = vadd.f32 %v5353, %v5385
      %v5418 = vadd.f32 %v5354, %v5386
      %v5419 = vadd.f32 %v5355, %v5387
      %v5420 = vadd.f32 %v5356, %v5388
      %v5421 = vadd.f32 %v5357, %v5389
      %v5422 = vmax.f32 %v5390, 0.0
      %v5423 = vmax.f32 %v5391, 0.0
      %v5424 = vmax.f32 %v5392, 0.0
      %v5425 = vmax.f32 %v5393, 0.0
      %v5426 = vmax.f32 %v5394, 0.0
      %v5427 = vmax.f32 %v5395, 0.0
      %v5428 = vmax.f32 %v5396, 0.0
      %v5429 = vmax.f32 %v5397, 0.0
      %v5430 = vmax.f32 %v5398, 0.0
      %v5431 = vmax.f32 %v5399, 0.0
      %v5432 = vmax.f32 %v5400, 0.0
      %v5433 = vmax.f32 %v5401, 0.0
      %v5434 = vmax.f32 %v5402, 0.0
      %v5435 = vmax.f32 %v5403, 0.0
      %v5436 = vmax.f32 %v5404, 0.0
      %v5437 = vmax.f32 %v5405, 0.0
      %v5438 = vmax.f32 %v5406, 0.0
      %v5439 = vmax.f32 %v5407, 0.0
      %v5440 = vmax.f32 %v5408, 0.0
      %v5441 = vmax.f32 %v5409, 0.0
      %v5442 = vmax.f32 %v5410, 0.0
      %v5443 = vmax.f32 %v5411, 0.0
      %v5444 = vmax.f32 %v5412, 0.0
      %v5445 = vmax.f32 %v5413, 0.0
      %v5446 = vmax.f32 %v5414, 0.0
      %v5447 = vmax.f32 %v5415, 0.0
      %v5448 = vmax.f32 %v5416, 0.0
      %v5449 = vmax.f32 %v5417, 0.0
      %v5450 = vmax.f32 %v5418, 0.0
      %v5451 = vmax.f32 %v5419, 0.0
      %v5452 = vmax.f32 %v5420, 0.0
      %v5453 = vmax.f32 %v5421, 0.0
      %5454 = vst.msk [vmem:[%s224] sm:$0xff] %vm225, %v5422
      %5455 = vst.msk [vmem:[%s224 + $0x8] sm:$0xff] %vm225, %v5423
      %5456 = vst.msk [vmem:[%s224 + $0x10] sm:$0xff] %vm225, %v5424
      %5457 = vst.msk [vmem:[%s224 + $0x18] sm:$0xff] %vm225, %v5425
      %5458 = vst.msk [vmem:[%s224 + $0x20] sm:$0xff] %vm225, %v5426
      %5459 = vst.msk [vmem:[%s224 + $0x28] sm:$0xff] %vm225, %v5427
      %5460 = vst.msk [vmem:[%s224 + $0x30] sm:$0xff] %vm225, %v5428
      %5461 = vst.msk [vmem:[%s224 + $0x38] sm:$0xff] %vm225, %v5429
      %5462 = vst.msk [vmem:[%s224 + $0x40] sm:$0xff] %vm225, %v5430
      %5463 = vst.msk [vmem:[%s224 + $0x48] sm:$0xff] %vm225, %v5431
      %5464 = vst.msk [vmem:[%s224 + $0x50] sm:$0xff] %vm225, %v5432
      %5465 = vst.msk [vmem:[%s224 + $0x58] sm:$0xff] %vm225, %v5433
      %5466 = vst.msk [vmem:[%s224 + $0x60] sm:$0xff] %vm225, %v5434
      %5467 = vst.msk [vmem:[%s224 + $0x68] sm:$0xff] %vm225, %v5435
      %5468 = vst.msk [vmem:[%s224 + $0x70] sm:$0xff] %vm225, %v5436
      %5469 = vst.msk [vmem:[%s224 + $0x78] sm:$0xff] %vm225, %v5437
      %5470 = vst.msk [vmem:[%s224 + $0x80] sm:$0xff] %vm225, %v5438
      %5471 = vst.msk [vmem:[%s224 + $0x88] sm:$0xff] %vm225, %v5439
      %5472 = vst.msk [vmem:[%s224 + $0x90] sm:$0xff] %vm225, %v5440
      %5473 = vst.msk [vmem:[%s224 + $0x98] sm:$0xff] %vm225, %v5441
      %5474 = vst.msk [vmem:[%s224 + $0xa0] sm:$0xff] %vm225, %v5442
      %5475 = vst.msk [vmem:[%s224 + $0xa8] sm:$0xff] %vm225, %v5443
      %5476 = vst.msk [vmem:[%s224 + $0xb0] sm:$0xff] %vm225, %v5444
      %5477 = vst.msk [vmem:[%s224 + $0xb8] sm:$0xff] %vm225, %v5445
      %5478 = vst.msk [vmem:[%s224 + $0xc0] sm:$0xff] %vm225, %v5446
      %5479 = vst.msk [vmem:[%s224 + $0xc8] sm:$0xff] %vm225, %v5447
      %5480 = vst.msk [vmem:[%s224 + $0xd0] sm:$0xff] %vm225, %v5448
      %5481 = vst.msk [vmem:[%s224 + $0xd8] sm:$0xff] %vm225, %v5449
      %5482 = vst.msk [vmem:[%s224 + $0xe0] sm:$0xff] %vm225, %v5450
      %5483 = vst.msk [vmem:[%s224 + $0xe8] sm:$0xff] %vm225, %v5451
      %5484 = vst.msk [vmem:[%s224 + $0xf0] sm:$0xff] %vm225, %v5452
      %5485 = vst.msk [vmem:[%s224 + $0xf8] sm:$0xff] %vm225, %v5453
      %p5486 = scmp.lt.s32.totalorder %s16, 1
      %s5487 = scalar_select %p5486, %s16, 1
      %s5488 = smul.addr %s5487, 32
      %s5489 = smul.addr %s5488, 8
      %s5490 = scalar_lea.vmem %s5, %s5489
      // Predicated region
      $region41: #{tpu_custom_call.1} parent=39 // pred_check
        %p5491 = pneg %p144
      $region42: #{tpu_custom_call.1} parent=39 // pred_check_branch
        %5493 = sbr.rel (%p5491) target = $region44
      $region43: #{tpu_custom_call.1} parent=39 // pred_region
        _
      $region44: #{tpu_custom_call.1} parent=39 // pred_fallthru
        _
    $region40: #{tpu_custom_call.1} parent=5 // pred_fallthru
      _
    %p5494 = scmp.le.s32.totalorder 2, %s11
    // Predicated region
    $region45: #{tpu_custom_call.1} parent=5 // pred_check
      %p5495 = pneg %p5494
    $region46: #{tpu_custom_call.1} parent=5 // pred_check_branch
      %5497 = sbr.rel (%p5495) target = $region48
    $region47: #{tpu_custom_call.1} parent=5 // pred_region
      %s5498 = ssub.s32 %s11, 2
      // Predicated region
      $region49: #{tpu_custom_call.1} parent=47 // pred_check
        %p5499 = pneg %p150
      $region50: #{tpu_custom_call.1} parent=47 // pred_check_branch
        %5501 = sbr.rel (%p5499) target = $region52
      $region51: #{tpu_custom_call.1} parent=47 // pred_region
        %p5502 = scmp.lt.s32.totalorder %s17, 1
        %s5503 = scalar_select %p5502, %s17, 1
        %s5504 = smul.addr %s5503, 32
        %s5505 = smul.addr %s5504, 8
        %s5506 = scalar_lea.vmem %s5, %s5505
      $region52: #{tpu_custom_call.1} parent=47 // pred_fallthru
        _
    $region48: #{tpu_custom_call.1} parent=5 // pred_fallthru
      _
  $region6: #{tpu_custom_call.1} parent=0 // loop_footer
    %s15 = sadd.s32 1, %s11
  $region7: #{tpu_custom_call.1} parent=0 // loop_footer_branch
    %10 = sbr.rel target = $region3
  $region8: #{tpu_custom_call.1} parent=0 // loop_exit
    _

</llo_original>
